<compile_context>
chip_gen: v5e
topology: v5e:2x2
jax: 0.10.0
libtpu: 0.0.40
codegen_flags: <defaults>
</compile_context>

<pallas_src>
import numpy as np
import jax
import jax.numpy as jnp
from jax import lax
from jax.experimental import pallas as pl
from jax.experimental.pallas import tpu as pltpu


LANE = 128      # lane width: gate slices are padded to multiples of this
SUBLANE = 8     # f32 sublane height: batch padded to a multiple of this


def _round_up(x, m):
    return (x + m - 1) // m * m


# ----------------------------------------------------------------------------
# Pallas kernel: one batch tile (Bt rows) -> logits (Bt, C)
# ----------------------------------------------------------------------------
def bilstm_head_kernel(emb_ref,       # (T, Bt, E)
                       wih_ref,       # (E, 8*Hp)  fused fwd|bwd input weights
                       bg_ref,        # (1, 8*Hp)  fused (bih+bhh) biases fwd|bwd
                       whh_f_ref,     # (Hp, 4*Hp)
                       whh_b_ref,     # (Hp, 4*Hp)
                       w1_ref,        # (4*Hp, F)  BN scale folded in
                       b1_ref,        # (1, F)     BN shift folded in
                       w2_ref,        # (F, C)
                       b2_ref,        # (1, C)
                       out_ref,       # (Bt, C)
                       pre_f_ref,     # scratch (T, Bt, 4*Hp)
                       pre_b_ref):    # scratch (T, Bt, 4*Hp)
    T, Bt, E = emb_ref.shape
    G = whh_f_ref.shape[1]            # 4 * Hp
    Hp = G // 4

    # ---- hoisted input projection: one MXU matmul for both directions, bias
    #      (and its broadcast) folded in once, outside the serial loop --------
    x2d = emb_ref[...].reshape(T * Bt, E)
    pre = jnp.dot(x2d, wih_ref[...], preferred_element_type=jnp.float32) + bg_ref[...]
    pre = pre.reshape(T, Bt, 2 * G)
    pre_f_ref[...] = pre[:, :, :G]
    pre_b_ref[...] = pre[:, :, G:]

    whh_f = whh_f_ref[...]
    whh_b = whh_b_ref[...]

    def gates_to_state(gates, c):
        # PyTorch gate order: i, f, g, o ; slices are 128-lane aligned (Hp)
        i = jax.nn.sigmoid(gates[:, 0 * Hp:1 * Hp])
        f = jax.nn.sigmoid(gates[:, 1 * Hp:2 * Hp])
        g = jnp.tanh(gates[:, 2 * Hp:3 * Hp])
        o = jax.nn.sigmoid(gates[:, 3 * Hp:4 * Hp])
        c_new = f * c + i * g
        h_new = o * jnp.tanh(c_new)
        return h_new, c_new

    def step(t, carry):
        h_f, c_f, h_b, c_b, s_f, m_f, s_b, m_b = carry
        # forward / backward chains are independent -> scheduler interleaves
        g_f = pre_f_ref[t] + jnp.dot(h_f, whh_f, preferred_element_type=jnp.float32)
        g_b = pre_b_ref[T - 1 - t] + jnp.dot(h_b, whh_b,
                                             preferred_element_type=jnp.float32)
        h_f, c_f = gates_to_state(g_f, c_f)
        h_b, c_b = gates_to_state(g_b, c_b)
        return (h_f, c_f, h_b, c_b,
                s_f + h_f, jnp.maximum(m_f, h_f),
                s_b + h_b, jnp.maximum(m_b, h_b))

    zeros = jnp.zeros((Bt, Hp), jnp.float32)
    ninf = jnp.full((Bt, Hp), -jnp.inf, jnp.float32)
    carry0 = (zeros, zeros, zeros, zeros, zeros, ninf, zeros, ninf)
    unroll = True if T <= 32 else 4
    _, _, _, _, s_f, m_f, s_b, m_b = lax.fori_loop(0, T, step, carry0, unroll=unroll)

    inv_T = 1.0 / T
    avg_f = s_f * inv_T
    avg_b = s_b * inv_T

    # head: conc = [avg_f, avg_b, max_f, max_b]; concat folded into 4 partial
    # matmuls against row-blocks of W1 (BatchNorm already folded into W1/b1).
    w1 = w1_ref[...]
    z = (jnp.dot(avg_f, w1[0 * Hp:1 * Hp], preferred_element_type=jnp.float32)
         + jnp.dot(avg_b, w1[1 * Hp:2 * Hp], preferred_element_type=jnp.float32)
         + jnp.dot(m_f, w1[2 * Hp:3 * Hp], preferred_element_type=jnp.float32)
         + jnp.dot(m_b, w1[3 * Hp:4 * Hp], preferred_element_type=jnp.float32)
         + b1_ref[...])
    z = jnp.maximum(z, 0.0)                       # ReLU
    # TODO(synk): nn.Dropout(p=0.8) is identity in eval mode; not applied here.
    out_ref[...] = (jnp.dot(z, w2_ref[...], preferred_element_type=jnp.float32)
                    + b2_ref[...])


# ----------------------------------------------------------------------------
# Parameter padding helpers (gate blocks H -> Hp, exact-zero padding)
# ----------------------------------------------------------------------------
def _pad_gate_cols(wt, H, Hp):
    # wt: (in_dim, 4H) -> (in_dim, 4Hp): each gate block zero-padded to Hp lanes
    g = wt.reshape(wt.shape[0], 4, H)
    g = jnp.pad(g, ((0, 0), (0, 0), (0, Hp - H)))
    return g.reshape(wt.shape[0], 4 * Hp)


def _pad_gate_bias(b, H, Hp):
    g = b.reshape(4, H)
    g = jnp.pad(g, ((0, 0), (0, Hp - H)))
    return g.reshape(4 * Hp)


# ----------------------------------------------------------------------------
# Wrapper: embedding gather (time-major), padding/folding, pallas_call
# ----------------------------------------------------------------------------
def bilstm_forward(x_ids, params, n_classes):
    emb_mat = params["embedding"].astype(jnp.float32)     # (V, E)
    E = emb_mat.shape[1]
    B, T = x_ids.shape
    assert T >= 1
    H = params["whh_f"].shape[1]                           # whh_f: (4H, H)
    Hp = _round_up(H, LANE)
    F = params["w1"].shape[0]                              # 32

    # batch padding / tiling (sublane >= 8, MXU-friendly tile, cap at 128 rows)
    Bt = min(_round_up(B, SUBLANE), 128)
    Bp = _round_up(B, Bt)

    # embedding gathered directly in time-major order (no full-tensor transpose)
    ids_tm = jnp.pad(x_ids.T, ((0, 0), (0, Bp - B)))       # (T, Bp)
    emb_tm = jnp.take(emb_mat, ids_tm, axis=0)             # (T, Bp, E)

    # LSTM weights: transpose, pad each gate block, fuse fwd|bwd input proj
    wih = jnp.concatenate(
        [_pad_gate_cols(params["wih_f"].T, H, Hp),
         _pad_gate_cols(params["wih_b"].T, H, Hp)], axis=1)            # (E, 8Hp)
    bg = jnp.concatenate(
        [_pad_gate_bias(params["bih_f"] + params["bhh_f"], H, Hp),
         _pad_gate_bias(params["bih_b"] + params["bhh_b"], H, Hp)])[None, :]
    whh_f = jnp.pad(_pad_gate_cols(params["whh_f"].T, H, Hp),
                    ((0, Hp - H), (0, 0)))                             # (Hp, 4Hp)
    whh_b = jnp.pad(_pad_gate_cols(params["whh_b"].T, H, Hp),
                    ((0, Hp - H), (0, 0)))

    # head: pad W1 rows per pooled block; fold eval-mode BatchNorm into W1/b1
    w1_blocks = params["w1"].T.reshape(4, H, F)
    w1_p = jnp.pad(w1_blocks, ((0, 0), (0, Hp - H), (0, 0))).reshape(4 * Hp, F)
    bn_scale = params["bn_gamma"] * lax.rsqrt(params["bn_var"] + 1e-5)
    bn_shift = params["bn_beta"] - params["bn_mean"] * bn_scale
    w1_p = w1_p * bn_scale[None, :]
    b1 = (params["b1"] * bn_scale + bn_shift)[None, :]                 # (1, F)

    w2 = params["w2"].T                                                # (F, C)
    b2 = params["b2"][None, :]                                         # (1, C)

    grid_b = Bp // Bt
    const2 = lambda i: (0, 0)

    out = pl.pallas_call(
        bilstm_head_kernel,
        out_shape=jax.ShapeDtypeStruct((Bp, n_classes), jnp.float32),
        grid=(grid_b,),
        in_specs=[
            pl.BlockSpec((T, Bt, E), lambda i: (0, i, 0)),   # emb: batch-tiled
            pl.BlockSpec((E, 8 * Hp), const2),               # weights: resident
            pl.BlockSpec((1, 8 * Hp), const2),
            pl.BlockSpec((Hp, 4 * Hp), const2),
            pl.BlockSpec((Hp, 4 * Hp), const2),
            pl.BlockSpec((4 * Hp, F), const2),
            pl.BlockSpec((1, F), const2),
            pl.BlockSpec((F, n_classes), const2),
            pl.BlockSpec((1, n_classes), const2),
        ],
        out_specs=pl.BlockSpec((Bt, n_classes), lambda i: (i, 0)),
        scratch_shapes=[pltpu.VMEM((T, Bt, 4 * Hp), jnp.float32),
                        pltpu.VMEM((T, Bt, 4 * Hp), jnp.float32)],
        compiler_params=pltpu.CompilerParams(
            dimension_semantics=("parallel",),
            vmem_limit_bytes=32 * 1024 * 1024),
    )(emb_tm, wih, bg, whh_f, whh_b, w1_p, b1, w2, b2)
    return out[:B]


# ----------------------------------------------------------------------------
# Pure-JAX reference (unpadded, explicit BN) for a correctness sanity check
# ----------------------------------------------------------------------------
def bilstm_reference(x_ids, params):
    emb = jnp.take(params["embedding"], x_ids, axis=0)     # (B, T, E)
    B, T, E = emb.shape
    H = params["whh_f"].shape[1]

    def run(wih, whh, bih, bhh, reverse):
        h = jnp.zeros((B, H), jnp.float32)
        c = jnp.zeros((B, H), jnp.float32)
        outs = []
        ts = range(T - 1, -1, -1) if reverse else range(T)
        for t in ts:
            g = emb[:, t, :] @ wih.T + h @ whh.T + bih + bhh
            i = jax.nn.sigmoid(g[:, 0 * H:1 * H])
            f = jax.nn.sigmoid(g[:, 1 * H:2 * H])
            gg = jnp.tanh(g[:, 2 * H:3 * H])
            o = jax.nn.sigmoid(g[:, 3 * H:4 * H])
            c = f * c + i * gg
            h = o * jnp.tanh(c)
            outs.append(h)
        if reverse:
            outs = outs[::-1]
        return jnp.stack(outs, axis=1)                     # (B, T, H)

    hf = run(params["wih_f"], params["whh_f"], params["bih_f"], params["bhh_f"], False)
    hb = run(params["wih_b"], params["whh_b"], params["bih_b"], params["bhh_b"], True)
    h_lstm = jnp.concatenate([hf, hb], axis=-1)            # (B, T, 2H)
    avg_pool = jnp.mean(h_lstm, axis=1)
    max_pool = jnp.max(h_lstm, axis=1)
    conc = jnp.concatenate([avg_pool, max_pool], axis=1)
    z = conc @ params["w1"].T + params["b1"]
    z = ((z - params["bn_mean"]) / jnp.sqrt(params["bn_var"] + 1e-5)
         * params["bn_gamma"] + params["bn_beta"])
    z = jnp.maximum(z, 0.0)
    return z @ params["w2"].T + params["b2"]


# ----------------------------------------------------------------------------
# Deterministic parameter init + demo run
# ----------------------------------------------------------------------------
def init_params(key, vocab_size, embed_size, hidden_size, n_classes):
    ks = jax.random.split(key, 16)
    H, E = hidden_size, embed_size

    def rnd(k, shape, scale=0.1):
        return (scale * jax.random.normal(k, shape)).astype(jnp.float32)

    return {
        "embedding": rnd(ks[0], (vocab_size, E), 1.0),
        "wih_f": rnd(ks[1], (4 * H, E)),
        "whh_f": rnd(ks[2], (4 * H, H)),
        "bih_f": rnd(ks[3], (4 * H,)),
        "bhh_f": rnd(ks[4], (4 * H,)),
        "wih_b": rnd(ks[5], (4 * H, E)),
        "whh_b": rnd(ks[6], (4 * H, H)),
        "bih_b": rnd(ks[7], (4 * H,)),
        "bhh_b": rnd(ks[8], (4 * H,)),
        "w1": rnd(ks[9], (32, 4 * H)),
        "b1": rnd(ks[10], (32,)),
        "bn_gamma": jnp.ones((32,), jnp.float32),
        "bn_beta": jnp.zeros((32,), jnp.float32),
        "bn_mean": jnp.zeros((32,), jnp.float32),
        "bn_var": jnp.ones((32,), jnp.float32),
        "w2": rnd(ks[11], (n_classes, 32)),
        "b2": rnd(ks[12], (n_classes,)),
    }


if __name__ == "__main__":
    vocab_size, embed_size, hidden_size, n_classes = 100, 32, 32, 4
    batch, seq_len = 2, 8

    key = jax.random.PRNGKey(0)
    k_param, k_ids = jax.random.split(key)
    params = init_params(k_param, vocab_size, embed_size, hidden_size, n_classes)
    x_ids = jax.random.randint(k_ids, (batch, seq_len), 0, vocab_size, dtype=jnp.int32)

    out = bilstm_forward(x_ids, params, n_classes)
    out = jax.block_until_ready(out)

    ref = jax.block_until_ready(bilstm_reference(x_ids, params))
    np.testing.assert_allclose(np.asarray(out), np.asarray(ref), rtol=2e-3, atol=2e-3)

    print("KERNEL_OK")
</pallas_src>

<mosaic_0001>
module attributes {stable_mosaic.version = 11 : i64} {
  func.func @bilstm_head_kernel(%arg0: i32, %arg1: memref<8x8x32xf32, #tpu.memory_space<vmem>>, %arg2: memref<32x1024xf32, #tpu.memory_space<vmem>>, %arg3: memref<1x1024xf32, #tpu.memory_space<vmem>>, %arg4: memref<128x512xf32, #tpu.memory_space<vmem>>, %arg5: memref<128x512xf32, #tpu.memory_space<vmem>>, %arg6: memref<512x32xf32, #tpu.memory_space<vmem>>, %arg7: memref<1x32xf32, #tpu.memory_space<vmem>>, %arg8: memref<32x4xf32, #tpu.memory_space<vmem>>, %arg9: memref<1x4xf32, #tpu.memory_space<vmem>>, %arg10: memref<8x4xf32, #tpu.memory_space<vmem>>, %arg11: memref<8x8x512xf32, #tpu.memory_space<vmem>>, %arg12: memref<8x8x512xf32, #tpu.memory_space<vmem>>) attributes {dimension_semantics = [#tpu.dimension_semantics<parallel>], iteration_bounds = array<i64: 1>, scalar_prefetch = 0 : i64, scratch_operands = 2 : i64, tpu.core_type = #tpu.core_type<tc>, window_params = [{transform_indices = @transform_0, window_bounds = array<i64: 8, 8, 32>}, {pipeline_mode = #tpu.pipeline_mode<synchronous>, transform_indices = @transform_1, window_bounds = array<i64: 32, 1024>}, {pipeline_mode = #tpu.pipeline_mode<synchronous>, transform_indices = @transform_2, window_bounds = array<i64: 1, 1024>}, {pipeline_mode = #tpu.pipeline_mode<synchronous>, transform_indices = @transform_3, window_bounds = array<i64: 128, 512>}, {pipeline_mode = #tpu.pipeline_mode<synchronous>, transform_indices = @transform_4, window_bounds = array<i64: 128, 512>}, {pipeline_mode = #tpu.pipeline_mode<synchronous>, transform_indices = @transform_5, window_bounds = array<i64: 512, 32>}, {pipeline_mode = #tpu.pipeline_mode<synchronous>, transform_indices = @transform_6, window_bounds = array<i64: 1, 32>}, {pipeline_mode = #tpu.pipeline_mode<synchronous>, transform_indices = @transform_7, window_bounds = array<i64: 32, 4>}, {pipeline_mode = #tpu.pipeline_mode<synchronous>, transform_indices = @transform_8, window_bounds = array<i64: 1, 4>}, {transform_indices = @transform_9, window_bounds = array<i64: 8, 4>}]} {
    %c0 = arith.constant 0 : index
    %c0_0 = arith.constant 0 : index
    %c0_1 = arith.constant 0 : index
    %0 = vector.load %arg1[%c0, %c0_0, %c0_1] : memref<8x8x32xf32, #tpu.memory_space<vmem>>, vector<8x8x32xf32>
    %1 = vector.shape_cast %0 : vector<8x8x32xf32> to vector<64x32xf32>
    %c0_2 = arith.constant 0 : index
    %c0_3 = arith.constant 0 : index
    %2 = vector.load %arg2[%c0_2, %c0_3] : memref<32x1024xf32, #tpu.memory_space<vmem>>, vector<32x1024xf32>
    %cst = arith.constant dense<0.000000e+00> : vector<64x1024xf32>
    %3 = tpu.matmul %1, %2, %cst {dimension_numbers = #tpu.dot_dimension_numbers<[1], [0], [0], [1], [0, 0, 1, 1], [], []>} : vector<64x32xf32>, vector<32x1024xf32>, vector<64x1024xf32> -> vector<64x1024xf32>
    %c0_4 = arith.constant 0 : index
    %c0_5 = arith.constant 0 : index
    %4 = vector.load %arg3[%c0_4, %c0_5] : memref<1x1024xf32, #tpu.memory_space<vmem>>, vector<1x1024xf32>
    %5 = vector.broadcast %4 : vector<1x1024xf32> to vector<64x1024xf32>
    %6 = arith.addf %3, %5 : vector<64x1024xf32>
    %7 = vector.shape_cast %6 : vector<64x1024xf32> to vector<8x8x1024xf32>
    %8 = vector.extract_strided_slice %7 {offsets = [0, 0, 0], sizes = [8, 8, 512], strides = [1, 1, 1]} : vector<8x8x1024xf32> to vector<8x8x512xf32>
    %c0_6 = arith.constant 0 : index
    %c0_7 = arith.constant 0 : index
    %c0_8 = arith.constant 0 : index
    %9 = vector.load %arg11[%c0_6, %c0_7, %c0_8] : memref<8x8x512xf32, #tpu.memory_space<vmem>>, vector<8x8x512xf32>
    tpu.vector_store %arg11[%c0_6, %c0_7, %c0_8], %8 {strides = array<i32>} : memref<8x8x512xf32, #tpu.memory_space<vmem>>, vector<8x8x512xf32>,
    %10 = vector.extract_strided_slice %7 {offsets = [0, 0, 512], sizes = [8, 8, 512], strides = [1, 1, 1]} : vector<8x8x1024xf32> to vector<8x8x512xf32>
    %c0_9 = arith.constant 0 : index
    %c0_10 = arith.constant 0 : index
    %c0_11 = arith.constant 0 : index
    %11 = vector.load %arg12[%c0_9, %c0_10, %c0_11] : memref<8x8x512xf32, #tpu.memory_space<vmem>>, vector<8x8x512xf32>
    tpu.vector_store %arg12[%c0_9, %c0_10, %c0_11], %10 {strides = array<i32>} : memref<8x8x512xf32, #tpu.memory_space<vmem>>, vector<8x8x512xf32>,
    %c0_12 = arith.constant 0 : index
    %c0_13 = arith.constant 0 : index
    %12 = vector.load %arg4[%c0_12, %c0_13] : memref<128x512xf32, #tpu.memory_space<vmem>>, vector<128x512xf32>
    %c0_14 = arith.constant 0 : index
    %c0_15 = arith.constant 0 : index
    %13 = vector.load %arg5[%c0_14, %c0_15] : memref<128x512xf32, #tpu.memory_space<vmem>>, vector<128x512xf32>
    %cst_16 = arith.constant 0.000000e+00 : f32
    %14 = vector.broadcast %cst_16 : f32 to vector<8x128xf32>
    %cst_17 = arith.constant 0xFF800000 : f32
    %15 = vector.broadcast %cst_17 : f32 to vector<8x128xf32>
    %c0_i32 = arith.constant 0 : i32
    %16 = arith.index_cast %c0_i32 : i32 to index
    %c0_18 = arith.constant 0 : index
    %c0_19 = arith.constant 0 : index
    %17 = vector.load %arg11[%16, %c0_18, %c0_19] : memref<8x8x512xf32, #tpu.memory_space<vmem>>, vector<1x8x512xf32>
    %18 = vector.shape_cast %17 : vector<1x8x512xf32> to vector<8x512xf32>
    %cst_20 = arith.constant dense<0.000000e+00> : vector<8x512xf32>
    %19 = tpu.matmul %14, %12, %cst_20 {dimension_numbers = #tpu.dot_dimension_numbers<[1], [0], [0], [1], [0, 0, 1, 1], [], []>} : vector<8x128xf32>, vector<128x512xf32>, vector<8x512xf32> -> vector<8x512xf32>
    %20 = arith.addf %18, %19 : vector<8x512xf32>
    %c7_i32 = arith.constant 7 : i32
    %21 = arith.subi %c7_i32, %c0_i32 : i32
    %22 = arith.index_cast %21 : i32 to index
    %c0_21 = arith.constant 0 : index
    %c0_22 = arith.constant 0 : index
    %23 = vector.load %arg12[%22, %c0_21, %c0_22] : memref<8x8x512xf32, #tpu.memory_space<vmem>>, vector<1x8x512xf32>
    %24 = vector.shape_cast %23 : vector<1x8x512xf32> to vector<8x512xf32>
    %cst_23 = arith.constant dense<0.000000e+00> : vector<8x512xf32>
    %25 = tpu.matmul %14, %13, %cst_23 {dimension_numbers = #tpu.dot_dimension_numbers<[1], [0], [0], [1], [0, 0, 1, 1], [], []>} : vector<8x128xf32>, vector<128x512xf32>, vector<8x512xf32> -> vector<8x512xf32>
    %26 = arith.addf %24, %25 : vector<8x512xf32>
    %27 = vector.extract_strided_slice %20 {offsets = [0, 0], sizes = [8, 128], strides = [1, 1]} : vector<8x512xf32> to vector<8x128xf32>
    %28 = arith.negf %27 : vector<8x128xf32>
    %29 = math.exp %28 : vector<8x128xf32>
    %cst_24 = arith.constant 1.000000e+00 : f32
    %30 = vector.broadcast %cst_24 : f32 to vector<8x128xf32>
    %31 = arith.addf %30, %29 : vector<8x128xf32>
    %32 = arith.divf %30, %31 : vector<8x128xf32>
    %33 = vector.extract_strided_slice %20 {offsets = [0, 128], sizes = [8, 128], strides = [1, 1]} : vector<8x512xf32> to vector<8x128xf32>
    %34 = arith.negf %33 : vector<8x128xf32>
    %35 = math.exp %34 : vector<8x128xf32>
    %cst_25 = arith.constant 1.000000e+00 : f32
    %36 = vector.broadcast %cst_25 : f32 to vector<8x128xf32>
    %37 = arith.addf %36, %35 : vector<8x128xf32>
    %38 = arith.divf %36, %37 : vector<8x128xf32>
    %39 = vector.extract_strided_slice %20 {offsets = [0, 256], sizes = [8, 128], strides = [1, 1]} : vector<8x512xf32> to vector<8x128xf32>
    %40 = math.tanh %39 : vector<8x128xf32>
    %41 = vector.extract_strided_slice %20 {offsets = [0, 384], sizes = [8, 128], strides = [1, 1]} : vector<8x512xf32> to vector<8x128xf32>
    %42 = arith.negf %41 : vector<8x128xf32>
    %43 = math.exp %42 : vector<8x128xf32>
    %cst_26 = arith.constant 1.000000e+00 : f32
    %44 = vector.broadcast %cst_26 : f32 to vector<8x128xf32>
    %45 = arith.addf %44, %43 : vector<8x128xf32>
    %46 = arith.divf %44, %45 : vector<8x128xf32>
    %47 = arith.mulf %38, %14 : vector<8x128xf32>
    %48 = arith.mulf %32, %40 : vector<8x128xf32>
    %49 = arith.addf %47, %48 : vector<8x128xf32>
    %50 = math.tanh %49 : vector<8x128xf32>
    %51 = arith.mulf %46, %50 : vector<8x128xf32>
    %52 = vector.extract_strided_slice %26 {offsets = [0, 0], sizes = [8, 128], strides = [1, 1]} : vector<8x512xf32> to vector<8x128xf32>
    %53 = arith.negf %52 : vector<8x128xf32>
    %54 = math.exp %53 : vector<8x128xf32>
    %cst_27 = arith.constant 1.000000e+00 : f32
    %55 = vector.broadcast %cst_27 : f32 to vector<8x128xf32>
    %56 = arith.addf %55, %54 : vector<8x128xf32>
    %57 = arith.divf %55, %56 : vector<8x128xf32>
    %58 = vector.extract_strided_slice %26 {offsets = [0, 128], sizes = [8, 128], strides = [1, 1]} : vector<8x512xf32> to vector<8x128xf32>
    %59 = arith.negf %58 : vector<8x128xf32>
    %60 = math.exp %59 : vector<8x128xf32>
    %cst_28 = arith.constant 1.000000e+00 : f32
    %61 = vector.broadcast %cst_28 : f32 to vector<8x128xf32>
    %62 = arith.addf %61, %60 : vector<8x128xf32>
    %63 = arith.divf %61, %62 : vector<8x128xf32>
    %64 = vector.extract_strided_slice %26 {offsets = [0, 256], sizes = [8, 128], strides = [1, 1]} : vector<8x512xf32> to vector<8x128xf32>
    %65 = math.tanh %64 : vector<8x128xf32>
    %66 = vector.extract_strided_slice %26 {offsets = [0, 384], sizes = [8, 128], strides = [1, 1]} : vector<8x512xf32> to vector<8x128xf32>
    %67 = arith.negf %66 : vector<8x128xf32>
    %68 = math.exp %67 : vector<8x128xf32>
    %cst_29 = arith.constant 1.000000e+00 : f32
    %69 = vector.broadcast %cst_29 : f32 to vector<8x128xf32>
    %70 = arith.addf %69, %68 : vector<8x128xf32>
    %71 = arith.divf %69, %70 : vector<8x128xf32>
    %72 = arith.mulf %63, %14 : vector<8x128xf32>
    %73 = arith.mulf %57, %65 : vector<8x128xf32>
    %74 = arith.addf %72, %73 : vector<8x128xf32>
    %75 = math.tanh %74 : vector<8x128xf32>
    %76 = arith.mulf %71, %75 : vector<8x128xf32>
    %77 = arith.addf %14, %51 : vector<8x128xf32>
    %78 = arith.maximumf %15, %51 : vector<8x128xf32>
    %79 = arith.addf %14, %76 : vector<8x128xf32>
    %80 = arith.maximumf %15, %76 : vector<8x128xf32>
    %c1_i32 = arith.constant 1 : i32
    %81 = arith.index_cast %c1_i32 : i32 to index
    %c0_30 = arith.constant 0 : index
    %c0_31 = arith.constant 0 : index
    %82 = vector.load %arg11[%81, %c0_30, %c0_31] : memref<8x8x512xf32, #tpu.memory_space<vmem>>, vector<1x8x512xf32>
    %83 = vector.shape_cast %82 : vector<1x8x512xf32> to vector<8x512xf32>
    %cst_32 = arith.constant dense<0.000000e+00> : vector<8x512xf32>
    %84 = tpu.matmul %51, %12, %cst_32 {dimension_numbers = #tpu.dot_dimension_numbers<[1], [0], [0], [1], [0, 0, 1, 1], [], []>} : vector<8x128xf32>, vector<128x512xf32>, vector<8x512xf32> -> vector<8x512xf32>
    %85 = arith.addf %83, %84 : vector<8x512xf32>
    %c7_i32_33 = arith.constant 7 : i32
    %86 = arith.subi %c7_i32_33, %c1_i32 : i32
    %87 = arith.index_cast %86 : i32 to index
    %c0_34 = arith.constant 0 : index
    %c0_35 = arith.constant 0 : index
    %88 = vector.load %arg12[%87, %c0_34, %c0_35] : memref<8x8x512xf32, #tpu.memory_space<vmem>>, vector<1x8x512xf32>
    %89 = vector.shape_cast %88 : vector<1x8x512xf32> to vector<8x512xf32>
    %cst_36 = arith.constant dense<0.000000e+00> : vector<8x512xf32>
    %90 = tpu.matmul %76, %13, %cst_36 {dimension_numbers = #tpu.dot_dimension_numbers<[1], [0], [0], [1], [0, 0, 1, 1], [], []>} : vector<8x128xf32>, vector<128x512xf32>, vector<8x512xf32> -> vector<8x512xf32>
    %91 = arith.addf %89, %90 : vector<8x512xf32>
    %92 = vector.extract_strided_slice %85 {offsets = [0, 0], sizes = [8, 128], strides = [1, 1]} : vector<8x512xf32> to vector<8x128xf32>
    %93 = arith.negf %92 : vector<8x128xf32>
    %94 = math.exp %93 : vector<8x128xf32>
    %cst_37 = arith.constant 1.000000e+00 : f32
    %95 = vector.broadcast %cst_37 : f32 to vector<8x128xf32>
    %96 = arith.addf %95, %94 : vector<8x128xf32>
    %97 = arith.divf %95, %96 : vector<8x128xf32>
    %98 = vector.extract_strided_slice %85 {offsets = [0, 128], sizes = [8, 128], strides = [1, 1]} : vector<8x512xf32> to vector<8x128xf32>
    %99 = arith.negf %98 : vector<8x128xf32>
    %100 = math.exp %99 : vector<8x128xf32>
    %cst_38 = arith.constant 1.000000e+00 : f32
    %101 = vector.broadcast %cst_38 : f32 to vector<8x128xf32>
    %102 = arith.addf %101, %100 : vector<8x128xf32>
    %103 = arith.divf %101, %102 : vector<8x128xf32>
    %104 = vector.extract_strided_slice %85 {offsets = [0, 256], sizes = [8, 128], strides = [1, 1]} : vector<8x512xf32> to vector<8x128xf32>
    %105 = math.tanh %104 : vector<8x128xf32>
    %106 = vector.extract_strided_slice %85 {offsets = [0, 384], sizes = [8, 128], strides = [1, 1]} : vector<8x512xf32> to vector<8x128xf32>
    %107 = arith.negf %106 : vector<8x128xf32>
    %108 = math.exp %107 : vector<8x128xf32>
    %cst_39 = arith.constant 1.000000e+00 : f32
    %109 = vector.broadcast %cst_39 : f32 to vector<8x128xf32>
    %110 = arith.addf %109, %108 : vector<8x128xf32>
    %111 = arith.divf %109, %110 : vector<8x128xf32>
    %112 = arith.mulf %103, %49 : vector<8x128xf32>
    %113 = arith.mulf %97, %105 : vector<8x128xf32>
    %114 = arith.addf %112, %113 : vector<8x128xf32>
    %115 = math.tanh %114 : vector<8x128xf32>
    %116 = arith.mulf %111, %115 : vector<8x128xf32>
    %117 = vector.extract_strided_slice %91 {offsets = [0, 0], sizes = [8, 128], strides = [1, 1]} : vector<8x512xf32> to vector<8x128xf32>
    %118 = arith.negf %117 : vector<8x128xf32>
    %119 = math.exp %118 : vector<8x128xf32>
    %cst_40 = arith.constant 1.000000e+00 : f32
    %120 = vector.broadcast %cst_40 : f32 to vector<8x128xf32>
    %121 = arith.addf %120, %119 : vector<8x128xf32>
    %122 = arith.divf %120, %121 : vector<8x128xf32>
    %123 = vector.extract_strided_slice %91 {offsets = [0, 128], sizes = [8, 128], strides = [1, 1]} : vector<8x512xf32> to vector<8x128xf32>
    %124 = arith.negf %123 : vector<8x128xf32>
    %125 = math.exp %124 : vector<8x128xf32>
    %cst_41 = arith.constant 1.000000e+00 : f32
    %126 = vector.broadcast %cst_41 : f32 to vector<8x128xf32>
    %127 = arith.addf %126, %125 : vector<8x128xf32>
    %128 = arith.divf %126, %127 : vector<8x128xf32>
    %129 = vector.extract_strided_slice %91 {offsets = [0, 256], sizes = [8, 128], strides = [1, 1]} : vector<8x512xf32> to vector<8x128xf32>
    %130 = math.tanh %129 : vector<8x128xf32>
    %131 = vector.extract_strided_slice %91 {offsets = [0, 384], sizes = [8, 128], strides = [1, 1]} : vector<8x512xf32> to vector<8x128xf32>
    %132 = arith.negf %131 : vector<8x128xf32>
    %133 = math.exp %132 : vector<8x128xf32>
    %cst_42 = arith.constant 1.000000e+00 : f32
    %134 = vector.broadcast %cst_42 : f32 to vector<8x128xf32>
    %135 = arith.addf %134, %133 : vector<8x128xf32>
    %136 = arith.divf %134, %135 : vector<8x128xf32>
    %137 = arith.mulf %128, %74 : vector<8x128xf32>
    %138 = arith.mulf %122, %130 : vector<8x128xf32>
    %139 = arith.addf %137, %138 : vector<8x128xf32>
    %140 = math.tanh %139 : vector<8x128xf32>
    %141 = arith.mulf %136, %140 : vector<8x128xf32>
    %142 = arith.addf %77, %116 : vector<8x128xf32>
    %143 = arith.maximumf %78, %116 : vector<8x128xf32>
    %144 = arith.addf %79, %141 : vector<8x128xf32>
    %145 = arith.maximumf %80, %141 : vector<8x128xf32>
    %c2_i32 = arith.constant 2 : i32
    %146 = arith.index_cast %c2_i32 : i32 to index
    %c0_43 = arith.constant 0 : index
    %c0_44 = arith.constant 0 : index
    %147 = vector.load %arg11[%146, %c0_43, %c0_44] : memref<8x8x512xf32, #tpu.memory_space<vmem>>, vector<1x8x512xf32>
    %148 = vector.shape_cast %147 : vector<1x8x512xf32> to vector<8x512xf32>
    %cst_45 = arith.constant dense<0.000000e+00> : vector<8x512xf32>
    %149 = tpu.matmul %116, %12, %cst_45 {dimension_numbers = #tpu.dot_dimension_numbers<[1], [0], [0], [1], [0, 0, 1, 1], [], []>} : vector<8x128xf32>, vector<128x512xf32>, vector<8x512xf32> -> vector<8x512xf32>
    %150 = arith.addf %148, %149 : vector<8x512xf32>
    %c7_i32_46 = arith.constant 7 : i32
    %151 = arith.subi %c7_i32_46, %c2_i32 : i32
    %152 = arith.index_cast %151 : i32 to index
    %c0_47 = arith.constant 0 : index
    %c0_48 = arith.constant 0 : index
    %153 = vector.load %arg12[%152, %c0_47, %c0_48] : memref<8x8x512xf32, #tpu.memory_space<vmem>>, vector<1x8x512xf32>
    %154 = vector.shape_cast %153 : vector<1x8x512xf32> to vector<8x512xf32>
    %cst_49 = arith.constant dense<0.000000e+00> : vector<8x512xf32>
    %155 = tpu.matmul %141, %13, %cst_49 {dimension_numbers = #tpu.dot_dimension_numbers<[1], [0], [0], [1], [0, 0, 1, 1], [], []>} : vector<8x128xf32>, vector<128x512xf32>, vector<8x512xf32> -> vector<8x512xf32>
    %156 = arith.addf %154, %155 : vector<8x512xf32>
    %157 = vector.extract_strided_slice %150 {offsets = [0, 0], sizes = [8, 128], strides = [1, 1]} : vector<8x512xf32> to vector<8x128xf32>
    %158 = arith.negf %157 : vector<8x128xf32>
    %159 = math.exp %158 : vector<8x128xf32>
    %cst_50 = arith.constant 1.000000e+00 : f32
    %160 = vector.broadcast %cst_50 : f32 to vector<8x128xf32>
    %161 = arith.addf %160, %159 : vector<8x128xf32>
    %162 = arith.divf %160, %161 : vector<8x128xf32>
    %163 = vector.extract_strided_slice %150 {offsets = [0, 128], sizes = [8, 128], strides = [1, 1]} : vector<8x512xf32> to vector<8x128xf32>
    %164 = arith.negf %163 : vector<8x128xf32>
    %165 = math.exp %164 : vector<8x128xf32>
    %cst_51 = arith.constant 1.000000e+00 : f32
    %166 = vector.broadcast %cst_51 : f32 to vector<8x128xf32>
    %167 = arith.addf %166, %165 : vector<8x128xf32>
    %168 = arith.divf %166, %167 : vector<8x128xf32>
    %169 = vector.extract_strided_slice %150 {offsets = [0, 256], sizes = [8, 128], strides = [1, 1]} : vector<8x512xf32> to vector<8x128xf32>
    %170 = math.tanh %169 : vector<8x128xf32>
    %171 = vector.extract_strided_slice %150 {offsets = [0, 384], sizes = [8, 128], strides = [1, 1]} : vector<8x512xf32> to vector<8x128xf32>
    %172 = arith.negf %171 : vector<8x128xf32>
    %173 = math.exp %172 : vector<8x128xf32>
    %cst_52 = arith.constant 1.000000e+00 : f32
    %174 = vector.broadcast %cst_52 : f32 to vector<8x128xf32>
    %175 = arith.addf %174, %173 : vector<8x128xf32>
    %176 = arith.divf %174, %175 : vector<8x128xf32>
    %177 = arith.mulf %168, %114 : vector<8x128xf32>
    %178 = arith.mulf %162, %170 : vector<8x128xf32>
    %179 = arith.addf %177, %178 : vector<8x128xf32>
    %180 = math.tanh %179 : vector<8x128xf32>
    %181 = arith.mulf %176, %180 : vector<8x128xf32>
    %182 = vector.extract_strided_slice %156 {offsets = [0, 0], sizes = [8, 128], strides = [1, 1]} : vector<8x512xf32> to vector<8x128xf32>
    %183 = arith.negf %182 : vector<8x128xf32>
    %184 = math.exp %183 : vector<8x128xf32>
    %cst_53 = arith.constant 1.000000e+00 : f32
    %185 = vector.broadcast %cst_53 : f32 to vector<8x128xf32>
    %186 = arith.addf %185, %184 : vector<8x128xf32>
    %187 = arith.divf %185, %186 : vector<8x128xf32>
    %188 = vector.extract_strided_slice %156 {offsets = [0, 128], sizes = [8, 128], strides = [1, 1]} : vector<8x512xf32> to vector<8x128xf32>
    %189 = arith.negf %188 : vector<8x128xf32>
    %190 = math.exp %189 : vector<8x128xf32>
    %cst_54 = arith.constant 1.000000e+00 : f32
    %191 = vector.broadcast %cst_54 : f32 to vector<8x128xf32>
    %192 = arith.addf %191, %190 : vector<8x128xf32>
    %193 = arith.divf %191, %192 : vector<8x128xf32>
    %194 = vector.extract_strided_slice %156 {offsets = [0, 256], sizes = [8, 128], strides = [1, 1]} : vector<8x512xf32> to vector<8x128xf32>
    %195 = math.tanh %194 : vector<8x128xf32>
    %196 = vector.extract_strided_slice %156 {offsets = [0, 384], sizes = [8, 128], strides = [1, 1]} : vector<8x512xf32> to vector<8x128xf32>
    %197 = arith.negf %196 : vector<8x128xf32>
    %198 = math.exp %197 : vector<8x128xf32>
    %cst_55 = arith.constant 1.000000e+00 : f32
    %199 = vector.broadcast %cst_55 : f32 to vector<8x128xf32>
    %200 = arith.addf %199, %198 : vector<8x128xf32>
    %201 = arith.divf %199, %200 : vector<8x128xf32>
    %202 = arith.mulf %193, %139 : vector<8x128xf32>
    %203 = arith.mulf %187, %195 : vector<8x128xf32>
    %204 = arith.addf %202, %203 : vector<8x128xf32>
    %205 = math.tanh %204 : vector<8x128xf32>
    %206 = arith.mulf %201, %205 : vector<8x128xf32>
    %207 = arith.addf %142, %181 : vector<8x128xf32>
    %208 = arith.maximumf %143, %181 : vector<8x128xf32>
    %209 = arith.addf %144, %206 : vector<8x128xf32>
    %210 = arith.maximumf %145, %206 : vector<8x128xf32>
    %c3_i32 = arith.constant 3 : i32
    %211 = arith.index_cast %c3_i32 : i32 to index
    %c0_56 = arith.constant 0 : index
    %c0_57 = arith.constant 0 : index
    %212 = vector.load %arg11[%211, %c0_56, %c0_57] : memref<8x8x512xf32, #tpu.memory_space<vmem>>, vector<1x8x512xf32>
    %213 = vector.shape_cast %212 : vector<1x8x512xf32> to vector<8x512xf32>
    %cst_58 = arith.constant dense<0.000000e+00> : vector<8x512xf32>
    %214 = tpu.matmul %181, %12, %cst_58 {dimension_numbers = #tpu.dot_dimension_numbers<[1], [0], [0], [1], [0, 0, 1, 1], [], []>} : vector<8x128xf32>, vector<128x512xf32>, vector<8x512xf32> -> vector<8x512xf32>
    %215 = arith.addf %213, %214 : vector<8x512xf32>
    %c7_i32_59 = arith.constant 7 : i32
    %216 = arith.subi %c7_i32_59, %c3_i32 : i32
    %217 = arith.index_cast %216 : i32 to index
    %c0_60 = arith.constant 0 : index
    %c0_61 = arith.constant 0 : index
    %218 = vector.load %arg12[%217, %c0_60, %c0_61] : memref<8x8x512xf32, #tpu.memory_space<vmem>>, vector<1x8x512xf32>
    %219 = vector.shape_cast %218 : vector<1x8x512xf32> to vector<8x512xf32>
    %cst_62 = arith.constant dense<0.000000e+00> : vector<8x512xf32>
    %220 = tpu.matmul %206, %13, %cst_62 {dimension_numbers = #tpu.dot_dimension_numbers<[1], [0], [0], [1], [0, 0, 1, 1], [], []>} : vector<8x128xf32>, vector<128x512xf32>, vector<8x512xf32> -> vector<8x512xf32>
    %221 = arith.addf %219, %220 : vector<8x512xf32>
    %222 = vector.extract_strided_slice %215 {offsets = [0, 0], sizes = [8, 128], strides = [1, 1]} : vector<8x512xf32> to vector<8x128xf32>
    %223 = arith.negf %222 : vector<8x128xf32>
    %224 = math.exp %223 : vector<8x128xf32>
    %cst_63 = arith.constant 1.000000e+00 : f32
    %225 = vector.broadcast %cst_63 : f32 to vector<8x128xf32>
    %226 = arith.addf %225, %224 : vector<8x128xf32>
    %227 = arith.divf %225, %226 : vector<8x128xf32>
    %228 = vector.extract_strided_slice %215 {offsets = [0, 128], sizes = [8, 128], strides = [1, 1]} : vector<8x512xf32> to vector<8x128xf32>
    %229 = arith.negf %228 : vector<8x128xf32>
    %230 = math.exp %229 : vector<8x128xf32>
    %cst_64 = arith.constant 1.000000e+00 : f32
    %231 = vector.broadcast %cst_64 : f32 to vector<8x128xf32>
    %232 = arith.addf %231, %230 : vector<8x128xf32>
    %233 = arith.divf %231, %232 : vector<8x128xf32>
    %234 = vector.extract_strided_slice %215 {offsets = [0, 256], sizes = [8, 128], strides = [1, 1]} : vector<8x512xf32> to vector<8x128xf32>
    %235 = math.tanh %234 : vector<8x128xf32>
    %236 = vector.extract_strided_slice %215 {offsets = [0, 384], sizes = [8, 128], strides = [1, 1]} : vector<8x512xf32> to vector<8x128xf32>
    %237 = arith.negf %236 : vector<8x128xf32>
    %238 = math.exp %237 : vector<8x128xf32>
    %cst_65 = arith.constant 1.000000e+00 : f32
    %239 = vector.broadcast %cst_65 : f32 to vector<8x128xf32>
    %240 = arith.addf %239, %238 : vector<8x128xf32>
    %241 = arith.divf %239, %240 : vector<8x128xf32>
    %242 = arith.mulf %233, %179 : vector<8x128xf32>
    %243 = arith.mulf %227, %235 : vector<8x128xf32>
    %244 = arith.addf %242, %243 : vector<8x128xf32>
    %245 = math.tanh %244 : vector<8x128xf32>
    %246 = arith.mulf %241, %245 : vector<8x128xf32>
    %247 = vector.extract_strided_slice %221 {offsets = [0, 0], sizes = [8, 128], strides = [1, 1]} : vector<8x512xf32> to vector<8x128xf32>
    %248 = arith.negf %247 : vector<8x128xf32>
    %249 = math.exp %248 : vector<8x128xf32>
    %cst_66 = arith.constant 1.000000e+00 : f32
    %250 = vector.broadcast %cst_66 : f32 to vector<8x128xf32>
    %251 = arith.addf %250, %249 : vector<8x128xf32>
    %252 = arith.divf %250, %251 : vector<8x128xf32>
    %253 = vector.extract_strided_slice %221 {offsets = [0, 128], sizes = [8, 128], strides = [1, 1]} : vector<8x512xf32> to vector<8x128xf32>
    %254 = arith.negf %253 : vector<8x128xf32>
    %255 = math.exp %254 : vector<8x128xf32>
    %cst_67 = arith.constant 1.000000e+00 : f32
    %256 = vector.broadcast %cst_67 : f32 to vector<8x128xf32>
    %257 = arith.addf %256, %255 : vector<8x128xf32>
    %258 = arith.divf %256, %257 : vector<8x128xf32>
    %259 = vector.extract_strided_slice %221 {offsets = [0, 256], sizes = [8, 128], strides = [1, 1]} : vector<8x512xf32> to vector<8x128xf32>
    %260 = math.tanh %259 : vector<8x128xf32>
    %261 = vector.extract_strided_slice %221 {offsets = [0, 384], sizes = [8, 128], strides = [1, 1]} : vector<8x512xf32> to vector<8x128xf32>
    %262 = arith.negf %261 : vector<8x128xf32>
    %263 = math.exp %262 : vector<8x128xf32>
    %cst_68 = arith.constant 1.000000e+00 : f32
    %264 = vector.broadcast %cst_68 : f32 to vector<8x128xf32>
    %265 = arith.addf %264, %263 : vector<8x128xf32>
    %266 = arith.divf %264, %265 : vector<8x128xf32>
    %267 = arith.mulf %258, %204 : vector<8x128xf32>
    %268 = arith.mulf %252, %260 : vector<8x128xf32>
    %269 = arith.addf %267, %268 : vector<8x128xf32>
    %270 = math.tanh %269 : vector<8x128xf32>
    %271 = arith.mulf %266, %270 : vector<8x128xf32>
    %272 = arith.addf %207, %246 : vector<8x128xf32>
    %273 = arith.maximumf %208, %246 : vector<8x128xf32>
    %274 = arith.addf %209, %271 : vector<8x128xf32>
    %275 = arith.maximumf %210, %271 : vector<8x128xf32>
    %c4_i32 = arith.constant 4 : i32
    %276 = arith.index_cast %c4_i32 : i32 to index
    %c0_69 = arith.constant 0 : index
    %c0_70 = arith.constant 0 : index
    %277 = vector.load %arg11[%276, %c0_69, %c0_70] : memref<8x8x512xf32, #tpu.memory_space<vmem>>, vector<1x8x512xf32>
    %278 = vector.shape_cast %277 : vector<1x8x512xf32> to vector<8x512xf32>
    %cst_71 = arith.constant dense<0.000000e+00> : vector<8x512xf32>
    %279 = tpu.matmul %246, %12, %cst_71 {dimension_numbers = #tpu.dot_dimension_numbers<[1], [0], [0], [1], [0, 0, 1, 1], [], []>} : vector<8x128xf32>, vector<128x512xf32>, vector<8x512xf32> -> vector<8x512xf32>
    %280 = arith.addf %278, %279 : vector<8x512xf32>
    %c7_i32_72 = arith.constant 7 : i32
    %281 = arith.subi %c7_i32_72, %c4_i32 : i32
    %282 = arith.index_cast %281 : i32 to index
    %c0_73 = arith.constant 0 : index
    %c0_74 = arith.constant 0 : index
    %283 = vector.load %arg12[%282, %c0_73, %c0_74] : memref<8x8x512xf32, #tpu.memory_space<vmem>>, vector<1x8x512xf32>
    %284 = vector.shape_cast %283 : vector<1x8x512xf32> to vector<8x512xf32>
    %cst_75 = arith.constant dense<0.000000e+00> : vector<8x512xf32>
    %285 = tpu.matmul %271, %13, %cst_75 {dimension_numbers = #tpu.dot_dimension_numbers<[1], [0], [0], [1], [0, 0, 1, 1], [], []>} : vector<8x128xf32>, vector<128x512xf32>, vector<8x512xf32> -> vector<8x512xf32>
    %286 = arith.addf %284, %285 : vector<8x512xf32>
    %287 = vector.extract_strided_slice %280 {offsets = [0, 0], sizes = [8, 128], strides = [1, 1]} : vector<8x512xf32> to vector<8x128xf32>
    %288 = arith.negf %287 : vector<8x128xf32>
    %289 = math.exp %288 : vector<8x128xf32>
    %cst_76 = arith.constant 1.000000e+00 : f32
    %290 = vector.broadcast %cst_76 : f32 to vector<8x128xf32>
    %291 = arith.addf %290, %289 : vector<8x128xf32>
    %292 = arith.divf %290, %291 : vector<8x128xf32>
    %293 = vector.extract_strided_slice %280 {offsets = [0, 128], sizes = [8, 128], strides = [1, 1]} : vector<8x512xf32> to vector<8x128xf32>
    %294 = arith.negf %293 : vector<8x128xf32>
    %295 = math.exp %294 : vector<8x128xf32>
    %cst_77 = arith.constant 1.000000e+00 : f32
    %296 = vector.broadcast %cst_77 : f32 to vector<8x128xf32>
    %297 = arith.addf %296, %295 : vector<8x128xf32>
    %298 = arith.divf %296, %297 : vector<8x128xf32>
    %299 = vector.extract_strided_slice %280 {offsets = [0, 256], sizes = [8, 128], strides = [1, 1]} : vector<8x512xf32> to vector<8x128xf32>
    %300 = math.tanh %299 : vector<8x128xf32>
    %301 = vector.extract_strided_slice %280 {offsets = [0, 384], sizes = [8, 128], strides = [1, 1]} : vector<8x512xf32> to vector<8x128xf32>
    %302 = arith.negf %301 : vector<8x128xf32>
    %303 = math.exp %302 : vector<8x128xf32>
    %cst_78 = arith.constant 1.000000e+00 : f32
    %304 = vector.broadcast %cst_78 : f32 to vector<8x128xf32>
    %305 = arith.addf %304, %303 : vector<8x128xf32>
    %306 = arith.divf %304, %305 : vector<8x128xf32>
    %307 = arith.mulf %298, %244 : vector<8x128xf32>
    %308 = arith.mulf %292, %300 : vector<8x128xf32>
    %309 = arith.addf %307, %308 : vector<8x128xf32>
    %310 = math.tanh %309 : vector<8x128xf32>
    %311 = arith.mulf %306, %310 : vector<8x128xf32>
    %312 = vector.extract_strided_slice %286 {offsets = [0, 0], sizes = [8, 128], strides = [1, 1]} : vector<8x512xf32> to vector<8x128xf32>
    %313 = arith.negf %312 : vector<8x128xf32>
    %314 = math.exp %313 : vector<8x128xf32>
    %cst_79 = arith.constant 1.000000e+00 : f32
    %315 = vector.broadcast %cst_79 : f32 to vector<8x128xf32>
    %316 = arith.addf %315, %314 : vector<8x128xf32>
    %317 = arith.divf %315, %316 : vector<8x128xf32>
    %318 = vector.extract_strided_slice %286 {offsets = [0, 128], sizes = [8, 128], strides = [1, 1]} : vector<8x512xf32> to vector<8x128xf32>
    %319 = arith.negf %318 : vector<8x128xf32>
    %320 = math.exp %319 : vector<8x128xf32>
    %cst_80 = arith.constant 1.000000e+00 : f32
    %321 = vector.broadcast %cst_80 : f32 to vector<8x128xf32>
    %322 = arith.addf %321, %320 : vector<8x128xf32>
    %323 = arith.divf %321, %322 : vector<8x128xf32>
    %324 = vector.extract_strided_slice %286 {offsets = [0, 256], sizes = [8, 128], strides = [1, 1]} : vector<8x512xf32> to vector<8x128xf32>
    %325 = math.tanh %324 : vector<8x128xf32>
    %326 = vector.extract_strided_slice %286 {offsets = [0, 384], sizes = [8, 128], strides = [1, 1]} : vector<8x512xf32> to vector<8x128xf32>
    %327 = arith.negf %326 : vector<8x128xf32>
    %328 = math.exp %327 : vector<8x128xf32>
    %cst_81 = arith.constant 1.000000e+00 : f32
    %329 = vector.broadcast %cst_81 : f32 to vector<8x128xf32>
    %330 = arith.addf %329, %328 : vector<8x128xf32>
    %331 = arith.divf %329, %330 : vector<8x128xf32>
    %332 = arith.mulf %323, %269 : vector<8x128xf32>
    %333 = arith.mulf %317, %325 : vector<8x128xf32>
    %334 = arith.addf %332, %333 : vector<8x128xf32>
    %335 = math.tanh %334 : vector<8x128xf32>
    %336 = arith.mulf %331, %335 : vector<8x128xf32>
    %337 = arith.addf %272, %311 : vector<8x128xf32>
    %338 = arith.maximumf %273, %311 : vector<8x128xf32>
    %339 = arith.addf %274, %336 : vector<8x128xf32>
    %340 = arith.maximumf %275, %336 : vector<8x128xf32>
    %c5_i32 = arith.constant 5 : i32
    %341 = arith.index_cast %c5_i32 : i32 to index
    %c0_82 = arith.constant 0 : index
    %c0_83 = arith.constant 0 : index
    %342 = vector.load %arg11[%341, %c0_82, %c0_83] : memref<8x8x512xf32, #tpu.memory_space<vmem>>, vector<1x8x512xf32>
    %343 = vector.shape_cast %342 : vector<1x8x512xf32> to vector<8x512xf32>
    %cst_84 = arith.constant dense<0.000000e+00> : vector<8x512xf32>
    %344 = tpu.matmul %311, %12, %cst_84 {dimension_numbers = #tpu.dot_dimension_numbers<[1], [0], [0], [1], [0, 0, 1, 1], [], []>} : vector<8x128xf32>, vector<128x512xf32>, vector<8x512xf32> -> vector<8x512xf32>
    %345 = arith.addf %343, %344 : vector<8x512xf32>
    %c7_i32_85 = arith.constant 7 : i32
    %346 = arith.subi %c7_i32_85, %c5_i32 : i32
    %347 = arith.index_cast %346 : i32 to index
    %c0_86 = arith.constant 0 : index
    %c0_87 = arith.constant 0 : index
    %348 = vector.load %arg12[%347, %c0_86, %c0_87] : memref<8x8x512xf32, #tpu.memory_space<vmem>>, vector<1x8x512xf32>
    %349 = vector.shape_cast %348 : vector<1x8x512xf32> to vector<8x512xf32>
    %cst_88 = arith.constant dense<0.000000e+00> : vector<8x512xf32>
    %350 = tpu.matmul %336, %13, %cst_88 {dimension_numbers = #tpu.dot_dimension_numbers<[1], [0], [0], [1], [0, 0, 1, 1], [], []>} : vector<8x128xf32>, vector<128x512xf32>, vector<8x512xf32> -> vector<8x512xf32>
    %351 = arith.addf %349, %350 : vector<8x512xf32>
    %352 = vector.extract_strided_slice %345 {offsets = [0, 0], sizes = [8, 128], strides = [1, 1]} : vector<8x512xf32> to vector<8x128xf32>
    %353 = arith.negf %352 : vector<8x128xf32>
    %354 = math.exp %353 : vector<8x128xf32>
    %cst_89 = arith.constant 1.000000e+00 : f32
    %355 = vector.broadcast %cst_89 : f32 to vector<8x128xf32>
    %356 = arith.addf %355, %354 : vector<8x128xf32>
    %357 = arith.divf %355, %356 : vector<8x128xf32>
    %358 = vector.extract_strided_slice %345 {offsets = [0, 128], sizes = [8, 128], strides = [1, 1]} : vector<8x512xf32> to vector<8x128xf32>
    %359 = arith.negf %358 : vector<8x128xf32>
    %360 = math.exp %359 : vector<8x128xf32>
    %cst_90 = arith.constant 1.000000e+00 : f32
    %361 = vector.broadcast %cst_90 : f32 to vector<8x128xf32>
    %362 = arith.addf %361, %360 : vector<8x128xf32>
    %363 = arith.divf %361, %362 : vector<8x128xf32>
    %364 = vector.extract_strided_slice %345 {offsets = [0, 256], sizes = [8, 128], strides = [1, 1]} : vector<8x512xf32> to vector<8x128xf32>
    %365 = math.tanh %364 : vector<8x128xf32>
    %366 = vector.extract_strided_slice %345 {offsets = [0, 384], sizes = [8, 128], strides = [1, 1]} : vector<8x512xf32> to vector<8x128xf32>
    %367 = arith.negf %366 : vector<8x128xf32>
    %368 = math.exp %367 : vector<8x128xf32>
    %cst_91 = arith.constant 1.000000e+00 : f32
    %369 = vector.broadcast %cst_91 : f32 to vector<8x128xf32>
    %370 = arith.addf %369, %368 : vector<8x128xf32>
    %371 = arith.divf %369, %370 : vector<8x128xf32>
    %372 = arith.mulf %363, %309 : vector<8x128xf32>
    %373 = arith.mulf %357, %365 : vector<8x128xf32>
    %374 = arith.addf %372, %373 : vector<8x128xf32>
    %375 = math.tanh %374 : vector<8x128xf32>
    %376 = arith.mulf %371, %375 : vector<8x128xf32>
    %377 = vector.extract_strided_slice %351 {offsets = [0, 0], sizes = [8, 128], strides = [1, 1]} : vector<8x512xf32> to vector<8x128xf32>
    %378 = arith.negf %377 : vector<8x128xf32>
    %379 = math.exp %378 : vector<8x128xf32>
    %cst_92 = arith.constant 1.000000e+00 : f32
    %380 = vector.broadcast %cst_92 : f32 to vector<8x128xf32>
    %381 = arith.addf %380, %379 : vector<8x128xf32>
    %382 = arith.divf %380, %381 : vector<8x128xf32>
    %383 = vector.extract_strided_slice %351 {offsets = [0, 128], sizes = [8, 128], strides = [1, 1]} : vector<8x512xf32> to vector<8x128xf32>
    %384 = arith.negf %383 : vector<8x128xf32>
    %385 = math.exp %384 : vector<8x128xf32>
    %cst_93 = arith.constant 1.000000e+00 : f32
    %386 = vector.broadcast %cst_93 : f32 to vector<8x128xf32>
    %387 = arith.addf %386, %385 : vector<8x128xf32>
    %388 = arith.divf %386, %387 : vector<8x128xf32>
    %389 = vector.extract_strided_slice %351 {offsets = [0, 256], sizes = [8, 128], strides = [1, 1]} : vector<8x512xf32> to vector<8x128xf32>
    %390 = math.tanh %389 : vector<8x128xf32>
    %391 = vector.extract_strided_slice %351 {offsets = [0, 384], sizes = [8, 128], strides = [1, 1]} : vector<8x512xf32> to vector<8x128xf32>
    %392 = arith.negf %391 : vector<8x128xf32>
    %393 = math.exp %392 : vector<8x128xf32>
    %cst_94 = arith.constant 1.000000e+00 : f32
    %394 = vector.broadcast %cst_94 : f32 to vector<8x128xf32>
    %395 = arith.addf %394, %393 : vector<8x128xf32>
    %396 = arith.divf %394, %395 : vector<8x128xf32>
    %397 = arith.mulf %388, %334 : vector<8x128xf32>
    %398 = arith.mulf %382, %390 : vector<8x128xf32>
    %399 = arith.addf %397, %398 : vector<8x128xf32>
    %400 = math.tanh %399 : vector<8x128xf32>
    %401 = arith.mulf %396, %400 : vector<8x128xf32>
    %402 = arith.addf %337, %376 : vector<8x128xf32>
    %403 = arith.maximumf %338, %376 : vector<8x128xf32>
    %404 = arith.addf %339, %401 : vector<8x128xf32>
    %405 = arith.maximumf %340, %401 : vector<8x128xf32>
    %c6_i32 = arith.constant 6 : i32
    %406 = arith.index_cast %c6_i32 : i32 to index
    %c0_95 = arith.constant 0 : index
    %c0_96 = arith.constant 0 : index
    %407 = vector.load %arg11[%406, %c0_95, %c0_96] : memref<8x8x512xf32, #tpu.memory_space<vmem>>, vector<1x8x512xf32>
    %408 = vector.shape_cast %407 : vector<1x8x512xf32> to vector<8x512xf32>
    %cst_97 = arith.constant dense<0.000000e+00> : vector<8x512xf32>
    %409 = tpu.matmul %376, %12, %cst_97 {dimension_numbers = #tpu.dot_dimension_numbers<[1], [0], [0], [1], [0, 0, 1, 1], [], []>} : vector<8x128xf32>, vector<128x512xf32>, vector<8x512xf32> -> vector<8x512xf32>
    %410 = arith.addf %408, %409 : vector<8x512xf32>
    %c7_i32_98 = arith.constant 7 : i32
    %411 = arith.subi %c7_i32_98, %c6_i32 : i32
    %412 = arith.index_cast %411 : i32 to index
    %c0_99 = arith.constant 0 : index
    %c0_100 = arith.constant 0 : index
    %413 = vector.load %arg12[%412, %c0_99, %c0_100] : memref<8x8x512xf32, #tpu.memory_space<vmem>>, vector<1x8x512xf32>
    %414 = vector.shape_cast %413 : vector<1x8x512xf32> to vector<8x512xf32>
    %cst_101 = arith.constant dense<0.000000e+00> : vector<8x512xf32>
    %415 = tpu.matmul %401, %13, %cst_101 {dimension_numbers = #tpu.dot_dimension_numbers<[1], [0], [0], [1], [0, 0, 1, 1], [], []>} : vector<8x128xf32>, vector<128x512xf32>, vector<8x512xf32> -> vector<8x512xf32>
    %416 = arith.addf %414, %415 : vector<8x512xf32>
    %417 = vector.extract_strided_slice %410 {offsets = [0, 0], sizes = [8, 128], strides = [1, 1]} : vector<8x512xf32> to vector<8x128xf32>
    %418 = arith.negf %417 : vector<8x128xf32>
    %419 = math.exp %418 : vector<8x128xf32>
    %cst_102 = arith.constant 1.000000e+00 : f32
    %420 = vector.broadcast %cst_102 : f32 to vector<8x128xf32>
    %421 = arith.addf %420, %419 : vector<8x128xf32>
    %422 = arith.divf %420, %421 : vector<8x128xf32>
    %423 = vector.extract_strided_slice %410 {offsets = [0, 128], sizes = [8, 128], strides = [1, 1]} : vector<8x512xf32> to vector<8x128xf32>
    %424 = arith.negf %423 : vector<8x128xf32>
    %425 = math.exp %424 : vector<8x128xf32>
    %cst_103 = arith.constant 1.000000e+00 : f32
    %426 = vector.broadcast %cst_103 : f32 to vector<8x128xf32>
    %427 = arith.addf %426, %425 : vector<8x128xf32>
    %428 = arith.divf %426, %427 : vector<8x128xf32>
    %429 = vector.extract_strided_slice %410 {offsets = [0, 256], sizes = [8, 128], strides = [1, 1]} : vector<8x512xf32> to vector<8x128xf32>
    %430 = math.tanh %429 : vector<8x128xf32>
    %431 = vector.extract_strided_slice %410 {offsets = [0, 384], sizes = [8, 128], strides = [1, 1]} : vector<8x512xf32> to vector<8x128xf32>
    %432 = arith.negf %431 : vector<8x128xf32>
    %433 = math.exp %432 : vector<8x128xf32>
    %cst_104 = arith.constant 1.000000e+00 : f32
    %434 = vector.broadcast %cst_104 : f32 to vector<8x128xf32>
    %435 = arith.addf %434, %433 : vector<8x128xf32>
    %436 = arith.divf %434, %435 : vector<8x128xf32>
    %437 = arith.mulf %428, %374 : vector<8x128xf32>
    %438 = arith.mulf %422, %430 : vector<8x128xf32>
    %439 = arith.addf %437, %438 : vector<8x128xf32>
    %440 = math.tanh %439 : vector<8x128xf32>
    %441 = arith.mulf %436, %440 : vector<8x128xf32>
    %442 = vector.extract_strided_slice %416 {offsets = [0, 0], sizes = [8, 128], strides = [1, 1]} : vector<8x512xf32> to vector<8x128xf32>
    %443 = arith.negf %442 : vector<8x128xf32>
    %444 = math.exp %443 : vector<8x128xf32>
    %cst_105 = arith.constant 1.000000e+00 : f32
    %445 = vector.broadcast %cst_105 : f32 to vector<8x128xf32>
    %446 = arith.addf %445, %444 : vector<8x128xf32>
    %447 = arith.divf %445, %446 : vector<8x128xf32>
    %448 = vector.extract_strided_slice %416 {offsets = [0, 128], sizes = [8, 128], strides = [1, 1]} : vector<8x512xf32> to vector<8x128xf32>
    %449 = arith.negf %448 : vector<8x128xf32>
    %450 = math.exp %449 : vector<8x128xf32>
    %cst_106 = arith.constant 1.000000e+00 : f32
    %451 = vector.broadcast %cst_106 : f32 to vector<8x128xf32>
    %452 = arith.addf %451, %450 : vector<8x128xf32>
    %453 = arith.divf %451, %452 : vector<8x128xf32>
    %454 = vector.extract_strided_slice %416 {offsets = [0, 256], sizes = [8, 128], strides = [1, 1]} : vector<8x512xf32> to vector<8x128xf32>
    %455 = math.tanh %454 : vector<8x128xf32>
    %456 = vector.extract_strided_slice %416 {offsets = [0, 384], sizes = [8, 128], strides = [1, 1]} : vector<8x512xf32> to vector<8x128xf32>
    %457 = arith.negf %456 : vector<8x128xf32>
    %458 = math.exp %457 : vector<8x128xf32>
    %cst_107 = arith.constant 1.000000e+00 : f32
    %459 = vector.broadcast %cst_107 : f32 to vector<8x128xf32>
    %460 = arith.addf %459, %458 : vector<8x128xf32>
    %461 = arith.divf %459, %460 : vector<8x128xf32>
    %462 = arith.mulf %453, %399 : vector<8x128xf32>
    %463 = arith.mulf %447, %455 : vector<8x128xf32>
    %464 = arith.addf %462, %463 : vector<8x128xf32>
    %465 = math.tanh %464 : vector<8x128xf32>
    %466 = arith.mulf %461, %465 : vector<8x128xf32>
    %467 = arith.addf %402, %441 : vector<8x128xf32>
    %468 = arith.maximumf %403, %441 : vector<8x128xf32>
    %469 = arith.addf %404, %466 : vector<8x128xf32>
    %470 = arith.maximumf %405, %466 : vector<8x128xf32>
    %c7_i32_108 = arith.constant 7 : i32
    %471 = arith.index_cast %c7_i32_108 : i32 to index
    %c0_109 = arith.constant 0 : index
    %c0_110 = arith.constant 0 : index
    %472 = vector.load %arg11[%471, %c0_109, %c0_110] : memref<8x8x512xf32, #tpu.memory_space<vmem>>, vector<1x8x512xf32>
    %473 = vector.shape_cast %472 : vector<1x8x512xf32> to vector<8x512xf32>
    %cst_111 = arith.constant dense<0.000000e+00> : vector<8x512xf32>
    %474 = tpu.matmul %441, %12, %cst_111 {dimension_numbers = #tpu.dot_dimension_numbers<[1], [0], [0], [1], [0, 0, 1, 1], [], []>} : vector<8x128xf32>, vector<128x512xf32>, vector<8x512xf32> -> vector<8x512xf32>
    %475 = arith.addf %473, %474 : vector<8x512xf32>
    %c7_i32_112 = arith.constant 7 : i32
    %476 = arith.subi %c7_i32_112, %c7_i32_108 : i32
    %477 = arith.index_cast %476 : i32 to index
    %c0_113 = arith.constant 0 : index
    %c0_114 = arith.constant 0 : index
    %478 = vector.load %arg12[%477, %c0_113, %c0_114] : memref<8x8x512xf32, #tpu.memory_space<vmem>>, vector<1x8x512xf32>
    %479 = vector.shape_cast %478 : vector<1x8x512xf32> to vector<8x512xf32>
    %cst_115 = arith.constant dense<0.000000e+00> : vector<8x512xf32>
    %480 = tpu.matmul %466, %13, %cst_115 {dimension_numbers = #tpu.dot_dimension_numbers<[1], [0], [0], [1], [0, 0, 1, 1], [], []>} : vector<8x128xf32>, vector<128x512xf32>, vector<8x512xf32> -> vector<8x512xf32>
    %481 = arith.addf %479, %480 : vector<8x512xf32>
    %482 = vector.extract_strided_slice %475 {offsets = [0, 0], sizes = [8, 128], strides = [1, 1]} : vector<8x512xf32> to vector<8x128xf32>
    %483 = arith.negf %482 : vector<8x128xf32>
    %484 = math.exp %483 : vector<8x128xf32>
    %cst_116 = arith.constant 1.000000e+00 : f32
    %485 = vector.broadcast %cst_116 : f32 to vector<8x128xf32>
    %486 = arith.addf %485, %484 : vector<8x128xf32>
    %487 = arith.divf %485, %486 : vector<8x128xf32>
    %488 = vector.extract_strided_slice %475 {offsets = [0, 128], sizes = [8, 128], strides = [1, 1]} : vector<8x512xf32> to vector<8x128xf32>
    %489 = arith.negf %488 : vector<8x128xf32>
    %490 = math.exp %489 : vector<8x128xf32>
    %cst_117 = arith.constant 1.000000e+00 : f32
    %491 = vector.broadcast %cst_117 : f32 to vector<8x128xf32>
    %492 = arith.addf %491, %490 : vector<8x128xf32>
    %493 = arith.divf %491, %492 : vector<8x128xf32>
    %494 = vector.extract_strided_slice %475 {offsets = [0, 256], sizes = [8, 128], strides = [1, 1]} : vector<8x512xf32> to vector<8x128xf32>
    %495 = math.tanh %494 : vector<8x128xf32>
    %496 = vector.extract_strided_slice %475 {offsets = [0, 384], sizes = [8, 128], strides = [1, 1]} : vector<8x512xf32> to vector<8x128xf32>
    %497 = arith.negf %496 : vector<8x128xf32>
    %498 = math.exp %497 : vector<8x128xf32>
    %cst_118 = arith.constant 1.000000e+00 : f32
    %499 = vector.broadcast %cst_118 : f32 to vector<8x128xf32>
    %500 = arith.addf %499, %498 : vector<8x128xf32>
    %501 = arith.divf %499, %500 : vector<8x128xf32>
    %502 = arith.mulf %493, %439 : vector<8x128xf32>
    %503 = arith.mulf %487, %495 : vector<8x128xf32>
    %504 = arith.addf %502, %503 : vector<8x128xf32>
    %505 = math.tanh %504 : vector<8x128xf32>
    %506 = arith.mulf %501, %505 : vector<8x128xf32>
    %507 = vector.extract_strided_slice %481 {offsets = [0, 0], sizes = [8, 128], strides = [1, 1]} : vector<8x512xf32> to vector<8x128xf32>
    %508 = arith.negf %507 : vector<8x128xf32>
    %509 = math.exp %508 : vector<8x128xf32>
    %cst_119 = arith.constant 1.000000e+00 : f32
    %510 = vector.broadcast %cst_119 : f32 to vector<8x128xf32>
    %511 = arith.addf %510, %509 : vector<8x128xf32>
    %512 = arith.divf %510, %511 : vector<8x128xf32>
    %513 = vector.extract_strided_slice %481 {offsets = [0, 128], sizes = [8, 128], strides = [1, 1]} : vector<8x512xf32> to vector<8x128xf32>
    %514 = arith.negf %513 : vector<8x128xf32>
    %515 = math.exp %514 : vector<8x128xf32>
    %cst_120 = arith.constant 1.000000e+00 : f32
    %516 = vector.broadcast %cst_120 : f32 to vector<8x128xf32>
    %517 = arith.addf %516, %515 : vector<8x128xf32>
    %518 = arith.divf %516, %517 : vector<8x128xf32>
    %519 = vector.extract_strided_slice %481 {offsets = [0, 256], sizes = [8, 128], strides = [1, 1]} : vector<8x512xf32> to vector<8x128xf32>
    %520 = math.tanh %519 : vector<8x128xf32>
    %521 = vector.extract_strided_slice %481 {offsets = [0, 384], sizes = [8, 128], strides = [1, 1]} : vector<8x512xf32> to vector<8x128xf32>
    %522 = arith.negf %521 : vector<8x128xf32>
    %523 = math.exp %522 : vector<8x128xf32>
    %cst_121 = arith.constant 1.000000e+00 : f32
    %524 = vector.broadcast %cst_121 : f32 to vector<8x128xf32>
    %525 = arith.addf %524, %523 : vector<8x128xf32>
    %526 = arith.divf %524, %525 : vector<8x128xf32>
    %527 = arith.mulf %518, %464 : vector<8x128xf32>
    %528 = arith.mulf %512, %520 : vector<8x128xf32>
    %529 = arith.addf %527, %528 : vector<8x128xf32>
    %530 = math.tanh %529 : vector<8x128xf32>
    %531 = arith.mulf %526, %530 : vector<8x128xf32>
    %532 = arith.addf %467, %506 : vector<8x128xf32>
    %533 = arith.maximumf %468, %506 : vector<8x128xf32>
    %534 = arith.addf %469, %531 : vector<8x128xf32>
    %535 = arith.maximumf %470, %531 : vector<8x128xf32>
    %c8_i32 = arith.constant 8 : i32
    %cst_122 = arith.constant 1.250000e-01 : f32
    %536 = vector.broadcast %cst_122 : f32 to vector<8x128xf32>
    %537 = arith.mulf %532, %536 : vector<8x128xf32>
    %cst_123 = arith.constant 1.250000e-01 : f32
    %538 = vector.broadcast %cst_123 : f32 to vector<8x128xf32>
    %539 = arith.mulf %534, %538 : vector<8x128xf32>
    %c0_124 = arith.constant 0 : index
    %c0_125 = arith.constant 0 : index
    %540 = vector.load %arg6[%c0_124, %c0_125] : memref<512x32xf32, #tpu.memory_space<vmem>>, vector<512x32xf32>
    %541 = vector.extract_strided_slice %540 {offsets = [0, 0], sizes = [128, 32], strides = [1, 1]} : vector<512x32xf32> to vector<128x32xf32>
    %cst_126 = arith.constant dense<0.000000e+00> : vector<8x32xf32>
    %542 = tpu.matmul %537, %541, %cst_126 {dimension_numbers = #tpu.dot_dimension_numbers<[1], [0], [0], [1], [0, 0, 1, 1], [], []>} : vector<8x128xf32>, vector<128x32xf32>, vector<8x32xf32> -> vector<8x32xf32>
    %543 = vector.extract_strided_slice %540 {offsets = [128, 0], sizes = [128, 32], strides = [1, 1]} : vector<512x32xf32> to vector<128x32xf32>
    %cst_127 = arith.constant dense<0.000000e+00> : vector<8x32xf32>
    %544 = tpu.matmul %539, %543, %cst_127 {dimension_numbers = #tpu.dot_dimension_numbers<[1], [0], [0], [1], [0, 0, 1, 1], [], []>} : vector<8x128xf32>, vector<128x32xf32>, vector<8x32xf32> -> vector<8x32xf32>
    %545 = arith.addf %542, %544 : vector<8x32xf32>
    %546 = vector.extract_strided_slice %540 {offsets = [256, 0], sizes = [128, 32], strides = [1, 1]} : vector<512x32xf32> to vector<128x32xf32>
    %cst_128 = arith.constant dense<0.000000e+00> : vector<8x32xf32>
    %547 = tpu.matmul %533, %546, %cst_128 {dimension_numbers = #tpu.dot_dimension_numbers<[1], [0], [0], [1], [0, 0, 1, 1], [], []>} : vector<8x128xf32>, vector<128x32xf32>, vector<8x32xf32> -> vector<8x32xf32>
    %548 = arith.addf %545, %547 : vector<8x32xf32>
    %549 = vector.extract_strided_slice %540 {offsets = [384, 0], sizes = [128, 32], strides = [1, 1]} : vector<512x32xf32> to vector<128x32xf32>
    %cst_129 = arith.constant dense<0.000000e+00> : vector<8x32xf32>
    %550 = tpu.matmul %535, %549, %cst_129 {dimension_numbers = #tpu.dot_dimension_numbers<[1], [0], [0], [1], [0, 0, 1, 1], [], []>} : vector<8x128xf32>, vector<128x32xf32>, vector<8x32xf32> -> vector<8x32xf32>
    %551 = arith.addf %548, %550 : vector<8x32xf32>
    %c0_130 = arith.constant 0 : index
    %c0_131 = arith.constant 0 : index
    %552 = vector.load %arg7[%c0_130, %c0_131] : memref<1x32xf32, #tpu.memory_space<vmem>>, vector<1x32xf32>
    %553 = vector.broadcast %552 : vector<1x32xf32> to vector<8x32xf32>
    %554 = arith.addf %551, %553 : vector<8x32xf32>
    %cst_132 = arith.constant 0.000000e+00 : f32
    %555 = vector.broadcast %cst_132 : f32 to vector<8x32xf32>
    %556 = arith.maximumf %554, %555 : vector<8x32xf32>
    %c0_133 = arith.constant 0 : index
    %c0_134 = arith.constant 0 : index
    %557 = vector.load %arg8[%c0_133, %c0_134] : memref<32x4xf32, #tpu.memory_space<vmem>>, vector<32x4xf32>
    %cst_135 = arith.constant dense<0.000000e+00> : vector<8x4xf32>
    %558 = tpu.matmul %556, %557, %cst_135 {dimension_numbers = #tpu.dot_dimension_numbers<[1], [0], [0], [1], [0, 0, 1, 1], [], []>} : vector<8x32xf32>, vector<32x4xf32>, vector<8x4xf32> -> vector<8x4xf32>
    %c0_136 = arith.constant 0 : index
    %c0_137 = arith.constant 0 : index
    %559 = vector.load %arg9[%c0_136, %c0_137] : memref<1x4xf32, #tpu.memory_space<vmem>>, vector<1x4xf32>
    %560 = vector.broadcast %559 : vector<1x4xf32> to vector<8x4xf32>
    %561 = arith.addf %558, %560 : vector<8x4xf32>
    %c0_138 = arith.constant 0 : index
    %c0_139 = arith.constant 0 : index
    %562 = vector.load %arg10[%c0_138, %c0_139] : memref<8x4xf32, #tpu.memory_space<vmem>>, vector<8x4xf32>
    tpu.vector_store %arg10[%c0_138, %c0_139], %561 {strides = array<i32>} : memref<8x4xf32, #tpu.memory_space<vmem>>, vector<8x4xf32>,
    return
  }
  func.func @transform_0(%arg0: i32) -> (i32, i32, i32) {
    %c0_i32 = arith.constant 0 : i32
    %c0_i32_0 = arith.constant 0 : i32
    %c0_i32_1 = arith.constant 0 : i32
    return %c0_i32, %arg0, %c0_i32_0 : i32, i32, i32
  }
  func.func @transform_1(%arg0: i32) -> (i32, i32) {
    %c0_i32 = arith.constant 0 : i32
    %c0_i32_0 = arith.constant 0 : i32
    %c0_i32_1 = arith.constant 0 : i32
    return %c0_i32, %c0_i32_0 : i32, i32
  }
  func.func @transform_2(%arg0: i32) -> (i32, i32) {
    %c0_i32 = arith.constant 0 : i32
    %c0_i32_0 = arith.constant 0 : i32
    %c0_i32_1 = arith.constant 0 : i32
    return %c0_i32, %c0_i32_0 : i32, i32
  }
  func.func @transform_3(%arg0: i32) -> (i32, i32) {
    %c0_i32 = arith.constant 0 : i32
    %c0_i32_0 = arith.constant 0 : i32
    %c0_i32_1 = arith.constant 0 : i32
    return %c0_i32, %c0_i32_0 : i32, i32
  }
  func.func @transform_4(%arg0: i32) -> (i32, i32) {
    %c0_i32 = arith.constant 0 : i32
    %c0_i32_0 = arith.constant 0 : i32
    %c0_i32_1 = arith.constant 0 : i32
    return %c0_i32, %c0_i32_0 : i32, i32
  }
  func.func @transform_5(%arg0: i32) -> (i32, i32) {
    %c0_i32 = arith.constant 0 : i32
    %c0_i32_0 = arith.constant 0 : i32
    %c0_i32_1 = arith.constant 0 : i32
    return %c0_i32, %c0_i32_0 : i32, i32
  }
  func.func @transform_6(%arg0: i32) -> (i32, i32) {
    %c0_i32 = arith.constant 0 : i32
    %c0_i32_0 = arith.constant 0 : i32
    %c0_i32_1 = arith.constant 0 : i32
    return %c0_i32, %c0_i32_0 : i32, i32
  }
  func.func @transform_7(%arg0: i32) -> (i32, i32) {
    %c0_i32 = arith.constant 0 : i32
    %c0_i32_0 = arith.constant 0 : i32
    %c0_i32_1 = arith.constant 0 : i32
    return %c0_i32, %c0_i32_0 : i32, i32
  }
  func.func @transform_8(%arg0: i32) -> (i32, i32) {
    %c0_i32 = arith.constant 0 : i32
    %c0_i32_0 = arith.constant 0 : i32
    %c0_i32_1 = arith.constant 0 : i32
    return %c0_i32, %c0_i32_0 : i32, i32
  }
  func.func @transform_9(%arg0: i32) -> (i32, i32) {
    %c0_i32 = arith.constant 0 : i32
    %c0_i32_0 = arith.constant 0 : i32
    return %arg0, %c0_i32 : i32, i32
  }
}

</mosaic_0001>

<llo_original>
// kernel: tpu_custom_call.1
$region0: #{tpu_custom_call.1}
  #allocation0 [shape = 'u32[]', space=smem, size = 0x4, offset = 0x4, fixed_abs, tag = 'smem constant byte address 0x4 - core index']
  #allocation1 [shape = 'u32[72,128]{1,0:T(1,128)}', space=vmem, size = 0x9000, scoped, tag = 'internal scratch']
  #allocation2 [shape = 'f32[8,8,512]{2,1,0:T(8,128)}', space=vmem, size = 0x20000, scoped, tag = 'scratch operand']
  #allocation3 [shape = 'f32[8,8,512]{2,1,0:T(8,128)}', space=vmem, size = 0x20000, scoped, tag = 'scratch operand']
  %s0 = inlined_call_operand.vmem [shape: f32[8,8,32], index: 0, kind: input, shape index: {}]
  %s1 = inlined_call_operand.hbm [shape: f32[32,1024], index: 1, kind: input, shape index: {}]
  %s2 = inlined_call_operand.vmem [shape: f32[1,1024], index: 2, kind: input, shape index: {}]
  %s3 = inlined_call_operand.vmem [shape: f32[128,512], index: 3, kind: input, shape index: {}]
  %s4 = inlined_call_operand.hbm [shape: f32[128,512], index: 4, kind: input, shape index: {}]
  %s5 = inlined_call_operand.vmem [shape: f32[512,32], index: 5, kind: input, shape index: {}]
  %s6 = inlined_call_operand.vmem [shape: f32[1,32], index: 6, kind: input, shape index: {}]
  %s7 = inlined_call_operand.vmem [shape: f32[32,4], index: 7, kind: input, shape index: {}]
  %s8 = inlined_call_operand.vmem [shape: f32[1,4], index: 8, kind: input, shape index: {}]
  %s9 = inlined_call_operand.vmem [shape: f32[8,4], index: 9, kind: output, shape index: {}]
  %s10 = sld [smem:[#allocation0]]
  $region54: #{tpu_custom_call.1} parent=0
    _
  %s12 = ssub.s32 1, %s10
  %s13 = scalar_select 0, %s12, %s10
  $region1: #{tpu_custom_call.1} parent=0
    #allocation4 [shape = 'u8[131072]{0}', space=vmem, size = 0x20000, scoped, tag = 'input window, operand 1, single buffered']
    #allocation5 [shape = 's32[1]{0}', space=sflag, size = 0x4, scoped, tag = 'scoped memory for tpu_custom_call.1']
    #allocation6 [shape = 'u8[262144]{0}', space=vmem, size = 0x40000, scoped, tag = 'input window, operand 4, single buffered']
    #allocation7 [shape = 's32[1]{0}', space=sflag, size = 0x4, scoped, tag = 'scoped memory for tpu_custom_call.1']
    %14 = vsyncpa [#allocation5], 0
    %15 = vsyncpa [#allocation7], 0
    // Predicated region
    $region2: #{tpu_custom_call.1} parent=1 // pred_check
      _
    $region3: #{tpu_custom_call.1} parent=1 // pred_check_branch
      %17 = sbr.rel (0) target = $region5
    $region4: #{tpu_custom_call.1} parent=1 // pred_region
      _
    $region5: #{tpu_custom_call.1} parent=1 // pred_fallthru
      _
    // Predicated region
    $region6: #{tpu_custom_call.1} parent=1 // pred_check
      _
    $region7: #{tpu_custom_call.1} parent=1 // pred_check_branch
      %19 = sbr.rel (0) target = $region9
    $region8: #{tpu_custom_call.1} parent=1 // pred_region
      %21 = vsyncadd [#allocation5], 0
      %s22 = sshll.u32 %s1, 4
      %s23 = int_to_ptr.hbm [resolvable:$true] %s22
      %s24 = sshll.u32 [#allocation4], 4
      %s25 = int_to_ptr.vmem [resolvable:$true] %s24
      %30 = dma.hbm_to_vmem [thread:$0]  %s23, 4096, %s25, [#allocation5], 1024, 1024, 64
    $region9: #{tpu_custom_call.1} parent=1 // pred_fallthru
      _
    // Predicated region
    $region10: #{tpu_custom_call.1} parent=1 // pred_check
      _
    $region11: #{tpu_custom_call.1} parent=1 // pred_check_branch
      %32 = sbr.rel (0) target = $region13
    $region12: #{tpu_custom_call.1} parent=1 // pred_region
      _
    $region13: #{tpu_custom_call.1} parent=1 // pred_fallthru
      _
    // Predicated region
    $region14: #{tpu_custom_call.1} parent=1 // pred_check
      _
    $region15: #{tpu_custom_call.1} parent=1 // pred_check_branch
      %34 = sbr.rel (0) target = $region17
    $region16: #{tpu_custom_call.1} parent=1 // pred_region
      _
    $region17: #{tpu_custom_call.1} parent=1 // pred_fallthru
      _
    // Predicated region
    $region18: #{tpu_custom_call.1} parent=1 // pred_check
      _
    $region19: #{tpu_custom_call.1} parent=1 // pred_check_branch
      %36 = sbr.rel (0) target = $region21
    $region20: #{tpu_custom_call.1} parent=1 // pred_region
      %38 = vsyncadd [#allocation7], 0
      %s39 = sshll.u32 %s4, 4
      %s40 = int_to_ptr.hbm [resolvable:$true] %s39
      %s41 = sshll.u32 [#allocation6], 4
      %s42 = int_to_ptr.vmem [resolvable:$true] %s41
      %47 = dma.hbm_to_vmem [thread:$0]  %s40, 8192, %s42, [#allocation7], 512, 512, 32
    $region21: #{tpu_custom_call.1} parent=1 // pred_fallthru
      _
    // Predicated region
    $region22: #{tpu_custom_call.1} parent=1 // pred_check
      _
    $region23: #{tpu_custom_call.1} parent=1 // pred_check_branch
      %49 = sbr.rel (0) target = $region25
    $region24: #{tpu_custom_call.1} parent=1 // pred_region
      _
    $region25: #{tpu_custom_call.1} parent=1 // pred_fallthru
      _
    // Predicated region
    $region26: #{tpu_custom_call.1} parent=1 // pred_check
      _
    $region27: #{tpu_custom_call.1} parent=1 // pred_check_branch
      %51 = sbr.rel (0) target = $region29
    $region28: #{tpu_custom_call.1} parent=1 // pred_region
      _
    $region29: #{tpu_custom_call.1} parent=1 // pred_fallthru
      _
    // Predicated region
    $region30: #{tpu_custom_call.1} parent=1 // pred_check
      _
    $region31: #{tpu_custom_call.1} parent=1 // pred_check_branch
      %53 = sbr.rel (0) target = $region33
    $region32: #{tpu_custom_call.1} parent=1 // pred_region
      _
    $region33: #{tpu_custom_call.1} parent=1 // pred_fallthru
      _
    // Predicated region
    $region34: #{tpu_custom_call.1} parent=1 // pred_check
      _
    $region35: #{tpu_custom_call.1} parent=1 // pred_check_branch
      %55 = sbr.rel (0) target = $region37
    $region36: #{tpu_custom_call.1} parent=1 // pred_region
      _
    $region37: #{tpu_custom_call.1} parent=1 // pred_fallthru
      _
    // Predicated region
    $region38: #{tpu_custom_call.1} parent=1 // pred_check
      _
    $region39: #{tpu_custom_call.1} parent=1 // pred_check_branch
      %57 = sbr.rel (0) target = $region41
    $region40: #{tpu_custom_call.1} parent=1 // pred_region
      %59 = dma.done [#allocation5], 4096
    $region41: #{tpu_custom_call.1} parent=1 // pred_fallthru
      _
    // Predicated region
    $region42: #{tpu_custom_call.1} parent=1 // pred_check
      _
    $region43: #{tpu_custom_call.1} parent=1 // pred_check_branch
      %61 = sbr.rel (0) target = $region45
    $region44: #{tpu_custom_call.1} parent=1 // pred_region
      %63 = dma.done [#allocation7], 8192
    $region45: #{tpu_custom_call.1} parent=1 // pred_fallthru
      _
    %v64 = vld [vmem:[%s0] sm:$0xff]
    %v65 = vld [vmem:[%s0 + $0x8] sm:$0xff]
    %v66 = vld [vmem:[%s0 + $0x10] sm:$0xff]
    %v67 = vld [vmem:[%s0 + $0x18] sm:$0xff]
    %v68 = vld [vmem:[%s0 + $0x20] sm:$0xff]
    %v69 = vld [vmem:[%s0 + $0x28] sm:$0xff]
    %v70 = vld [vmem:[%s0 + $0x30] sm:$0xff]
    %v71 = vld [vmem:[%s0 + $0x38] sm:$0xff]
    %v72 = vld [vmem:[#allocation4] sm:$0xff]
    %v73 = vld [vmem:[#allocation4 + $0x8] sm:$0xff]
    %v74 = vld [vmem:[#allocation4 + $0x10] sm:$0xff]
    %v75 = vld [vmem:[#allocation4 + $0x18] sm:$0xff]
    %v76 = vld [vmem:[#allocation4 + $0x20] sm:$0xff]
    %v77 = vld [vmem:[#allocation4 + $0x28] sm:$0xff]
    %v78 = vld [vmem:[#allocation4 + $0x30] sm:$0xff]
    %v79 = vld [vmem:[#allocation4 + $0x38] sm:$0xff]
    %v80 = vld [vmem:[#allocation4 + $0x40] sm:$0xff]
    %v81 = vld [vmem:[#allocation4 + $0x48] sm:$0xff]
    %v82 = vld [vmem:[#allocation4 + $0x50] sm:$0xff]
    %v83 = vld [vmem:[#allocation4 + $0x58] sm:$0xff]
    %v84 = vld [vmem:[#allocation4 + $0x60] sm:$0xff]
    %v85 = vld [vmem:[#allocation4 + $0x68] sm:$0xff]
    %v86 = vld [vmem:[#allocation4 + $0x70] sm:$0xff]
    %v87 = vld [vmem:[#allocation4 + $0x78] sm:$0xff]
    %v88 = vld [vmem:[#allocation4 + $0x80] sm:$0xff]
    %v89 = vld [vmem:[#allocation4 + $0x88] sm:$0xff]
    %v90 = vld [vmem:[#allocation4 + $0x90] sm:$0xff]
    %v91 = vld [vmem:[#allocation4 + $0x98] sm:$0xff]
    %v92 = vld [vmem:[#allocation4 + $0xa0] sm:$0xff]
    %v93 = vld [vmem:[#allocation4 + $0xa8] sm:$0xff]
    %v94 = vld [vmem:[#allocation4 + $0xb0] sm:$0xff]
    %v95 = vld [vmem:[#allocation4 + $0xb8] sm:$0xff]
    %v96 = vld [vmem:[#allocation4 + $0xc0] sm:$0xff]
    %v97 = vld [vmem:[#allocation4 + $0xc8] sm:$0xff]
    %v98 = vld [vmem:[#allocation4 + $0xd0] sm:$0xff]
    %v99 = vld [vmem:[#allocation4 + $0xd8] sm:$0xff]
    %v100 = vld [vmem:[#allocation4 + $0xe0] sm:$0xff]
    %v101 = vld [vmem:[#allocation4 + $0xe8] sm:$0xff]
    %v102 = vld [vmem:[#allocation4 + $0xf0] sm:$0xff]
    %v103 = vld [vmem:[#allocation4 + $0xf8] sm:$0xff]
    %v104 = vld [vmem:[%s2] sm:$0xff]
    %v106 = vperm.slane %v104, 0
    %v107 = vperm.slane %v104, 1
    %v108 = vperm.slane %v104, 2
    %v109 = vperm.slane %v104, 3
    %v110 = vperm.slane %v104, 4
    %v111 = vperm.slane %v104, 5
    %v112 = vperm.slane %v104, 6
    %v113 = vperm.slane %v104, 7
    %vm122 = vcmask 261120
    %v124 = vsel %vm122, %v64, 0
    %v127 = vsel %vm122, %v65, 0
    %v130 = vsel %vm122, %v66, 0
    %v133 = vsel %vm122, %v67, 0
    %v136 = vsel %vm122, %v68, 0
    %v139 = vsel %vm122, %v69, 0
    %v142 = vsel %vm122, %v70, 0
    %v145 = vsel %vm122, %v71, 0
    %147 = vmatpush.msra.mxu0 0.0
    %148 = vmatpush.msra.mxu0 0.0
    %149 = vmatpush.msra.mxu0 0.0
    %150 = vmatpush.msra.mxu0 0.0
    %151 = vmatpush.msra.mxu0 0.0
    %152 = vmatpush.msra.mxu0 0.0
    %153 = vmatpush.msra.mxu0 0.0
    %154 = vmatpush.msra.mxu0 0.0
    %155 = vmatpush.msra.mxu0 0.0
    %156 = vmatpush.msra.mxu0 0.0
    %157 = vmatpush.msra.mxu0 0.0
    %158 = vmatpush.msra.mxu0 0.0
    %159 = vmatpush.msra.mxu0 %v96
    %160 = vmatpush.msra.mxu0 %v88
    %161 = vmatpush.msra.mxu0 %v80
    %162 = vmatpush.msra.mxu0 %v72
    %163 = vmatmul.f32.gmra.mxu0 %v124
    %v164 = vpop.f32.mrf.mxu0
    %v165 = vadd.f32 %v106, %v164
    %166 = vmatmul.f32.gmra.mxu0 %v127
    %v167 = vpop.f32.mrf.mxu0
    %v168 = vadd.f32 %v106, %v167
    %169 = vmatmul.f32.gmra.mxu0 %v130
    %v170 = vpop.f32.mrf.mxu0
    %v171 = vadd.f32 %v106, %v170
    %172 = vmatmul.f32.gmra.mxu0 %v133
    %v173 = vpop.f32.mrf.mxu0
    %v174 = vadd.f32 %v106, %v173
    %175 = vmatmul.f32.gmra.mxu0 %v136
    %v176 = vpop.f32.mrf.mxu0
    %v177 = vadd.f32 %v106, %v176
    %178 = vmatmul.f32.gmra.mxu0 %v139
    %v179 = vpop.f32.mrf.mxu0
    %v180 = vadd.f32 %v106, %v179
    %181 = vmatmul.f32.gmra.mxu0 %v142
    %v182 = vpop.f32.mrf.mxu0
    %v183 = vadd.f32 %v106, %v182
    %184 = vmatmul.f32.gmra.mxu0 %v145
    %v185 = vpop.f32.mrf.mxu0
    %v186 = vadd.f32 %v106, %v185
    %187 = vdwg.mxu0
    %188 = vmatpush.msra.mxu0 0.0
    %189 = vmatpush.msra.mxu0 0.0
    %190 = vmatpush.msra.mxu0 0.0
    %191 = vmatpush.msra.mxu0 0.0
    %192 = vmatpush.msra.mxu0 0.0
    %193 = vmatpush.msra.mxu0 0.0
    %194 = vmatpush.msra.mxu0 0.0
    %195 = vmatpush.msra.mxu0 0.0
    %196 = vmatpush.msra.mxu0 0.0
    %197 = vmatpush.msra.mxu0 0.0
    %198 = vmatpush.msra.mxu0 0.0
    %199 = vmatpush.msra.mxu0 0.0
    %200 = vmatpush.msra.mxu0 %v97
    %201 = vmatpush.msra.mxu0 %v89
    %202 = vmatpush.msra.mxu0 %v81
    %203 = vmatpush.msra.mxu0 %v73
    %204 = vmatmul.f32.gmra.mxu0 %v124
    %v205 = vpop.f32.mrf.mxu0
    %v206 = vadd.f32 %v107, %v205
    %207 = vmatmul.f32.gmra.mxu0 %v127
    %v208 = vpop.f32.mrf.mxu0
    %v209 = vadd.f32 %v107, %v208
    %210 = vmatmul.f32.gmra.mxu0 %v130
    %v211 = vpop.f32.mrf.mxu0
    %v212 = vadd.f32 %v107, %v211
    %213 = vmatmul.f32.gmra.mxu0 %v133
    %v214 = vpop.f32.mrf.mxu0
    %v215 = vadd.f32 %v107, %v214
    %216 = vmatmul.f32.gmra.mxu0 %v136
    %v217 = vpop.f32.mrf.mxu0
    %v218 = vadd.f32 %v107, %v217
    %219 = vmatmul.f32.gmra.mxu0 %v139
    %v220 = vpop.f32.mrf.mxu0
    %v221 = vadd.f32 %v107, %v220
    %222 = vmatmul.f32.gmra.mxu0 %v142
    %v223 = vpop.f32.mrf.mxu0
    %v224 = vadd.f32 %v107, %v223
    %225 = vmatmul.f32.gmra.mxu0 %v145
    %v226 = vpop.f32.mrf.mxu0
    %v227 = vadd.f32 %v107, %v226
    %228 = vdwg.mxu0
    %229 = vmatpush.msra.mxu0 0.0
    %230 = vmatpush.msra.mxu0 0.0
    %231 = vmatpush.msra.mxu0 0.0
    %232 = vmatpush.msra.mxu0 0.0
    %233 = vmatpush.msra.mxu0 0.0
    %234 = vmatpush.msra.mxu0 0.0
    %235 = vmatpush.msra.mxu0 0.0
    %236 = vmatpush.msra.mxu0 0.0
    %237 = vmatpush.msra.mxu0 0.0
    %238 = vmatpush.msra.mxu0 0.0
    %239 = vmatpush.msra.mxu0 0.0
    %240 = vmatpush.msra.mxu0 0.0
    %241 = vmatpush.msra.mxu0 %v98
    %242 = vmatpush.msra.mxu0 %v90
    %243 = vmatpush.msra.mxu0 %v82
    %244 = vmatpush.msra.mxu0 %v74
    %245 = vmatmul.f32.gmra.mxu0 %v124
    %v246 = vpop.f32.mrf.mxu0
    %v247 = vadd.f32 %v108, %v246
    %248 = vmatmul.f32.gmra.mxu0 %v127
    %v249 = vpop.f32.mrf.mxu0
    %v250 = vadd.f32 %v108, %v249
    %251 = vmatmul.f32.gmra.mxu0 %v130
    %v252 = vpop.f32.mrf.mxu0
    %v253 = vadd.f32 %v108, %v252
    %254 = vmatmul.f32.gmra.mxu0 %v133
    %v255 = vpop.f32.mrf.mxu0
    %v256 = vadd.f32 %v108, %v255
    %257 = vmatmul.f32.gmra.mxu0 %v136
    %v258 = vpop.f32.mrf.mxu0
    %v259 = vadd.f32 %v108, %v258
    %260 = vmatmul.f32.gmra.mxu0 %v139
    %v261 = vpop.f32.mrf.mxu0
    %v262 = vadd.f32 %v108, %v261
    %263 = vmatmul.f32.gmra.mxu0 %v142
    %v264 = vpop.f32.mrf.mxu0
    %v265 = vadd.f32 %v108, %v264
    %266 = vmatmul.f32.gmra.mxu0 %v145
    %v267 = vpop.f32.mrf.mxu0
    %v268 = vadd.f32 %v108, %v267
    %269 = vdwg.mxu0
    %270 = vmatpush.msra.mxu0 0.0
    %271 = vmatpush.msra.mxu0 0.0
    %272 = vmatpush.msra.mxu0 0.0
    %273 = vmatpush.msra.mxu0 0.0
    %274 = vmatpush.msra.mxu0 0.0
    %275 = vmatpush.msra.mxu0 0.0
    %276 = vmatpush.msra.mxu0 0.0
    %277 = vmatpush.msra.mxu0 0.0
    %278 = vmatpush.msra.mxu0 0.0
    %279 = vmatpush.msra.mxu0 0.0
    %280 = vmatpush.msra.mxu0 0.0
    %281 = vmatpush.msra.mxu0 0.0
    %282 = vmatpush.msra.mxu0 %v99
    %283 = vmatpush.msra.mxu0 %v91
    %284 = vmatpush.msra.mxu0 %v83
    %285 = vmatpush.msra.mxu0 %v75
    %286 = vmatmul.f32.gmra.mxu0 %v124
    %v287 = vpop.f32.mrf.mxu0
    %v288 = vadd.f32 %v109, %v287
    %289 = vmatmul.f32.gmra.mxu0 %v127
    %v290 = vpop.f32.mrf.mxu0
    %v291 = vadd.f32 %v109, %v290
    %292 = vmatmul.f32.gmra.mxu0 %v130
    %v293 = vpop.f32.mrf.mxu0
    %v294 = vadd.f32 %v109, %v293
    %295 = vmatmul.f32.gmra.mxu0 %v133
    %v296 = vpop.f32.mrf.mxu0
    %v297 = vadd.f32 %v109, %v296
    %298 = vmatmul.f32.gmra.mxu0 %v136
    %v299 = vpop.f32.mrf.mxu0
    %v300 = vadd.f32 %v109, %v299
    %301 = vmatmul.f32.gmra.mxu0 %v139
    %v302 = vpop.f32.mrf.mxu0
    %v303 = vadd.f32 %v109, %v302
    %304 = vmatmul.f32.gmra.mxu0 %v142
    %v305 = vpop.f32.mrf.mxu0
    %v306 = vadd.f32 %v109, %v305
    %307 = vmatmul.f32.gmra.mxu0 %v145
    %v308 = vpop.f32.mrf.mxu0
    %v309 = vadd.f32 %v109, %v308
    %310 = vdwg.mxu0
    %311 = vmatpush.msra.mxu0 0.0
    %312 = vmatpush.msra.mxu0 0.0
    %313 = vmatpush.msra.mxu0 0.0
    %314 = vmatpush.msra.mxu0 0.0
    %315 = vmatpush.msra.mxu0 0.0
    %316 = vmatpush.msra.mxu0 0.0
    %317 = vmatpush.msra.mxu0 0.0
    %318 = vmatpush.msra.mxu0 0.0
    %319 = vmatpush.msra.mxu0 0.0
    %320 = vmatpush.msra.mxu0 0.0
    %321 = vmatpush.msra.mxu0 0.0
    %322 = vmatpush.msra.mxu0 0.0
    %323 = vmatpush.msra.mxu0 %v100
    %324 = vmatpush.msra.mxu0 %v92
    %325 = vmatpush.msra.mxu0 %v84
    %326 = vmatpush.msra.mxu0 %v76
    %327 = vmatmul.f32.gmra.mxu0 %v124
    %v328 = vpop.f32.mrf.mxu0
    %v329 = vadd.f32 %v110, %v328
    %330 = vmatmul.f32.gmra.mxu0 %v127
    %v331 = vpop.f32.mrf.mxu0
    %v332 = vadd.f32 %v110, %v331
    %333 = vmatmul.f32.gmra.mxu0 %v130
    %v334 = vpop.f32.mrf.mxu0
    %v335 = vadd.f32 %v110, %v334
    %336 = vmatmul.f32.gmra.mxu0 %v133
    %v337 = vpop.f32.mrf.mxu0
    %v338 = vadd.f32 %v110, %v337
    %339 = vmatmul.f32.gmra.mxu0 %v136
    %v340 = vpop.f32.mrf.mxu0
    %v341 = vadd.f32 %v110, %v340
    %342 = vmatmul.f32.gmra.mxu0 %v139
    %v343 = vpop.f32.mrf.mxu0
    %v344 = vadd.f32 %v110, %v343
    %345 = vmatmul.f32.gmra.mxu0 %v142
    %v346 = vpop.f32.mrf.mxu0
    %v347 = vadd.f32 %v110, %v346
    %348 = vmatmul.f32.gmra.mxu0 %v145
    %v349 = vpop.f32.mrf.mxu0
    %v350 = vadd.f32 %v110, %v349
    %351 = vdwg.mxu0
    %352 = vmatpush.msra.mxu0 0.0
    %353 = vmatpush.msra.mxu0 0.0
    %354 = vmatpush.msra.mxu0 0.0
    %355 = vmatpush.msra.mxu0 0.0
    %356 = vmatpush.msra.mxu0 0.0
    %357 = vmatpush.msra.mxu0 0.0
    %358 = vmatpush.msra.mxu0 0.0
    %359 = vmatpush.msra.mxu0 0.0
    %360 = vmatpush.msra.mxu0 0.0
    %361 = vmatpush.msra.mxu0 0.0
    %362 = vmatpush.msra.mxu0 0.0
    %363 = vmatpush.msra.mxu0 0.0
    %364 = vmatpush.msra.mxu0 %v101
    %365 = vmatpush.msra.mxu0 %v93
    %366 = vmatpush.msra.mxu0 %v85
    %367 = vmatpush.msra.mxu0 %v77
    %368 = vmatmul.f32.gmra.mxu0 %v124
    %v369 = vpop.f32.mrf.mxu0
    %v370 = vadd.f32 %v111, %v369
    %371 = vmatmul.f32.gmra.mxu0 %v127
    %v372 = vpop.f32.mrf.mxu0
    %v373 = vadd.f32 %v111, %v372
    %374 = vmatmul.f32.gmra.mxu0 %v130
    %v375 = vpop.f32.mrf.mxu0
    %v376 = vadd.f32 %v111, %v375
    %377 = vmatmul.f32.gmra.mxu0 %v133
    %v378 = vpop.f32.mrf.mxu0
    %v379 = vadd.f32 %v111, %v378
    %380 = vmatmul.f32.gmra.mxu0 %v136
    %v381 = vpop.f32.mrf.mxu0
    %v382 = vadd.f32 %v111, %v381
    %383 = vmatmul.f32.gmra.mxu0 %v139
    %v384 = vpop.f32.mrf.mxu0
    %v385 = vadd.f32 %v111, %v384
    %386 = vmatmul.f32.gmra.mxu0 %v142
    %v387 = vpop.f32.mrf.mxu0
    %v388 = vadd.f32 %v111, %v387
    %389 = vmatmul.f32.gmra.mxu0 %v145
    %v390 = vpop.f32.mrf.mxu0
    %v391 = vadd.f32 %v111, %v390
    %392 = vdwg.mxu0
    %393 = vmatpush.msra.mxu0 0.0
    %394 = vmatpush.msra.mxu0 0.0
    %395 = vmatpush.msra.mxu0 0.0
    %396 = vmatpush.msra.mxu0 0.0
    %397 = vmatpush.msra.mxu0 0.0
    %398 = vmatpush.msra.mxu0 0.0
    %399 = vmatpush.msra.mxu0 0.0
    %400 = vmatpush.msra.mxu0 0.0
    %401 = vmatpush.msra.mxu0 0.0
    %402 = vmatpush.msra.mxu0 0.0
    %403 = vmatpush.msra.mxu0 0.0
    %404 = vmatpush.msra.mxu0 0.0
    %405 = vmatpush.msra.mxu0 %v102
    %406 = vmatpush.msra.mxu0 %v94
    %407 = vmatpush.msra.mxu0 %v86
    %408 = vmatpush.msra.mxu0 %v78
    %409 = vmatmul.f32.gmra.mxu0 %v124
    %v410 = vpop.f32.mrf.mxu0
    %v411 = vadd.f32 %v112, %v410
    %412 = vmatmul.f32.gmra.mxu0 %v127
    %v413 = vpop.f32.mrf.mxu0
    %v414 = vadd.f32 %v112, %v413
    %415 = vmatmul.f32.gmra.mxu0 %v130
    %v416 = vpop.f32.mrf.mxu0
    %v417 = vadd.f32 %v112, %v416
    %418 = vmatmul.f32.gmra.mxu0 %v133
    %v419 = vpop.f32.mrf.mxu0
    %v420 = vadd.f32 %v112, %v419
    %421 = vmatmul.f32.gmra.mxu0 %v136
    %v422 = vpop.f32.mrf.mxu0
    %v423 = vadd.f32 %v112, %v422
    %424 = vmatmul.f32.gmra.mxu0 %v139
    %v425 = vpop.f32.mrf.mxu0
    %v426 = vadd.f32 %v112, %v425
    %427 = vmatmul.f32.gmra.mxu0 %v142
    %v428 = vpop.f32.mrf.mxu0
    %v429 = vadd.f32 %v112, %v428
    %430 = vmatmul.f32.gmra.mxu0 %v145
    %v431 = vpop.f32.mrf.mxu0
    %v432 = vadd.f32 %v112, %v431
    %433 = vdwg.mxu0
    %434 = vmatpush.msra.mxu0 0.0
    %435 = vmatpush.msra.mxu0 0.0
    %436 = vmatpush.msra.mxu0 0.0
    %437 = vmatpush.msra.mxu0 0.0
    %438 = vmatpush.msra.mxu0 0.0
    %439 = vmatpush.msra.mxu0 0.0
    %440 = vmatpush.msra.mxu0 0.0
    %441 = vmatpush.msra.mxu0 0.0
    %442 = vmatpush.msra.mxu0 0.0
    %443 = vmatpush.msra.mxu0 0.0
    %444 = vmatpush.msra.mxu0 0.0
    %445 = vmatpush.msra.mxu0 0.0
    %446 = vmatpush.msra.mxu0 %v103
    %447 = vmatpush.msra.mxu0 %v95
    %448 = vmatpush.msra.mxu0 %v87
    %449 = vmatpush.msra.mxu0 %v79
    %450 = vmatmul.f32.gmra.mxu0 %v124
    %v451 = vpop.f32.mrf.mxu0
    %v452 = vadd.f32 %v113, %v451
    %453 = vmatmul.f32.gmra.mxu0 %v127
    %v454 = vpop.f32.mrf.mxu0
    %v455 = vadd.f32 %v113, %v454
    %456 = vmatmul.f32.gmra.mxu0 %v130
    %v457 = vpop.f32.mrf.mxu0
    %v458 = vadd.f32 %v113, %v457
    %459 = vmatmul.f32.gmra.mxu0 %v133
    %v460 = vpop.f32.mrf.mxu0
    %v461 = vadd.f32 %v113, %v460
    %462 = vmatmul.f32.gmra.mxu0 %v136
    %v463 = vpop.f32.mrf.mxu0
    %v464 = vadd.f32 %v113, %v463
    %465 = vmatmul.f32.gmra.mxu0 %v139
    %v466 = vpop.f32.mrf.mxu0
    %v467 = vadd.f32 %v113, %v466
    %468 = vmatmul.f32.gmra.mxu0 %v142
    %v469 = vpop.f32.mrf.mxu0
    %v470 = vadd.f32 %v113, %v469
    %471 = vmatmul.f32.gmra.mxu0 %v145
    %v472 = vpop.f32.mrf.mxu0
    %v473 = vadd.f32 %v113, %v472
    %474 = vdwg.mxu0
    %475 = vst [vmem:[#allocation2] sm:$0xff] %v165
    %476 = vst [vmem:[#allocation2 + $0x8] sm:$0xff] %v206
    %477 = vst [vmem:[#allocation2 + $0x10] sm:$0xff] %v247
    %478 = vst [vmem:[#allocation2 + $0x18] sm:$0xff] %v288
    %479 = vst [vmem:[#allocation2 + $0x20] sm:$0xff] %v168
    %480 = vst [vmem:[#allocation2 + $0x28] sm:$0xff] %v209
    %481 = vst [vmem:[#allocation2 + $0x30] sm:$0xff] %v250
    %482 = vst [vmem:[#allocation2 + $0x38] sm:$0xff] %v291
    %483 = vst [vmem:[#allocation2 + $0x40] sm:$0xff] %v171
    %484 = vst [vmem:[#allocation2 + $0x48] sm:$0xff] %v212
    %485 = vst [vmem:[#allocation2 + $0x50] sm:$0xff] %v253
    %486 = vst [vmem:[#allocation2 + $0x58] sm:$0xff] %v294
    %487 = vst [vmem:[#allocation2 + $0x60] sm:$0xff] %v174
    %488 = vst [vmem:[#allocation2 + $0x68] sm:$0xff] %v215
    %489 = vst [vmem:[#allocation2 + $0x70] sm:$0xff] %v256
    %490 = vst [vmem:[#allocation2 + $0x78] sm:$0xff] %v297
    %491 = vst [vmem:[#allocation2 + $0x80] sm:$0xff] %v177
    %492 = vst [vmem:[#allocation2 + $0x88] sm:$0xff] %v218
    %493 = vst [vmem:[#allocation2 + $0x90] sm:$0xff] %v259
    %494 = vst [vmem:[#allocation2 + $0x98] sm:$0xff] %v300
    %495 = vst [vmem:[#allocation2 + $0xa0] sm:$0xff] %v180
    %496 = vst [vmem:[#allocation2 + $0xa8] sm:$0xff] %v221
    %497 = vst [vmem:[#allocation2 + $0xb0] sm:$0xff] %v262
    %498 = vst [vmem:[#allocation2 + $0xb8] sm:$0xff] %v303
    %499 = vst [vmem:[#allocation2 + $0xc0] sm:$0xff] %v183
    %500 = vst [vmem:[#allocation2 + $0xc8] sm:$0xff] %v224
    %501 = vst [vmem:[#allocation2 + $0xd0] sm:$0xff] %v265
    %502 = vst [vmem:[#allocation2 + $0xd8] sm:$0xff] %v306
    %503 = vst [vmem:[#allocation2 + $0xe0] sm:$0xff] %v186
    %504 = vst [vmem:[#allocation2 + $0xe8] sm:$0xff] %v227
    %505 = vst [vmem:[#allocation2 + $0xf0] sm:$0xff] %v268
    %506 = vst [vmem:[#allocation2 + $0xf8] sm:$0xff] %v309
    %507 = vst [vmem:[#allocation3] sm:$0xff] %v329
    %508 = vst [vmem:[#allocation3 + $0x8] sm:$0xff] %v370
    %509 = vst [vmem:[#allocation3 + $0x10] sm:$0xff] %v411
    %510 = vst [vmem:[#allocation3 + $0x18] sm:$0xff] %v452
    %511 = vst [vmem:[#allocation3 + $0x20] sm:$0xff] %v332
    %512 = vst [vmem:[#allocation3 + $0x28] sm:$0xff] %v373
    %513 = vst [vmem:[#allocation3 + $0x30] sm:$0xff] %v414
    %514 = vst [vmem:[#allocation3 + $0x38] sm:$0xff] %v455
    %515 = vst [vmem:[#allocation3 + $0x40] sm:$0xff] %v335
    %516 = vst [vmem:[#allocation3 + $0x48] sm:$0xff] %v376
    %517 = vst [vmem:[#allocation3 + $0x50] sm:$0xff] %v417
    %518 = vst [vmem:[#allocation3 + $0x58] sm:$0xff] %v458
    %519 = vst [vmem:[#allocation3 + $0x60] sm:$0xff] %v338
    %520 = vst [vmem:[#allocation3 + $0x68] sm:$0xff] %v379
    %521 = vst [vmem:[#allocation3 + $0x70] sm:$0xff] %v420
    %522 = vst [vmem:[#allocation3 + $0x78] sm:$0xff] %v461
    %523 = vst [vmem:[#allocation3 + $0x80] sm:$0xff] %v341
    %524 = vst [vmem:[#allocation3 + $0x88] sm:$0xff] %v382
    %525 = vst [vmem:[#allocation3 + $0x90] sm:$0xff] %v423
    %526 = vst [vmem:[#allocation3 + $0x98] sm:$0xff] %v464
    %527 = vst [vmem:[#allocation3 + $0xa0] sm:$0xff] %v344
    %528 = vst [vmem:[#allocation3 + $0xa8] sm:$0xff] %v385
    %529 = vst [vmem:[#allocation3 + $0xb0] sm:$0xff] %v426
    %530 = vst [vmem:[#allocation3 + $0xb8] sm:$0xff] %v467
    %531 = vst [vmem:[#allocation3 + $0xc0] sm:$0xff] %v347
    %532 = vst [vmem:[#allocation3 + $0xc8] sm:$0xff] %v388
    %533 = vst [vmem:[#allocation3 + $0xd0] sm:$0xff] %v429
    %534 = vst [vmem:[#allocation3 + $0xd8] sm:$0xff] %v470
    %535 = vst [vmem:[#allocation3 + $0xe0] sm:$0xff] %v350
    %536 = vst [vmem:[#allocation3 + $0xe8] sm:$0xff] %v391
    %537 = vst [vmem:[#allocation3 + $0xf0] sm:$0xff] %v432
    %538 = vst [vmem:[#allocation3 + $0xf8] sm:$0xff] %v473
    %v539 = vld [vmem:[%s3] sm:$0xff]
    %v540 = vld [vmem:[%s3 + $0x8] sm:$0xff]
    %v541 = vld [vmem:[%s3 + $0x10] sm:$0xff]
    %v542 = vld [vmem:[%s3 + $0x18] sm:$0xff]
    %v543 = vld [vmem:[%s3 + $0x20] sm:$0xff]
    %v544 = vld [vmem:[%s3 + $0x28] sm:$0xff]
    %v545 = vld [vmem:[%s3 + $0x30] sm:$0xff]
    %v546 = vld [vmem:[%s3 + $0x38] sm:$0xff]
    %v547 = vld [vmem:[%s3 + $0x40] sm:$0xff]
    %v548 = vld [vmem:[%s3 + $0x48] sm:$0xff]
    %v549 = vld [vmem:[%s3 + $0x50] sm:$0xff]
    %v550 = vld [vmem:[%s3 + $0x58] sm:$0xff]
    %v551 = vld [vmem:[%s3 + $0x60] sm:$0xff]
    %v552 = vld [vmem:[%s3 + $0x68] sm:$0xff]
    %v553 = vld [vmem:[%s3 + $0x70] sm:$0xff]
    %v554 = vld [vmem:[%s3 + $0x78] sm:$0xff]
    %v555 = vld [vmem:[%s3 + $0x80] sm:$0xff]
    %v556 = vld [vmem:[%s3 + $0x88] sm:$0xff]
    %v557 = vld [vmem:[%s3 + $0x90] sm:$0xff]
    %v558 = vld [vmem:[%s3 + $0x98] sm:$0xff]
    %v559 = vld [vmem:[%s3 + $0xa0] sm:$0xff]
    %v560 = vld [vmem:[%s3 + $0xa8] sm:$0xff]
    %v561 = vld [vmem:[%s3 + $0xb0] sm:$0xff]
    %v562 = vld [vmem:[%s3 + $0xb8] sm:$0xff]
    %v563 = vld [vmem:[%s3 + $0xc0] sm:$0xff]
    %v564 = vld [vmem:[%s3 + $0xc8] sm:$0xff]
    %v565 = vld [vmem:[%s3 + $0xd0] sm:$0xff]
    %v566 = vld [vmem:[%s3 + $0xd8] sm:$0xff]
    %v567 = vld [vmem:[%s3 + $0xe0] sm:$0xff]
    %v568 = vld [vmem:[%s3 + $0xe8] sm:$0xff]
    %v569 = vld [vmem:[%s3 + $0xf0] sm:$0xff]
    %v570 = vld [vmem:[%s3 + $0xf8] sm:$0xff]
    %v571 = vld [vmem:[%s3 + $0x100] sm:$0xff]
    %v572 = vld [vmem:[%s3 + $0x108] sm:$0xff]
    %v573 = vld [vmem:[%s3 + $0x110] sm:$0xff]
    %v574 = vld [vmem:[%s3 + $0x118] sm:$0xff]
    %v575 = vld [vmem:[%s3 + $0x120] sm:$0xff]
    %v576 = vld [vmem:[%s3 + $0x128] sm:$0xff]
    %v577 = vld [vmem:[%s3 + $0x130] sm:$0xff]
    %v578 = vld [vmem:[%s3 + $0x138] sm:$0xff]
    %v579 = vld [vmem:[%s3 + $0x140] sm:$0xff]
    %v580 = vld [vmem:[%s3 + $0x148] sm:$0xff]
    %v581 = vld [vmem:[%s3 + $0x150] sm:$0xff]
    %v582 = vld [vmem:[%s3 + $0x158] sm:$0xff]
    %v583 = vld [vmem:[%s3 + $0x160] sm:$0xff]
    %v584 = vld [vmem:[%s3 + $0x168] sm:$0xff]
    %v585 = vld [vmem:[%s3 + $0x170] sm:$0xff]
    %v586 = vld [vmem:[%s3 + $0x178] sm:$0xff]
    %v587 = vld [vmem:[%s3 + $0x180] sm:$0xff]
    %v588 = vld [vmem:[%s3 + $0x188] sm:$0xff]
    %v589 = vld [vmem:[%s3 + $0x190] sm:$0xff]
    %v590 = vld [vmem:[%s3 + $0x198] sm:$0xff]
    %v591 = vld [vmem:[%s3 + $0x1a0] sm:$0xff]
    %v592 = vld [vmem:[%s3 + $0x1a8] sm:$0xff]
    %v593 = vld [vmem:[%s3 + $0x1b0] sm:$0xff]
    %v594 = vld [vmem:[%s3 + $0x1b8] sm:$0xff]
    %v595 = vld [vmem:[%s3 + $0x1c0] sm:$0xff]
    %v596 = vld [vmem:[%s3 + $0x1c8] sm:$0xff]
    %v597 = vld [vmem:[%s3 + $0x1d0] sm:$0xff]
    %v598 = vld [vmem:[%s3 + $0x1d8] sm:$0xff]
    %v599 = vld [vmem:[%s3 + $0x1e0] sm:$0xff]
    %v600 = vld [vmem:[%s3 + $0x1e8] sm:$0xff]
    %v601 = vld [vmem:[%s3 + $0x1f0] sm:$0xff]
    %v602 = vld [vmem:[%s3 + $0x1f8] sm:$0xff]
    %v603 = vld [vmem:[#allocation6] sm:$0xff]
    %v604 = vld [vmem:[#allocation6 + $0x8] sm:$0xff]
    %v605 = vld [vmem:[#allocation6 + $0x10] sm:$0xff]
    %v606 = vld [vmem:[#allocation6 + $0x18] sm:$0xff]
    %v607 = vld [vmem:[#allocation6 + $0x20] sm:$0xff]
    %v608 = vld [vmem:[#allocation6 + $0x28] sm:$0xff]
    %v609 = vld [vmem:[#allocation6 + $0x30] sm:$0xff]
    %v610 = vld [vmem:[#allocation6 + $0x38] sm:$0xff]
    %v611 = vld [vmem:[#allocation6 + $0x40] sm:$0xff]
    %v612 = vld [vmem:[#allocation6 + $0x48] sm:$0xff]
    %v613 = vld [vmem:[#allocation6 + $0x50] sm:$0xff]
    %v614 = vld [vmem:[#allocation6 + $0x58] sm:$0xff]
    %v615 = vld [vmem:[#allocation6 + $0x60] sm:$0xff]
    %v616 = vld [vmem:[#allocation6 + $0x68] sm:$0xff]
    %v617 = vld [vmem:[#allocation6 + $0x70] sm:$0xff]
    %v618 = vld [vmem:[#allocation6 + $0x78] sm:$0xff]
    %v619 = vld [vmem:[#allocation6 + $0x80] sm:$0xff]
    %v620 = vld [vmem:[#allocation6 + $0x88] sm:$0xff]
    %v621 = vld [vmem:[#allocation6 + $0x90] sm:$0xff]
    %v622 = vld [vmem:[#allocation6 + $0x98] sm:$0xff]
    %v623 = vld [vmem:[#allocation6 + $0xa0] sm:$0xff]
    %v624 = vld [vmem:[#allocation6 + $0xa8] sm:$0xff]
    %v625 = vld [vmem:[#allocation6 + $0xb0] sm:$0xff]
    %v626 = vld [vmem:[#allocation6 + $0xb8] sm:$0xff]
    %v627 = vld [vmem:[#allocation6 + $0xc0] sm:$0xff]
    %v628 = vld [vmem:[#allocation6 + $0xc8] sm:$0xff]
    %v629 = vld [vmem:[#allocation6 + $0xd0] sm:$0xff]
    %v630 = vld [vmem:[#allocation6 + $0xd8] sm:$0xff]
    %v631 = vld [vmem:[#allocation6 + $0xe0] sm:$0xff]
    %v632 = vld [vmem:[#allocation6 + $0xe8] sm:$0xff]
    %v633 = vld [vmem:[#allocation6 + $0xf0] sm:$0xff]
    %v634 = vld [vmem:[#allocation6 + $0xf8] sm:$0xff]
    %v635 = vld [vmem:[#allocation6 + $0x100] sm:$0xff]
    %v636 = vld [vmem:[#allocation6 + $0x108] sm:$0xff]
    %v637 = vld [vmem:[#allocation6 + $0x110] sm:$0xff]
    %v638 = vld [vmem:[#allocation6 + $0x118] sm:$0xff]
    %v639 = vld [vmem:[#allocation6 + $0x120] sm:$0xff]
    %v640 = vld [vmem:[#allocation6 + $0x128] sm:$0xff]
    %v641 = vld [vmem:[#allocation6 + $0x130] sm:$0xff]
    %v642 = vld [vmem:[#allocation6 + $0x138] sm:$0xff]
    %v643 = vld [vmem:[#allocation6 + $0x140] sm:$0xff]
    %v644 = vld [vmem:[#allocation6 + $0x148] sm:$0xff]
    %v645 = vld [vmem:[#allocation6 + $0x150] sm:$0xff]
    %v646 = vld [vmem:[#allocation6 + $0x158] sm:$0xff]
    %v647 = vld [vmem:[#allocation6 + $0x160] sm:$0xff]
    %v648 = vld [vmem:[#allocation6 + $0x168] sm:$0xff]
    %v649 = vld [vmem:[#allocation6 + $0x170] sm:$0xff]
    %v650 = vld [vmem:[#allocation6 + $0x178] sm:$0xff]
    %v651 = vld [vmem:[#allocation6 + $0x180] sm:$0xff]
    %v652 = vld [vmem:[#allocation6 + $0x188] sm:$0xff]
    %v653 = vld [vmem:[#allocation6 + $0x190] sm:$0xff]
    %v654 = vld [vmem:[#allocation6 + $0x198] sm:$0xff]
    %v655 = vld [vmem:[#allocation6 + $0x1a0] sm:$0xff]
    %v656 = vld [vmem:[#allocation6 + $0x1a8] sm:$0xff]
    %v657 = vld [vmem:[#allocation6 + $0x1b0] sm:$0xff]
    %v658 = vld [vmem:[#allocation6 + $0x1b8] sm:$0xff]
    %v659 = vld [vmem:[#allocation6 + $0x1c0] sm:$0xff]
    %v660 = vld [vmem:[#allocation6 + $0x1c8] sm:$0xff]
    %v661 = vld [vmem:[#allocation6 + $0x1d0] sm:$0xff]
    %v662 = vld [vmem:[#allocation6 + $0x1d8] sm:$0xff]
    %v663 = vld [vmem:[#allocation6 + $0x1e0] sm:$0xff]
    %v664 = vld [vmem:[#allocation6 + $0x1e8] sm:$0xff]
    %v665 = vld [vmem:[#allocation6 + $0x1f0] sm:$0xff]
    %v666 = vld [vmem:[#allocation6 + $0x1f8] sm:$0xff]
    %v667 = vld [vmem:[#allocation2] sm:$0xff]
    %v668 = vld [vmem:[#allocation2 + $0x8] sm:$0xff]
    %v669 = vld [vmem:[#allocation2 + $0x10] sm:$0xff]
    %v670 = vld [vmem:[#allocation2 + $0x18] sm:$0xff]
    %671 = vmatpush.msra.mxu0 %v599
    %672 = vmatpush.msra.mxu0 %v595
    %673 = vmatpush.msra.mxu0 %v591
    %674 = vmatpush.msra.mxu0 %v587
    %675 = vmatpush.msra.mxu0 %v583
    %676 = vmatpush.msra.mxu0 %v579
    %677 = vmatpush.msra.mxu0 %v575
    %678 = vmatpush.msra.mxu0 %v571
    %679 = vmatpush.msra.mxu0 %v567
    %680 = vmatpush.msra.mxu0 %v563
    %681 = vmatpush.msra.mxu0 %v559
    %682 = vmatpush.msra.mxu0 %v555
    %683 = vmatpush.msra.mxu0 %v551
    %684 = vmatpush.msra.mxu0 %v547
    %685 = vmatpush.msra.mxu0 %v543
    %686 = vmatpush.msra.mxu0 %v539
    %687 = vmatmul.f32.gmra.mxu0 0.0
    %v688 = vpop.f32.mrf.mxu0
    %v689 = vadd.f32 0.0, %v688
    %690 = vdwg.mxu0
    %691 = vmatpush.msra.mxu0 %v600
    %692 = vmatpush.msra.mxu0 %v596
    %693 = vmatpush.msra.mxu0 %v592
    %694 = vmatpush.msra.mxu0 %v588
    %695 = vmatpush.msra.mxu0 %v584
    %696 = vmatpush.msra.mxu0 %v580
    %697 = vmatpush.msra.mxu0 %v576
    %698 = vmatpush.msra.mxu0 %v572
    %699 = vmatpush.msra.mxu0 %v568
    %700 = vmatpush.msra.mxu0 %v564
    %701 = vmatpush.msra.mxu0 %v560
    %702 = vmatpush.msra.mxu0 %v556
    %703 = vmatpush.msra.mxu0 %v552
    %704 = vmatpush.msra.mxu0 %v548
    %705 = vmatpush.msra.mxu0 %v544
    %706 = vmatpush.msra.mxu0 %v540
    %707 = vmatmul.f32.gmra.mxu0 0.0
    %v708 = vpop.f32.mrf.mxu0
    %v709 = vadd.f32 0.0, %v708
    %710 = vdwg.mxu0
    %711 = vmatpush.msra.mxu0 %v601
    %712 = vmatpush.msra.mxu0 %v597
    %713 = vmatpush.msra.mxu0 %v593
    %714 = vmatpush.msra.mxu0 %v589
    %715 = vmatpush.msra.mxu0 %v585
    %716 = vmatpush.msra.mxu0 %v581
    %717 = vmatpush.msra.mxu0 %v577
    %718 = vmatpush.msra.mxu0 %v573
    %719 = vmatpush.msra.mxu0 %v569
    %720 = vmatpush.msra.mxu0 %v565
    %721 = vmatpush.msra.mxu0 %v561
    %722 = vmatpush.msra.mxu0 %v557
    %723 = vmatpush.msra.mxu0 %v553
    %724 = vmatpush.msra.mxu0 %v549
    %725 = vmatpush.msra.mxu0 %v545
    %726 = vmatpush.msra.mxu0 %v541
    %727 = vmatmul.f32.gmra.mxu0 0.0
    %v728 = vpop.f32.mrf.mxu0
    %v729 = vadd.f32 0.0, %v728
    %730 = vdwg.mxu0
    %731 = vmatpush.msra.mxu0 %v602
    %732 = vmatpush.msra.mxu0 %v598
    %733 = vmatpush.msra.mxu0 %v594
    %734 = vmatpush.msra.mxu0 %v590
    %735 = vmatpush.msra.mxu0 %v586
    %736 = vmatpush.msra.mxu0 %v582
    %737 = vmatpush.msra.mxu0 %v578
    %738 = vmatpush.msra.mxu0 %v574
    %739 = vmatpush.msra.mxu0 %v570
    %740 = vmatpush.msra.mxu0 %v566
    %741 = vmatpush.msra.mxu0 %v562
    %742 = vmatpush.msra.mxu0 %v558
    %743 = vmatpush.msra.mxu0 %v554
    %744 = vmatpush.msra.mxu0 %v550
    %745 = vmatpush.msra.mxu0 %v546
    %746 = vmatpush.msra.mxu0 %v542
    %747 = vmatmul.f32.gmra.mxu0 0.0
    %v748 = vpop.f32.mrf.mxu0
    %v749 = vadd.f32 0.0, %v748
    %750 = vdwg.mxu0
    %v751 = vadd.f32 %v667, %v689
    %v752 = vadd.f32 %v668, %v709
    %v753 = vadd.f32 %v669, %v729
    %v754 = vadd.f32 %v670, %v749
    %s755 = scalar_lea.vmem [#allocation3], 224
    %v756 = vld [vmem:[%s755] sm:$0xff]
    %v757 = vld [vmem:[%s755 + $0x8] sm:$0xff]
    %v758 = vld [vmem:[%s755 + $0x10] sm:$0xff]
    %v759 = vld [vmem:[%s755 + $0x18] sm:$0xff]
    %760 = vmatpush.msra.mxu0 %v663
    %761 = vmatpush.msra.mxu0 %v659
    %762 = vmatpush.msra.mxu0 %v655
    %763 = vmatpush.msra.mxu0 %v651
    %764 = vmatpush.msra.mxu0 %v647
    %765 = vmatpush.msra.mxu0 %v643
    %766 = vmatpush.msra.mxu0 %v639
    %767 = vmatpush.msra.mxu0 %v635
    %768 = vmatpush.msra.mxu0 %v631
    %769 = vmatpush.msra.mxu0 %v627
    %770 = vmatpush.msra.mxu0 %v623
    %771 = vmatpush.msra.mxu0 %v619
    %772 = vmatpush.msra.mxu0 %v615
    %773 = vmatpush.msra.mxu0 %v611
    %774 = vmatpush.msra.mxu0 %v607
    %775 = vmatpush.msra.mxu0 %v603
    %776 = vmatmul.f32.gmra.mxu0 0.0
    %v777 = vpop.f32.mrf.mxu0
    %v778 = vadd.f32 0.0, %v777
    %779 = vdwg.mxu0
    %780 = vmatpush.msra.mxu0 %v664
    %781 = vmatpush.msra.mxu0 %v660
    %782 = vmatpush.msra.mxu0 %v656
    %783 = vmatpush.msra.mxu0 %v652
    %784 = vmatpush.msra.mxu0 %v648
    %785 = vmatpush.msra.mxu0 %v644
    %786 = vmatpush.msra.mxu0 %v640
    %787 = vmatpush.msra.mxu0 %v636
    %788 = vmatpush.msra.mxu0 %v632
    %789 = vmatpush.msra.mxu0 %v628
    %790 = vmatpush.msra.mxu0 %v624
    %791 = vmatpush.msra.mxu0 %v620
    %792 = vmatpush.msra.mxu0 %v616
    %793 = vmatpush.msra.mxu0 %v612
    %794 = vmatpush.msra.mxu0 %v608
    %795 = vmatpush.msra.mxu0 %v604
    %796 = vmatmul.f32.gmra.mxu0 0.0
    %v797 = vpop.f32.mrf.mxu0
    %v798 = vadd.f32 0.0, %v797
    %799 = vdwg.mxu0
    %800 = vmatpush.msra.mxu0 %v665
    %801 = vmatpush.msra.mxu0 %v661
    %802 = vmatpush.msra.mxu0 %v657
    %803 = vmatpush.msra.mxu0 %v653
    %804 = vmatpush.msra.mxu0 %v649
    %805 = vmatpush.msra.mxu0 %v645
    %806 = vmatpush.msra.mxu0 %v641
    %807 = vmatpush.msra.mxu0 %v637
    %808 = vmatpush.msra.mxu0 %v633
    %809 = vmatpush.msra.mxu0 %v629
    %810 = vmatpush.msra.mxu0 %v625
    %811 = vmatpush.msra.mxu0 %v621
    %812 = vmatpush.msra.mxu0 %v617
    %813 = vmatpush.msra.mxu0 %v613
    %814 = vmatpush.msra.mxu0 %v609
    %815 = vmatpush.msra.mxu0 %v605
    %816 = vmatmul.f32.gmra.mxu0 0.0
    %v817 = vpop.f32.mrf.mxu0
    %v818 = vadd.f32 0.0, %v817
    %819 = vdwg.mxu0
    %820 = vmatpush.msra.mxu0 %v666
    %821 = vmatpush.msra.mxu0 %v662
    %822 = vmatpush.msra.mxu0 %v658
    %823 = vmatpush.msra.mxu0 %v654
    %824 = vmatpush.msra.mxu0 %v650
    %825 = vmatpush.msra.mxu0 %v646
    %826 = vmatpush.msra.mxu0 %v642
    %827 = vmatpush.msra.mxu0 %v638
    %828 = vmatpush.msra.mxu0 %v634
    %829 = vmatpush.msra.mxu0 %v630
    %830 = vmatpush.msra.mxu0 %v626
    %831 = vmatpush.msra.mxu0 %v622
    %832 = vmatpush.msra.mxu0 %v618
    %833 = vmatpush.msra.mxu0 %v614
    %834 = vmatpush.msra.mxu0 %v610
    %835 = vmatpush.msra.mxu0 %v606
    %836 = vmatmul.f32.gmra.mxu0 0.0
    %v837 = vpop.f32.mrf.mxu0
    %v838 = vadd.f32 0.0, %v837
    %839 = vdwg.mxu0
    %v840 = vadd.f32 %v756, %v778
    %v841 = vadd.f32 %v757, %v798
    %v842 = vadd.f32 %v758, %v818
    %v843 = vadd.f32 %v759, %v838
    %v844 = vxor.u32 %v751, 2147483648
    %v845 = vmul.f32 %v844, 1.442695
    %v846 = vpow.pop %v845
    %v847 = vadd.f32 %v846, 1.0
    %v848 = vrcp.pop %v847
    %v849 = vmul.f32 %v847, %v848
    %v850 = vsub.f32 1.0, %v849
    %v851 = vmul.f32 %v848, %v850
    %v852 = vadd.f32 %v848, %v851
    %vm853 = vweird.f32 %v847
    %vm854 = vweird.f32 %v848
    %vm855 = vmor %vm853, %vm854
    %v856 = vsel %vm855, %v848, %v852
    %v857 = vand.u32 2147483647, %v847
    %vm858 = vcmp.eq.f32.partialorder %v857, 8.507059e+37
    %v859 = vand.u32 %v847, 2147483648
    %v860 = vor.u32 1.1754944e-38, %v859
    %v861 = vsel %vm858, %v860, %v856
    %v862 = vmul.f32 1.0, %v861
    %v863 = vxor.u32 %v752, 2147483648
    %v864 = vmul.f32 %v863, 1.442695
    %v865 = vpow.pop %v864
    %v866 = vadd.f32 %v865, 1.0
    %v867 = vrcp.pop %v866
    %v868 = vmul.f32 %v866, %v867
    %v869 = vsub.f32 1.0, %v868
    %v870 = vmul.f32 %v867, %v869
    %v871 = vadd.f32 %v867, %v870
    %vm872 = vweird.f32 %v866
    %vm873 = vweird.f32 %v867
    %vm874 = vmor %vm872, %vm873
    %v875 = vsel %vm874, %v867, %v871
    %v876 = vand.u32 2147483647, %v866
    %vm877 = vcmp.eq.f32.partialorder %v876, 8.507059e+37
    %v878 = vand.u32 %v866, 2147483648
    %v879 = vor.u32 1.1754944e-38, %v878
    %v880 = vsel %vm877, %v879, %v875
    %v881 = vmul.f32 1.0, %v880
    %v882 = vtanh.pop %v753
    %v883 = vxor.u32 %v754, 2147483648
    %v884 = vmul.f32 %v883, 1.442695
    %v885 = vpow.pop %v884
    %v886 = vadd.f32 %v885, 1.0
    %v887 = vrcp.pop %v886
    %v888 = vmul.f32 %v886, %v887
    %v889 = vsub.f32 1.0, %v888
    %v890 = vmul.f32 %v887, %v889
    %v891 = vadd.f32 %v887, %v890
    %vm892 = vweird.f32 %v886
    %vm893 = vweird.f32 %v887
    %vm894 = vmor %vm892, %vm893
    %v895 = vsel %vm894, %v887, %v891
    %v896 = vand.u32 2147483647, %v886
    %vm897 = vcmp.eq.f32.partialorder %v896, 8.507059e+37
    %v898 = vand.u32 %v886, 2147483648
    %v899 = vor.u32 1.1754944e-38, %v898
    %v900 = vsel %vm897, %v899, %v895
    %v901 = vmul.f32 1.0, %v900
    %v902 = vmul.f32 %v881, 0.0
    %v903 = vmul.f32 %v862, %v882
    %v904 = vadd.f32 %v902, %v903
    %v905 = vtanh.pop %v904
    %v906 = vmul.f32 %v901, %v905
    %v907 = vxor.u32 %v840, 2147483648
    %v908 = vmul.f32 %v907, 1.442695
    %v909 = vpow.pop %v908
    %v910 = vadd.f32 %v909, 1.0
    %v911 = vrcp.pop %v910
    %v912 = vmul.f32 %v910, %v911
    %v913 = vsub.f32 1.0, %v912
    %v914 = vmul.f32 %v911, %v913
    %v915 = vadd.f32 %v911, %v914
    %vm916 = vweird.f32 %v910
    %vm917 = vweird.f32 %v911
    %vm918 = vmor %vm916, %vm917
    %v919 = vsel %vm918, %v911, %v915
    %v920 = vand.u32 2147483647, %v910
    %vm921 = vcmp.eq.f32.partialorder %v920, 8.507059e+37
    %v922 = vand.u32 %v910, 2147483648
    %v923 = vor.u32 1.1754944e-38, %v922
    %v924 = vsel %vm921, %v923, %v919
    %v925 = vmul.f32 1.0, %v924
    %v926 = vxor.u32 %v841, 2147483648
    %v927 = vmul.f32 %v926, 1.442695
    %v928 = vpow.pop %v927
    %v929 = vadd.f32 %v928, 1.0
    %v930 = vrcp.pop %v929
    %v931 = vmul.f32 %v929, %v930
    %v932 = vsub.f32 1.0, %v931
    %v933 = vmul.f32 %v930, %v932
    %v934 = vadd.f32 %v930, %v933
    %vm935 = vweird.f32 %v929
    %vm936 = vweird.f32 %v930
    %vm937 = vmor %vm935, %vm936
    %v938 = vsel %vm937, %v930, %v934
    %v939 = vand.u32 2147483647, %v929
    %vm940 = vcmp.eq.f32.partialorder %v939, 8.507059e+37
    %v941 = vand.u32 %v929, 2147483648
    %v942 = vor.u32 1.1754944e-38, %v941
    %v943 = vsel %vm940, %v942, %v938
    %v944 = vmul.f32 1.0, %v943
    %v945 = vtanh.pop %v842
    %v946 = vxor.u32 %v843, 2147483648
    %v947 = vmul.f32 %v946, 1.442695
    %v948 = vpow.pop %v947
    %v949 = vadd.f32 %v948, 1.0
    %v950 = vrcp.pop %v949
    %v951 = vmul.f32 %v949, %v950
    %v952 = vsub.f32 1.0, %v951
    %v953 = vmul.f32 %v950, %v952
    %v954 = vadd.f32 %v950, %v953
    %vm955 = vweird.f32 %v949
    %vm956 = vweird.f32 %v950
    %vm957 = vmor %vm955, %vm956
    %v958 = vsel %vm957, %v950, %v954
    %v959 = vand.u32 2147483647, %v949
    %vm960 = vcmp.eq.f32.partialorder %v959, 8.507059e+37
    %v961 = vand.u32 %v949, 2147483648
    %v962 = vor.u32 1.1754944e-38, %v961
    %v963 = vsel %vm960, %v962, %v958
    %v964 = vmul.f32 1.0, %v963
    %v965 = vmul.f32 %v944, 0.0
    %v966 = vmul.f32 %v925, %v945
    %v967 = vadd.f32 %v965, %v966
    %v968 = vtanh.pop %v967
    %v969 = vmul.f32 %v964, %v968
    %v970 = vadd.f32 %v906, 0.0
    %v971 = vadd.f32 %v969, 0.0
    %s972 = scalar_lea.vmem [#allocation2], 32
    %v973 = vld [vmem:[%s972] sm:$0xff]
    %v974 = vld [vmem:[%s972 + $0x8] sm:$0xff]
    %v975 = vld [vmem:[%s972 + $0x10] sm:$0xff]
    %v976 = vld [vmem:[%s972 + $0x18] sm:$0xff]
    %977 = vmatpush.msra.mxu0 %v599
    %978 = vmatpush.msra.mxu0 %v595
    %979 = vmatpush.msra.mxu0 %v591
    %980 = vmatpush.msra.mxu0 %v587
    %981 = vmatpush.msra.mxu0 %v583
    %982 = vmatpush.msra.mxu0 %v579
    %983 = vmatpush.msra.mxu0 %v575
    %984 = vmatpush.msra.mxu0 %v571
    %985 = vmatpush.msra.mxu0 %v567
    %986 = vmatpush.msra.mxu0 %v563
    %987 = vmatpush.msra.mxu0 %v559
    %988 = vmatpush.msra.mxu0 %v555
    %989 = vmatpush.msra.mxu0 %v551
    %990 = vmatpush.msra.mxu0 %v547
    %991 = vmatpush.msra.mxu0 %v543
    %992 = vmatpush.msra.mxu0 %v539
    %993 = vmatmul.f32.gmra.mxu0 %v906
    %v994 = vpop.f32.mrf.mxu0
    %v995 = vadd.f32 0.0, %v994
    %996 = vdwg.mxu0
    %997 = vmatpush.msra.mxu0 %v600
    %998 = vmatpush.msra.mxu0 %v596
    %999 = vmatpush.msra.mxu0 %v592
    %1000 = vmatpush.msra.mxu0 %v588
    %1001 = vmatpush.msra.mxu0 %v584
    %1002 = vmatpush.msra.mxu0 %v580
    %1003 = vmatpush.msra.mxu0 %v576
    %1004 = vmatpush.msra.mxu0 %v572
    %1005 = vmatpush.msra.mxu0 %v568
    %1006 = vmatpush.msra.mxu0 %v564
    %1007 = vmatpush.msra.mxu0 %v560
    %1008 = vmatpush.msra.mxu0 %v556
    %1009 = vmatpush.msra.mxu0 %v552
    %1010 = vmatpush.msra.mxu0 %v548
    %1011 = vmatpush.msra.mxu0 %v544
    %1012 = vmatpush.msra.mxu0 %v540
    %1013 = vmatmul.f32.gmra.mxu0 %v906
    %v1014 = vpop.f32.mrf.mxu0
    %v1015 = vadd.f32 0.0, %v1014
    %1016 = vdwg.mxu0
    %1017 = vmatpush.msra.mxu0 %v601
    %1018 = vmatpush.msra.mxu0 %v597
    %1019 = vmatpush.msra.mxu0 %v593
    %1020 = vmatpush.msra.mxu0 %v589
    %1021 = vmatpush.msra.mxu0 %v585
    %1022 = vmatpush.msra.mxu0 %v581
    %1023 = vmatpush.msra.mxu0 %v577
    %1024 = vmatpush.msra.mxu0 %v573
    %1025 = vmatpush.msra.mxu0 %v569
    %1026 = vmatpush.msra.mxu0 %v565
    %1027 = vmatpush.msra.mxu0 %v561
    %1028 = vmatpush.msra.mxu0 %v557
    %1029 = vmatpush.msra.mxu0 %v553
    %1030 = vmatpush.msra.mxu0 %v549
    %1031 = vmatpush.msra.mxu0 %v545
    %1032 = vmatpush.msra.mxu0 %v541
    %1033 = vmatmul.f32.gmra.mxu0 %v906
    %v1034 = vpop.f32.mrf.mxu0
    %v1035 = vadd.f32 0.0, %v1034
    %1036 = vdwg.mxu0
    %1037 = vmatpush.msra.mxu0 %v602
    %1038 = vmatpush.msra.mxu0 %v598
    %1039 = vmatpush.msra.mxu0 %v594
    %1040 = vmatpush.msra.mxu0 %v590
    %1041 = vmatpush.msra.mxu0 %v586
    %1042 = vmatpush.msra.mxu0 %v582
    %1043 = vmatpush.msra.mxu0 %v578
    %1044 = vmatpush.msra.mxu0 %v574
    %1045 = vmatpush.msra.mxu0 %v570
    %1046 = vmatpush.msra.mxu0 %v566
    %1047 = vmatpush.msra.mxu0 %v562
    %1048 = vmatpush.msra.mxu0 %v558
    %1049 = vmatpush.msra.mxu0 %v554
    %1050 = vmatpush.msra.mxu0 %v550
    %1051 = vmatpush.msra.mxu0 %v546
    %1052 = vmatpush.msra.mxu0 %v542
    %1053 = vmatmul.f32.gmra.mxu0 %v906
    %v1054 = vpop.f32.mrf.mxu0
    %v1055 = vadd.f32 0.0, %v1054
    %1056 = vdwg.mxu0
    %v1057 = vadd.f32 %v973, %v995
    %v1058 = vadd.f32 %v974, %v1015
    %v1059 = vadd.f32 %v975, %v1035
    %v1060 = vadd.f32 %v976, %v1055
    %s1061 = scalar_lea.vmem [#allocation3], 192
    %v1062 = vld [vmem:[%s1061] sm:$0xff]
    %v1063 = vld [vmem:[%s1061 + $0x8] sm:$0xff]
    %v1064 = vld [vmem:[%s1061 + $0x10] sm:$0xff]
    %v1065 = vld [vmem:[%s1061 + $0x18] sm:$0xff]
    %1066 = vmatpush.msra.mxu0 %v663
    %1067 = vmatpush.msra.mxu0 %v659
    %1068 = vmatpush.msra.mxu0 %v655
    %1069 = vmatpush.msra.mxu0 %v651
    %1070 = vmatpush.msra.mxu0 %v647
    %1071 = vmatpush.msra.mxu0 %v643
    %1072 = vmatpush.msra.mxu0 %v639
    %1073 = vmatpush.msra.mxu0 %v635
    %1074 = vmatpush.msra.mxu0 %v631
    %1075 = vmatpush.msra.mxu0 %v627
    %1076 = vmatpush.msra.mxu0 %v623
    %1077 = vmatpush.msra.mxu0 %v619
    %1078 = vmatpush.msra.mxu0 %v615
    %1079 = vmatpush.msra.mxu0 %v611
    %1080 = vmatpush.msra.mxu0 %v607
    %1081 = vmatpush.msra.mxu0 %v603
    %1082 = vmatmul.f32.gmra.mxu0 %v969
    %v1083 = vpop.f32.mrf.mxu0
    %v1084 = vadd.f32 0.0, %v1083
    %1085 = vdwg.mxu0
    %1086 = vmatpush.msra.mxu0 %v664
    %1087 = vmatpush.msra.mxu0 %v660
    %1088 = vmatpush.msra.mxu0 %v656
    %1089 = vmatpush.msra.mxu0 %v652
    %1090 = vmatpush.msra.mxu0 %v648
    %1091 = vmatpush.msra.mxu0 %v644
    %1092 = vmatpush.msra.mxu0 %v640
    %1093 = vmatpush.msra.mxu0 %v636
    %1094 = vmatpush.msra.mxu0 %v632
    %1095 = vmatpush.msra.mxu0 %v628
    %1096 = vmatpush.msra.mxu0 %v624
    %1097 = vmatpush.msra.mxu0 %v620
    %1098 = vmatpush.msra.mxu0 %v616
    %1099 = vmatpush.msra.mxu0 %v612
    %1100 = vmatpush.msra.mxu0 %v608
    %1101 = vmatpush.msra.mxu0 %v604
    %1102 = vmatmul.f32.gmra.mxu0 %v969
    %v1103 = vpop.f32.mrf.mxu0
    %v1104 = vadd.f32 0.0, %v1103
    %1105 = vdwg.mxu0
    %1106 = vmatpush.msra.mxu0 %v665
    %1107 = vmatpush.msra.mxu0 %v661
    %1108 = vmatpush.msra.mxu0 %v657
    %1109 = vmatpush.msra.mxu0 %v653
    %1110 = vmatpush.msra.mxu0 %v649
    %1111 = vmatpush.msra.mxu0 %v645
    %1112 = vmatpush.msra.mxu0 %v641
    %1113 = vmatpush.msra.mxu0 %v637
    %1114 = vmatpush.msra.mxu0 %v633
    %1115 = vmatpush.msra.mxu0 %v629
    %1116 = vmatpush.msra.mxu0 %v625
    %1117 = vmatpush.msra.mxu0 %v621
    %1118 = vmatpush.msra.mxu0 %v617
    %1119 = vmatpush.msra.mxu0 %v613
    %1120 = vmatpush.msra.mxu0 %v609
    %1121 = vmatpush.msra.mxu0 %v605
    %1122 = vmatmul.f32.gmra.mxu0 %v969
    %v1123 = vpop.f32.mrf.mxu0
    %v1124 = vadd.f32 0.0, %v1123
    %1125 = vdwg.mxu0
    %1126 = vmatpush.msra.mxu0 %v666
    %1127 = vmatpush.msra.mxu0 %v662
    %1128 = vmatpush.msra.mxu0 %v658
    %1129 = vmatpush.msra.mxu0 %v654
    %1130 = vmatpush.msra.mxu0 %v650
    %1131 = vmatpush.msra.mxu0 %v646
    %1132 = vmatpush.msra.mxu0 %v642
    %1133 = vmatpush.msra.mxu0 %v638
    %1134 = vmatpush.msra.mxu0 %v634
    %1135 = vmatpush.msra.mxu0 %v630
    %1136 = vmatpush.msra.mxu0 %v626
    %1137 = vmatpush.msra.mxu0 %v622
    %1138 = vmatpush.msra.mxu0 %v618
    %1139 = vmatpush.msra.mxu0 %v614
    %1140 = vmatpush.msra.mxu0 %v610
    %1141 = vmatpush.msra.mxu0 %v606
    %1142 = vmatmul.f32.gmra.mxu0 %v969
    %v1143 = vpop.f32.mrf.mxu0
    %v1144 = vadd.f32 0.0, %v1143
    %1145 = vdwg.mxu0
    %v1146 = vadd.f32 %v1062, %v1084
    %v1147 = vadd.f32 %v1063, %v1104
    %v1148 = vadd.f32 %v1064, %v1124
    %v1149 = vadd.f32 %v1065, %v1144
    %v1150 = vxor.u32 %v1057, 2147483648
    %v1151 = vmul.f32 %v1150, 1.442695
    %v1152 = vpow.pop %v1151
    %v1153 = vadd.f32 %v1152, 1.0
    %v1154 = vrcp.pop %v1153
    %v1155 = vmul.f32 %v1153, %v1154
    %v1156 = vsub.f32 1.0, %v1155
    %v1157 = vmul.f32 %v1154, %v1156
    %v1158 = vadd.f32 %v1154, %v1157
    %vm1159 = vweird.f32 %v1153
    %vm1160 = vweird.f32 %v1154
    %vm1161 = vmor %vm1159, %vm1160
    %v1162 = vsel %vm1161, %v1154, %v1158
    %v1163 = vand.u32 2147483647, %v1153
    %vm1164 = vcmp.eq.f32.partialorder %v1163, 8.507059e+37
    %v1165 = vand.u32 %v1153, 2147483648
    %v1166 = vor.u32 1.1754944e-38, %v1165
    %v1167 = vsel %vm1164, %v1166, %v1162
    %v1168 = vmul.f32 1.0, %v1167
    %v1169 = vxor.u32 %v1058, 2147483648
    %v1170 = vmul.f32 %v1169, 1.442695
    %v1171 = vpow.pop %v1170
    %v1172 = vadd.f32 %v1171, 1.0
    %v1173 = vrcp.pop %v1172
    %v1174 = vmul.f32 %v1172, %v1173
    %v1175 = vsub.f32 1.0, %v1174
    %v1176 = vmul.f32 %v1173, %v1175
    %v1177 = vadd.f32 %v1173, %v1176
    %vm1178 = vweird.f32 %v1172
    %vm1179 = vweird.f32 %v1173
    %vm1180 = vmor %vm1178, %vm1179
    %v1181 = vsel %vm1180, %v1173, %v1177
    %v1182 = vand.u32 2147483647, %v1172
    %vm1183 = vcmp.eq.f32.partialorder %v1182, 8.507059e+37
    %v1184 = vand.u32 %v1172, 2147483648
    %v1185 = vor.u32 1.1754944e-38, %v1184
    %v1186 = vsel %vm1183, %v1185, %v1181
    %v1187 = vmul.f32 1.0, %v1186
    %v1188 = vtanh.pop %v1059
    %v1189 = vxor.u32 %v1060, 2147483648
    %v1190 = vmul.f32 %v1189, 1.442695
    %v1191 = vpow.pop %v1190
    %v1192 = vadd.f32 %v1191, 1.0
    %v1193 = vrcp.pop %v1192
    %v1194 = vmul.f32 %v1192, %v1193
    %v1195 = vsub.f32 1.0, %v1194
    %v1196 = vmul.f32 %v1193, %v1195
    %v1197 = vadd.f32 %v1193, %v1196
    %vm1198 = vweird.f32 %v1192
    %vm1199 = vweird.f32 %v1193
    %vm1200 = vmor %vm1198, %vm1199
    %v1201 = vsel %vm1200, %v1193, %v1197
    %v1202 = vand.u32 2147483647, %v1192
    %vm1203 = vcmp.eq.f32.partialorder %v1202, 8.507059e+37
    %v1204 = vand.u32 %v1192, 2147483648
    %v1205 = vor.u32 1.1754944e-38, %v1204
    %v1206 = vsel %vm1203, %v1205, %v1201
    %v1207 = vmul.f32 1.0, %v1206
    %v1208 = vmul.f32 %v1187, %v904
    %v1209 = vmul.f32 %v1168, %v1188
    %v1210 = vadd.f32 %v1208, %v1209
    %v1211 = vtanh.pop %v1210
    %v1212 = vmul.f32 %v1207, %v1211
    %v1213 = vxor.u32 %v1146, 2147483648
    %v1214 = vmul.f32 %v1213, 1.442695
    %v1215 = vpow.pop %v1214
    %v1216 = vadd.f32 %v1215, 1.0
    %v1217 = vrcp.pop %v1216
    %v1218 = vmul.f32 %v1216, %v1217
    %v1219 = vsub.f32 1.0, %v1218
    %v1220 = vmul.f32 %v1217, %v1219
    %v1221 = vadd.f32 %v1217, %v1220
    %vm1222 = vweird.f32 %v1216
    %vm1223 = vweird.f32 %v1217
    %vm1224 = vmor %vm1222, %vm1223
    %v1225 = vsel %vm1224, %v1217, %v1221
    %v1226 = vand.u32 2147483647, %v1216
    %vm1227 = vcmp.eq.f32.partialorder %v1226, 8.507059e+37
    %v1228 = vand.u32 %v1216, 2147483648
    %v1229 = vor.u32 1.1754944e-38, %v1228
    %v1230 = vsel %vm1227, %v1229, %v1225
    %v1231 = vmul.f32 1.0, %v1230
    %v1232 = vxor.u32 %v1147, 2147483648
    %v1233 = vmul.f32 %v1232, 1.442695
    %v1234 = vpow.pop %v1233
    %v1235 = vadd.f32 %v1234, 1.0
    %v1236 = vrcp.pop %v1235
    %v1237 = vmul.f32 %v1235, %v1236
    %v1238 = vsub.f32 1.0, %v1237
    %v1239 = vmul.f32 %v1236, %v1238
    %v1240 = vadd.f32 %v1236, %v1239
    %vm1241 = vweird.f32 %v1235
    %vm1242 = vweird.f32 %v1236
    %vm1243 = vmor %vm1241, %vm1242
    %v1244 = vsel %vm1243, %v1236, %v1240
    %v1245 = vand.u32 2147483647, %v1235
    %vm1246 = vcmp.eq.f32.partialorder %v1245, 8.507059e+37
    %v1247 = vand.u32 %v1235, 2147483648
    %v1248 = vor.u32 1.1754944e-38, %v1247
    %v1249 = vsel %vm1246, %v1248, %v1244
    %v1250 = vmul.f32 1.0, %v1249
    %v1251 = vtanh.pop %v1148
    %v1252 = vxor.u32 %v1149, 2147483648
    %v1253 = vmul.f32 %v1252, 1.442695
    %v1254 = vpow.pop %v1253
    %v1255 = vadd.f32 %v1254, 1.0
    %v1256 = vrcp.pop %v1255
    %v1257 = vmul.f32 %v1255, %v1256
    %v1258 = vsub.f32 1.0, %v1257
    %v1259 = vmul.f32 %v1256, %v1258
    %v1260 = vadd.f32 %v1256, %v1259
    %vm1261 = vweird.f32 %v1255
    %vm1262 = vweird.f32 %v1256
    %vm1263 = vmor %vm1261, %vm1262
    %v1264 = vsel %vm1263, %v1256, %v1260
    %v1265 = vand.u32 2147483647, %v1255
    %vm1266 = vcmp.eq.f32.partialorder %v1265, 8.507059e+37
    %v1267 = vand.u32 %v1255, 2147483648
    %v1268 = vor.u32 1.1754944e-38, %v1267
    %v1269 = vsel %vm1266, %v1268, %v1264
    %v1270 = vmul.f32 1.0, %v1269
    %v1271 = vmul.f32 %v1250, %v967
    %v1272 = vmul.f32 %v1231, %v1251
    %v1273 = vadd.f32 %v1271, %v1272
    %v1274 = vtanh.pop %v1273
    %v1275 = vmul.f32 %v1270, %v1274
    %v1276 = vadd.f32 %v970, %v1212
    %v1277 = vmax.f32 %v906, %v1212
    %v1278 = vadd.f32 %v971, %v1275
    %v1279 = vmax.f32 %v969, %v1275
    %s1280 = scalar_lea.vmem [#allocation2], 64
    %v1281 = vld [vmem:[%s1280] sm:$0xff]
    %v1282 = vld [vmem:[%s1280 + $0x8] sm:$0xff]
    %v1283 = vld [vmem:[%s1280 + $0x10] sm:$0xff]
    %v1284 = vld [vmem:[%s1280 + $0x18] sm:$0xff]
    %1285 = vmatpush.msra.mxu0 %v599
    %1286 = vmatpush.msra.mxu0 %v595
    %1287 = vmatpush.msra.mxu0 %v591
    %1288 = vmatpush.msra.mxu0 %v587
    %1289 = vmatpush.msra.mxu0 %v583
    %1290 = vmatpush.msra.mxu0 %v579
    %1291 = vmatpush.msra.mxu0 %v575
    %1292 = vmatpush.msra.mxu0 %v571
    %1293 = vmatpush.msra.mxu0 %v567
    %1294 = vmatpush.msra.mxu0 %v563
    %1295 = vmatpush.msra.mxu0 %v559
    %1296 = vmatpush.msra.mxu0 %v555
    %1297 = vmatpush.msra.mxu0 %v551
    %1298 = vmatpush.msra.mxu0 %v547
    %1299 = vmatpush.msra.mxu0 %v543
    %1300 = vmatpush.msra.mxu0 %v539
    %1301 = vmatmul.f32.gmra.mxu0 %v1212
    %v1302 = vpop.f32.mrf.mxu0
    %v1303 = vadd.f32 0.0, %v1302
    %1304 = vdwg.mxu0
    %1305 = vmatpush.msra.mxu0 %v600
    %1306 = vmatpush.msra.mxu0 %v596
    %1307 = vmatpush.msra.mxu0 %v592
    %1308 = vmatpush.msra.mxu0 %v588
    %1309 = vmatpush.msra.mxu0 %v584
    %1310 = vmatpush.msra.mxu0 %v580
    %1311 = vmatpush.msra.mxu0 %v576
    %1312 = vmatpush.msra.mxu0 %v572
    %1313 = vmatpush.msra.mxu0 %v568
    %1314 = vmatpush.msra.mxu0 %v564
    %1315 = vmatpush.msra.mxu0 %v560
    %1316 = vmatpush.msra.mxu0 %v556
    %1317 = vmatpush.msra.mxu0 %v552
    %1318 = vmatpush.msra.mxu0 %v548
    %1319 = vmatpush.msra.mxu0 %v544
    %1320 = vmatpush.msra.mxu0 %v540
    %1321 = vmatmul.f32.gmra.mxu0 %v1212
    %v1322 = vpop.f32.mrf.mxu0
    %v1323 = vadd.f32 0.0, %v1322
    %1324 = vdwg.mxu0
    %1325 = vmatpush.msra.mxu0 %v601
    %1326 = vmatpush.msra.mxu0 %v597
    %1327 = vmatpush.msra.mxu0 %v593
    %1328 = vmatpush.msra.mxu0 %v589
    %1329 = vmatpush.msra.mxu0 %v585
    %1330 = vmatpush.msra.mxu0 %v581
    %1331 = vmatpush.msra.mxu0 %v577
    %1332 = vmatpush.msra.mxu0 %v573
    %1333 = vmatpush.msra.mxu0 %v569
    %1334 = vmatpush.msra.mxu0 %v565
    %1335 = vmatpush.msra.mxu0 %v561
    %1336 = vmatpush.msra.mxu0 %v557
    %1337 = vmatpush.msra.mxu0 %v553
    %1338 = vmatpush.msra.mxu0 %v549
    %1339 = vmatpush.msra.mxu0 %v545
    %1340 = vmatpush.msra.mxu0 %v541
    %1341 = vmatmul.f32.gmra.mxu0 %v1212
    %v1342 = vpop.f32.mrf.mxu0
    %v1343 = vadd.f32 0.0, %v1342
    %1344 = vdwg.mxu0
    %1345 = vmatpush.msra.mxu0 %v602
    %1346 = vmatpush.msra.mxu0 %v598
    %1347 = vmatpush.msra.mxu0 %v594
    %1348 = vmatpush.msra.mxu0 %v590
    %1349 = vmatpush.msra.mxu0 %v586
    %1350 = vmatpush.msra.mxu0 %v582
    %1351 = vmatpush.msra.mxu0 %v578
    %1352 = vmatpush.msra.mxu0 %v574
    %1353 = vmatpush.msra.mxu0 %v570
    %1354 = vmatpush.msra.mxu0 %v566
    %1355 = vmatpush.msra.mxu0 %v562
    %1356 = vmatpush.msra.mxu0 %v558
    %1357 = vmatpush.msra.mxu0 %v554
    %1358 = vmatpush.msra.mxu0 %v550
    %1359 = vmatpush.msra.mxu0 %v546
    %1360 = vmatpush.msra.mxu0 %v542
    %1361 = vmatmul.f32.gmra.mxu0 %v1212
    %v1362 = vpop.f32.mrf.mxu0
    %v1363 = vadd.f32 0.0, %v1362
    %1364 = vdwg.mxu0
    %v1365 = vadd.f32 %v1281, %v1303
    %v1366 = vadd.f32 %v1282, %v1323
    %v1367 = vadd.f32 %v1283, %v1343
    %v1368 = vadd.f32 %v1284, %v1363
    %s1369 = scalar_lea.vmem [#allocation3], 160
    %v1370 = vld [vmem:[%s1369] sm:$0xff]
    %v1371 = vld [vmem:[%s1369 + $0x8] sm:$0xff]
    %v1372 = vld [vmem:[%s1369 + $0x10] sm:$0xff]
    %v1373 = vld [vmem:[%s1369 + $0x18] sm:$0xff]
    %1374 = vmatpush.msra.mxu0 %v663
    %1375 = vmatpush.msra.mxu0 %v659
    %1376 = vmatpush.msra.mxu0 %v655
    %1377 = vmatpush.msra.mxu0 %v651
    %1378 = vmatpush.msra.mxu0 %v647
    %1379 = vmatpush.msra.mxu0 %v643
    %1380 = vmatpush.msra.mxu0 %v639
    %1381 = vmatpush.msra.mxu0 %v635
    %1382 = vmatpush.msra.mxu0 %v631
    %1383 = vmatpush.msra.mxu0 %v627
    %1384 = vmatpush.msra.mxu0 %v623
    %1385 = vmatpush.msra.mxu0 %v619
    %1386 = vmatpush.msra.mxu0 %v615
    %1387 = vmatpush.msra.mxu0 %v611
    %1388 = vmatpush.msra.mxu0 %v607
    %1389 = vmatpush.msra.mxu0 %v603
    %1390 = vmatmul.f32.gmra.mxu0 %v1275
    %v1391 = vpop.f32.mrf.mxu0
    %v1392 = vadd.f32 0.0, %v1391
    %1393 = vdwg.mxu0
    %1394 = vmatpush.msra.mxu0 %v664
    %1395 = vmatpush.msra.mxu0 %v660
    %1396 = vmatpush.msra.mxu0 %v656
    %1397 = vmatpush.msra.mxu0 %v652
    %1398 = vmatpush.msra.mxu0 %v648
    %1399 = vmatpush.msra.mxu0 %v644
    %1400 = vmatpush.msra.mxu0 %v640
    %1401 = vmatpush.msra.mxu0 %v636
    %1402 = vmatpush.msra.mxu0 %v632
    %1403 = vmatpush.msra.mxu0 %v628
    %1404 = vmatpush.msra.mxu0 %v624
    %1405 = vmatpush.msra.mxu0 %v620
    %1406 = vmatpush.msra.mxu0 %v616
    %1407 = vmatpush.msra.mxu0 %v612
    %1408 = vmatpush.msra.mxu0 %v608
    %1409 = vmatpush.msra.mxu0 %v604
    %1410 = vmatmul.f32.gmra.mxu0 %v1275
    %v1411 = vpop.f32.mrf.mxu0
    %v1412 = vadd.f32 0.0, %v1411
    %1413 = vdwg.mxu0
    %1414 = vmatpush.msra.mxu0 %v665
    %1415 = vmatpush.msra.mxu0 %v661
    %1416 = vmatpush.msra.mxu0 %v657
    %1417 = vmatpush.msra.mxu0 %v653
    %1418 = vmatpush.msra.mxu0 %v649
    %1419 = vmatpush.msra.mxu0 %v645
    %1420 = vmatpush.msra.mxu0 %v641
    %1421 = vmatpush.msra.mxu0 %v637
    %1422 = vmatpush.msra.mxu0 %v633
    %1423 = vmatpush.msra.mxu0 %v629
    %1424 = vmatpush.msra.mxu0 %v625
    %1425 = vmatpush.msra.mxu0 %v621
    %1426 = vmatpush.msra.mxu0 %v617
    %1427 = vmatpush.msra.mxu0 %v613
    %1428 = vmatpush.msra.mxu0 %v609
    %1429 = vmatpush.msra.mxu0 %v605
    %1430 = vmatmul.f32.gmra.mxu0 %v1275
    %v1431 = vpop.f32.mrf.mxu0
    %v1432 = vadd.f32 0.0, %v1431
    %1433 = vdwg.mxu0
    %1434 = vmatpush.msra.mxu0 %v666
    %1435 = vmatpush.msra.mxu0 %v662
    %1436 = vmatpush.msra.mxu0 %v658
    %1437 = vmatpush.msra.mxu0 %v654
    %1438 = vmatpush.msra.mxu0 %v650
    %1439 = vmatpush.msra.mxu0 %v646
    %1440 = vmatpush.msra.mxu0 %v642
    %1441 = vmatpush.msra.mxu0 %v638
    %1442 = vmatpush.msra.mxu0 %v634
    %1443 = vmatpush.msra.mxu0 %v630
    %1444 = vmatpush.msra.mxu0 %v626
    %1445 = vmatpush.msra.mxu0 %v622
    %1446 = vmatpush.msra.mxu0 %v618
    %1447 = vmatpush.msra.mxu0 %v614
    %1448 = vmatpush.msra.mxu0 %v610
    %1449 = vmatpush.msra.mxu0 %v606
    %1450 = vmatmul.f32.gmra.mxu0 %v1275
    %v1451 = vpop.f32.mrf.mxu0
    %v1452 = vadd.f32 0.0, %v1451
    %1453 = vdwg.mxu0
    %v1454 = vadd.f32 %v1370, %v1392
    %v1455 = vadd.f32 %v1371, %v1412
    %v1456 = vadd.f32 %v1372, %v1432
    %v1457 = vadd.f32 %v1373, %v1452
    %v1458 = vxor.u32 %v1365, 2147483648
    %v1459 = vmul.f32 %v1458, 1.442695
    %v1460 = vpow.pop %v1459
    %v1461 = vadd.f32 %v1460, 1.0
    %v1462 = vrcp.pop %v1461
    %v1463 = vmul.f32 %v1461, %v1462
    %v1464 = vsub.f32 1.0, %v1463
    %v1465 = vmul.f32 %v1462, %v1464
    %v1466 = vadd.f32 %v1462, %v1465
    %vm1467 = vweird.f32 %v1461
    %vm1468 = vweird.f32 %v1462
    %vm1469 = vmor %vm1467, %vm1468
    %v1470 = vsel %vm1469, %v1462, %v1466
    %v1471 = vand.u32 2147483647, %v1461
    %vm1472 = vcmp.eq.f32.partialorder %v1471, 8.507059e+37
    %v1473 = vand.u32 %v1461, 2147483648
    %v1474 = vor.u32 1.1754944e-38, %v1473
    %v1475 = vsel %vm1472, %v1474, %v1470
    %v1476 = vmul.f32 1.0, %v1475
    %v1477 = vxor.u32 %v1366, 2147483648
    %v1478 = vmul.f32 %v1477, 1.442695
    %v1479 = vpow.pop %v1478
    %v1480 = vadd.f32 %v1479, 1.0
    %v1481 = vrcp.pop %v1480
    %v1482 = vmul.f32 %v1480, %v1481
    %v1483 = vsub.f32 1.0, %v1482
    %v1484 = vmul.f32 %v1481, %v1483
    %v1485 = vadd.f32 %v1481, %v1484
    %vm1486 = vweird.f32 %v1480
    %vm1487 = vweird.f32 %v1481
    %vm1488 = vmor %vm1486, %vm1487
    %v1489 = vsel %vm1488, %v1481, %v1485
    %v1490 = vand.u32 2147483647, %v1480
    %vm1491 = vcmp.eq.f32.partialorder %v1490, 8.507059e+37
    %v1492 = vand.u32 %v1480, 2147483648
    %v1493 = vor.u32 1.1754944e-38, %v1492
    %v1494 = vsel %vm1491, %v1493, %v1489
    %v1495 = vmul.f32 1.0, %v1494
    %v1496 = vtanh.pop %v1367
    %v1497 = vxor.u32 %v1368, 2147483648
    %v1498 = vmul.f32 %v1497, 1.442695
    %v1499 = vpow.pop %v1498
    %v1500 = vadd.f32 %v1499, 1.0
    %v1501 = vrcp.pop %v1500
    %v1502 = vmul.f32 %v1500, %v1501
    %v1503 = vsub.f32 1.0, %v1502
    %v1504 = vmul.f32 %v1501, %v1503
    %v1505 = vadd.f32 %v1501, %v1504
    %vm1506 = vweird.f32 %v1500
    %vm1507 = vweird.f32 %v1501
    %vm1508 = vmor %vm1506, %vm1507
    %v1509 = vsel %vm1508, %v1501, %v1505
    %v1510 = vand.u32 2147483647, %v1500
    %vm1511 = vcmp.eq.f32.partialorder %v1510, 8.507059e+37
    %v1512 = vand.u32 %v1500, 2147483648
    %v1513 = vor.u32 1.1754944e-38, %v1512
    %v1514 = vsel %vm1511, %v1513, %v1509
    %v1515 = vmul.f32 1.0, %v1514
    %v1516 = vmul.f32 %v1495, %v1210
    %v1517 = vmul.f32 %v1476, %v1496
    %v1518 = vadd.f32 %v1516, %v1517
    %v1519 = vtanh.pop %v1518
    %v1520 = vmul.f32 %v1515, %v1519
    %v1521 = vxor.u32 %v1454, 2147483648
    %v1522 = vmul.f32 %v1521, 1.442695
    %v1523 = vpow.pop %v1522
    %v1524 = vadd.f32 %v1523, 1.0
    %v1525 = vrcp.pop %v1524
    %v1526 = vmul.f32 %v1524, %v1525
    %v1527 = vsub.f32 1.0, %v1526
    %v1528 = vmul.f32 %v1525, %v1527
    %v1529 = vadd.f32 %v1525, %v1528
    %vm1530 = vweird.f32 %v1524
    %vm1531 = vweird.f32 %v1525
    %vm1532 = vmor %vm1530, %vm1531
    %v1533 = vsel %vm1532, %v1525, %v1529
    %v1534 = vand.u32 2147483647, %v1524
    %vm1535 = vcmp.eq.f32.partialorder %v1534, 8.507059e+37
    %v1536 = vand.u32 %v1524, 2147483648
    %v1537 = vor.u32 1.1754944e-38, %v1536
    %v1538 = vsel %vm1535, %v1537, %v1533
    %v1539 = vmul.f32 1.0, %v1538
    %v1540 = vxor.u32 %v1455, 2147483648
    %v1541 = vmul.f32 %v1540, 1.442695
    %v1542 = vpow.pop %v1541
    %v1543 = vadd.f32 %v1542, 1.0
    %v1544 = vrcp.pop %v1543
    %v1545 = vmul.f32 %v1543, %v1544
    %v1546 = vsub.f32 1.0, %v1545
    %v1547 = vmul.f32 %v1544, %v1546
    %v1548 = vadd.f32 %v1544, %v1547
    %vm1549 = vweird.f32 %v1543
    %vm1550 = vweird.f32 %v1544
    %vm1551 = vmor %vm1549, %vm1550
    %v1552 = vsel %vm1551, %v1544, %v1548
    %v1553 = vand.u32 2147483647, %v1543
    %vm1554 = vcmp.eq.f32.partialorder %v1553, 8.507059e+37
    %v1555 = vand.u32 %v1543, 2147483648
    %v1556 = vor.u32 1.1754944e-38, %v1555
    %v1557 = vsel %vm1554, %v1556, %v1552
    %v1558 = vmul.f32 1.0, %v1557
    %v1559 = vtanh.pop %v1456
    %v1560 = vxor.u32 %v1457, 2147483648
    %v1561 = vmul.f32 %v1560, 1.442695
    %v1562 = vpow.pop %v1561
    %v1563 = vadd.f32 %v1562, 1.0
    %v1564 = vrcp.pop %v1563
    %v1565 = vmul.f32 %v1563, %v1564
    %v1566 = vsub.f32 1.0, %v1565
    %v1567 = vmul.f32 %v1564, %v1566
    %v1568 = vadd.f32 %v1564, %v1567
    %vm1569 = vweird.f32 %v1563
    %vm1570 = vweird.f32 %v1564
    %vm1571 = vmor %vm1569, %vm1570
    %v1572 = vsel %vm1571, %v1564, %v1568
    %v1573 = vand.u32 2147483647, %v1563
    %vm1574 = vcmp.eq.f32.partialorder %v1573, 8.507059e+37
    %v1575 = vand.u32 %v1563, 2147483648
    %v1576 = vor.u32 1.1754944e-38, %v1575
    %v1577 = vsel %vm1574, %v1576, %v1572
    %v1578 = vmul.f32 1.0, %v1577
    %v1579 = vmul.f32 %v1558, %v1273
    %v1580 = vmul.f32 %v1539, %v1559
    %v1581 = vadd.f32 %v1579, %v1580
    %v1582 = vtanh.pop %v1581
    %v1583 = vmul.f32 %v1578, %v1582
    %v1584 = vadd.f32 %v1276, %v1520
    %v1585 = vmax.f32 %v1277, %v1520
    %v1586 = vadd.f32 %v1278, %v1583
    %v1587 = vmax.f32 %v1279, %v1583
    %s1588 = scalar_lea.vmem [#allocation2], 96
    %v1589 = vld [vmem:[%s1588] sm:$0xff]
    %v1590 = vld [vmem:[%s1588 + $0x8] sm:$0xff]
    %v1591 = vld [vmem:[%s1588 + $0x10] sm:$0xff]
    %v1592 = vld [vmem:[%s1588 + $0x18] sm:$0xff]
    %1593 = vmatpush.msra.mxu0 %v599
    %1594 = vmatpush.msra.mxu0 %v595
    %1595 = vmatpush.msra.mxu0 %v591
    %1596 = vmatpush.msra.mxu0 %v587
    %1597 = vmatpush.msra.mxu0 %v583
    %1598 = vmatpush.msra.mxu0 %v579
    %1599 = vmatpush.msra.mxu0 %v575
    %1600 = vmatpush.msra.mxu0 %v571
    %1601 = vmatpush.msra.mxu0 %v567
    %1602 = vmatpush.msra.mxu0 %v563
    %1603 = vmatpush.msra.mxu0 %v559
    %1604 = vmatpush.msra.mxu0 %v555
    %1605 = vmatpush.msra.mxu0 %v551
    %1606 = vmatpush.msra.mxu0 %v547
    %1607 = vmatpush.msra.mxu0 %v543
    %1608 = vmatpush.msra.mxu0 %v539
    %1609 = vmatmul.f32.gmra.mxu0 %v1520
    %v1610 = vpop.f32.mrf.mxu0
    %v1611 = vadd.f32 0.0, %v1610
    %1612 = vdwg.mxu0
    %1613 = vmatpush.msra.mxu0 %v600
    %1614 = vmatpush.msra.mxu0 %v596
    %1615 = vmatpush.msra.mxu0 %v592
    %1616 = vmatpush.msra.mxu0 %v588
    %1617 = vmatpush.msra.mxu0 %v584
    %1618 = vmatpush.msra.mxu0 %v580
    %1619 = vmatpush.msra.mxu0 %v576
    %1620 = vmatpush.msra.mxu0 %v572
    %1621 = vmatpush.msra.mxu0 %v568
    %1622 = vmatpush.msra.mxu0 %v564
    %1623 = vmatpush.msra.mxu0 %v560
    %1624 = vmatpush.msra.mxu0 %v556
    %1625 = vmatpush.msra.mxu0 %v552
    %1626 = vmatpush.msra.mxu0 %v548
    %1627 = vmatpush.msra.mxu0 %v544
    %1628 = vmatpush.msra.mxu0 %v540
    %1629 = vmatmul.f32.gmra.mxu0 %v1520
    %v1630 = vpop.f32.mrf.mxu0
    %v1631 = vadd.f32 0.0, %v1630
    %1632 = vdwg.mxu0
    %1633 = vmatpush.msra.mxu0 %v601
    %1634 = vmatpush.msra.mxu0 %v597
    %1635 = vmatpush.msra.mxu0 %v593
    %1636 = vmatpush.msra.mxu0 %v589
    %1637 = vmatpush.msra.mxu0 %v585
    %1638 = vmatpush.msra.mxu0 %v581
    %1639 = vmatpush.msra.mxu0 %v577
    %1640 = vmatpush.msra.mxu0 %v573
    %1641 = vmatpush.msra.mxu0 %v569
    %1642 = vmatpush.msra.mxu0 %v565
    %1643 = vmatpush.msra.mxu0 %v561
    %1644 = vmatpush.msra.mxu0 %v557
    %1645 = vmatpush.msra.mxu0 %v553
    %1646 = vmatpush.msra.mxu0 %v549
    %1647 = vmatpush.msra.mxu0 %v545
    %1648 = vmatpush.msra.mxu0 %v541
    %1649 = vmatmul.f32.gmra.mxu0 %v1520
    %v1650 = vpop.f32.mrf.mxu0
    %v1651 = vadd.f32 0.0, %v1650
    %1652 = vdwg.mxu0
    %1653 = vmatpush.msra.mxu0 %v602
    %1654 = vmatpush.msra.mxu0 %v598
    %1655 = vmatpush.msra.mxu0 %v594
    %1656 = vmatpush.msra.mxu0 %v590
    %1657 = vmatpush.msra.mxu0 %v586
    %1658 = vmatpush.msra.mxu0 %v582
    %1659 = vmatpush.msra.mxu0 %v578
    %1660 = vmatpush.msra.mxu0 %v574
    %1661 = vmatpush.msra.mxu0 %v570
    %1662 = vmatpush.msra.mxu0 %v566
    %1663 = vmatpush.msra.mxu0 %v562
    %1664 = vmatpush.msra.mxu0 %v558
    %1665 = vmatpush.msra.mxu0 %v554
    %1666 = vmatpush.msra.mxu0 %v550
    %1667 = vmatpush.msra.mxu0 %v546
    %1668 = vmatpush.msra.mxu0 %v542
    %1669 = vmatmul.f32.gmra.mxu0 %v1520
    %v1670 = vpop.f32.mrf.mxu0
    %v1671 = vadd.f32 0.0, %v1670
    %1672 = vdwg.mxu0
    %v1673 = vadd.f32 %v1589, %v1611
    %v1674 = vadd.f32 %v1590, %v1631
    %v1675 = vadd.f32 %v1591, %v1651
    %v1676 = vadd.f32 %v1592, %v1671
    %s1677 = scalar_lea.vmem [#allocation3], 128
    %v1678 = vld [vmem:[%s1677] sm:$0xff]
    %v1679 = vld [vmem:[%s1677 + $0x8] sm:$0xff]
    %v1680 = vld [vmem:[%s1677 + $0x10] sm:$0xff]
    %v1681 = vld [vmem:[%s1677 + $0x18] sm:$0xff]
    %1682 = vmatpush.msra.mxu0 %v663
    %1683 = vmatpush.msra.mxu0 %v659
    %1684 = vmatpush.msra.mxu0 %v655
    %1685 = vmatpush.msra.mxu0 %v651
    %1686 = vmatpush.msra.mxu0 %v647
    %1687 = vmatpush.msra.mxu0 %v643
    %1688 = vmatpush.msra.mxu0 %v639
    %1689 = vmatpush.msra.mxu0 %v635
    %1690 = vmatpush.msra.mxu0 %v631
    %1691 = vmatpush.msra.mxu0 %v627
    %1692 = vmatpush.msra.mxu0 %v623
    %1693 = vmatpush.msra.mxu0 %v619
    %1694 = vmatpush.msra.mxu0 %v615
    %1695 = vmatpush.msra.mxu0 %v611
    %1696 = vmatpush.msra.mxu0 %v607
    %1697 = vmatpush.msra.mxu0 %v603
    %1698 = vmatmul.f32.gmra.mxu0 %v1583
    %v1699 = vpop.f32.mrf.mxu0
    %v1700 = vadd.f32 0.0, %v1699
    %1701 = vdwg.mxu0
    %1702 = vmatpush.msra.mxu0 %v664
    %1703 = vmatpush.msra.mxu0 %v660
    %1704 = vmatpush.msra.mxu0 %v656
    %1705 = vmatpush.msra.mxu0 %v652
    %1706 = vmatpush.msra.mxu0 %v648
    %1707 = vmatpush.msra.mxu0 %v644
    %1708 = vmatpush.msra.mxu0 %v640
    %1709 = vmatpush.msra.mxu0 %v636
    %1710 = vmatpush.msra.mxu0 %v632
    %1711 = vmatpush.msra.mxu0 %v628
    %1712 = vmatpush.msra.mxu0 %v624
    %1713 = vmatpush.msra.mxu0 %v620
    %1714 = vmatpush.msra.mxu0 %v616
    %1715 = vmatpush.msra.mxu0 %v612
    %1716 = vmatpush.msra.mxu0 %v608
    %1717 = vmatpush.msra.mxu0 %v604
    %1718 = vmatmul.f32.gmra.mxu0 %v1583
    %v1719 = vpop.f32.mrf.mxu0
    %v1720 = vadd.f32 0.0, %v1719
    %1721 = vdwg.mxu0
    %1722 = vmatpush.msra.mxu0 %v665
    %1723 = vmatpush.msra.mxu0 %v661
    %1724 = vmatpush.msra.mxu0 %v657
    %1725 = vmatpush.msra.mxu0 %v653
    %1726 = vmatpush.msra.mxu0 %v649
    %1727 = vmatpush.msra.mxu0 %v645
    %1728 = vmatpush.msra.mxu0 %v641
    %1729 = vmatpush.msra.mxu0 %v637
    %1730 = vmatpush.msra.mxu0 %v633
    %1731 = vmatpush.msra.mxu0 %v629
    %1732 = vmatpush.msra.mxu0 %v625
    %1733 = vmatpush.msra.mxu0 %v621
    %1734 = vmatpush.msra.mxu0 %v617
    %1735 = vmatpush.msra.mxu0 %v613
    %1736 = vmatpush.msra.mxu0 %v609
    %1737 = vmatpush.msra.mxu0 %v605
    %1738 = vmatmul.f32.gmra.mxu0 %v1583
    %v1739 = vpop.f32.mrf.mxu0
    %v1740 = vadd.f32 0.0, %v1739
    %1741 = vdwg.mxu0
    %1742 = vmatpush.msra.mxu0 %v666
    %1743 = vmatpush.msra.mxu0 %v662
    %1744 = vmatpush.msra.mxu0 %v658
    %1745 = vmatpush.msra.mxu0 %v654
    %1746 = vmatpush.msra.mxu0 %v650
    %1747 = vmatpush.msra.mxu0 %v646
    %1748 = vmatpush.msra.mxu0 %v642
    %1749 = vmatpush.msra.mxu0 %v638
    %1750 = vmatpush.msra.mxu0 %v634
    %1751 = vmatpush.msra.mxu0 %v630
    %1752 = vmatpush.msra.mxu0 %v626
    %1753 = vmatpush.msra.mxu0 %v622
    %1754 = vmatpush.msra.mxu0 %v618
    %1755 = vmatpush.msra.mxu0 %v614
    %1756 = vmatpush.msra.mxu0 %v610
    %1757 = vmatpush.msra.mxu0 %v606
    %1758 = vmatmul.f32.gmra.mxu0 %v1583
    %v1759 = vpop.f32.mrf.mxu0
    %v1760 = vadd.f32 0.0, %v1759
    %1761 = vdwg.mxu0
    %v1762 = vadd.f32 %v1678, %v1700
    %v1763 = vadd.f32 %v1679, %v1720
    %v1764 = vadd.f32 %v1680, %v1740
    %v1765 = vadd.f32 %v1681, %v1760
    %v1766 = vxor.u32 %v1673, 2147483648
    %v1767 = vmul.f32 %v1766, 1.442695
    %v1768 = vpow.pop %v1767
    %v1769 = vadd.f32 %v1768, 1.0
    %v1770 = vrcp.pop %v1769
    %v1771 = vmul.f32 %v1769, %v1770
    %v1772 = vsub.f32 1.0, %v1771
    %v1773 = vmul.f32 %v1770, %v1772
    %v1774 = vadd.f32 %v1770, %v1773
    %vm1775 = vweird.f32 %v1769
    %vm1776 = vweird.f32 %v1770
    %vm1777 = vmor %vm1775, %vm1776
    %v1778 = vsel %vm1777, %v1770, %v1774
    %v1779 = vand.u32 2147483647, %v1769
    %vm1780 = vcmp.eq.f32.partialorder %v1779, 8.507059e+37
    %v1781 = vand.u32 %v1769, 2147483648
    %v1782 = vor.u32 1.1754944e-38, %v1781
    %v1783 = vsel %vm1780, %v1782, %v1778
    %v1784 = vmul.f32 1.0, %v1783
    %v1785 = vxor.u32 %v1674, 2147483648
    %v1786 = vmul.f32 %v1785, 1.442695
    %v1787 = vpow.pop %v1786
    %v1788 = vadd.f32 %v1787, 1.0
    %v1789 = vrcp.pop %v1788
    %v1790 = vmul.f32 %v1788, %v1789
    %v1791 = vsub.f32 1.0, %v1790
    %v1792 = vmul.f32 %v1789, %v1791
    %v1793 = vadd.f32 %v1789, %v1792
    %vm1794 = vweird.f32 %v1788
    %vm1795 = vweird.f32 %v1789
    %vm1796 = vmor %vm1794, %vm1795
    %v1797 = vsel %vm1796, %v1789, %v1793
    %v1798 = vand.u32 2147483647, %v1788
    %vm1799 = vcmp.eq.f32.partialorder %v1798, 8.507059e+37
    %v1800 = vand.u32 %v1788, 2147483648
    %v1801 = vor.u32 1.1754944e-38, %v1800
    %v1802 = vsel %vm1799, %v1801, %v1797
    %v1803 = vmul.f32 1.0, %v1802
    %v1804 = vtanh.pop %v1675
    %v1805 = vxor.u32 %v1676, 2147483648
    %v1806 = vmul.f32 %v1805, 1.442695
    %v1807 = vpow.pop %v1806
    %v1808 = vadd.f32 %v1807, 1.0
    %v1809 = vrcp.pop %v1808
    %v1810 = vmul.f32 %v1808, %v1809
    %v1811 = vsub.f32 1.0, %v1810
    %v1812 = vmul.f32 %v1809, %v1811
    %v1813 = vadd.f32 %v1809, %v1812
    %vm1814 = vweird.f32 %v1808
    %vm1815 = vweird.f32 %v1809
    %vm1816 = vmor %vm1814, %vm1815
    %v1817 = vsel %vm1816, %v1809, %v1813
    %v1818 = vand.u32 2147483647, %v1808
    %vm1819 = vcmp.eq.f32.partialorder %v1818, 8.507059e+37
    %v1820 = vand.u32 %v1808, 2147483648
    %v1821 = vor.u32 1.1754944e-38, %v1820
    %v1822 = vsel %vm1819, %v1821, %v1817
    %v1823 = vmul.f32 1.0, %v1822
    %v1824 = vmul.f32 %v1803, %v1518
    %v1825 = vmul.f32 %v1784, %v1804
    %v1826 = vadd.f32 %v1824, %v1825
    %v1827 = vtanh.pop %v1826
    %v1828 = vmul.f32 %v1823, %v1827
    %v1829 = vxor.u32 %v1762, 2147483648
    %v1830 = vmul.f32 %v1829, 1.442695
    %v1831 = vpow.pop %v1830
    %v1832 = vadd.f32 %v1831, 1.0
    %v1833 = vrcp.pop %v1832
    %v1834 = vmul.f32 %v1832, %v1833
    %v1835 = vsub.f32 1.0, %v1834
    %v1836 = vmul.f32 %v1833, %v1835
    %v1837 = vadd.f32 %v1833, %v1836
    %vm1838 = vweird.f32 %v1832
    %vm1839 = vweird.f32 %v1833
    %vm1840 = vmor %vm1838, %vm1839
    %v1841 = vsel %vm1840, %v1833, %v1837
    %v1842 = vand.u32 2147483647, %v1832
    %vm1843 = vcmp.eq.f32.partialorder %v1842, 8.507059e+37
    %v1844 = vand.u32 %v1832, 2147483648
    %v1845 = vor.u32 1.1754944e-38, %v1844
    %v1846 = vsel %vm1843, %v1845, %v1841
    %v1847 = vmul.f32 1.0, %v1846
    %v1848 = vxor.u32 %v1763, 2147483648
    %v1849 = vmul.f32 %v1848, 1.442695
    %v1850 = vpow.pop %v1849
    %v1851 = vadd.f32 %v1850, 1.0
    %v1852 = vrcp.pop %v1851
    %v1853 = vmul.f32 %v1851, %v1852
    %v1854 = vsub.f32 1.0, %v1853
    %v1855 = vmul.f32 %v1852, %v1854
    %v1856 = vadd.f32 %v1852, %v1855
    %vm1857 = vweird.f32 %v1851
    %vm1858 = vweird.f32 %v1852
    %vm1859 = vmor %vm1857, %vm1858
    %v1860 = vsel %vm1859, %v1852, %v1856
    %v1861 = vand.u32 2147483647, %v1851
    %vm1862 = vcmp.eq.f32.partialorder %v1861, 8.507059e+37
    %v1863 = vand.u32 %v1851, 2147483648
    %v1864 = vor.u32 1.1754944e-38, %v1863
    %v1865 = vsel %vm1862, %v1864, %v1860
    %v1866 = vmul.f32 1.0, %v1865
    %v1867 = vtanh.pop %v1764
    %v1868 = vxor.u32 %v1765, 2147483648
    %v1869 = vmul.f32 %v1868, 1.442695
    %v1870 = vpow.pop %v1869
    %v1871 = vadd.f32 %v1870, 1.0
    %v1872 = vrcp.pop %v1871
    %v1873 = vmul.f32 %v1871, %v1872
    %v1874 = vsub.f32 1.0, %v1873
    %v1875 = vmul.f32 %v1872, %v1874
    %v1876 = vadd.f32 %v1872, %v1875
    %vm1877 = vweird.f32 %v1871
    %vm1878 = vweird.f32 %v1872
    %vm1879 = vmor %vm1877, %vm1878
    %v1880 = vsel %vm1879, %v1872, %v1876
    %v1881 = vand.u32 2147483647, %v1871
    %vm1882 = vcmp.eq.f32.partialorder %v1881, 8.507059e+37
    %v1883 = vand.u32 %v1871, 2147483648
    %v1884 = vor.u32 1.1754944e-38, %v1883
    %v1885 = vsel %vm1882, %v1884, %v1880
    %v1886 = vmul.f32 1.0, %v1885
    %v1887 = vmul.f32 %v1866, %v1581
    %v1888 = vmul.f32 %v1847, %v1867
    %v1889 = vadd.f32 %v1887, %v1888
    %v1890 = vtanh.pop %v1889
    %v1891 = vmul.f32 %v1886, %v1890
    %v1892 = vadd.f32 %v1584, %v1828
    %v1893 = vmax.f32 %v1585, %v1828
    %v1894 = vadd.f32 %v1586, %v1891
    %v1895 = vmax.f32 %v1587, %v1891
    %s1896 = scalar_lea.vmem [#allocation2], 128
    %v1897 = vld [vmem:[%s1896] sm:$0xff]
    %v1898 = vld [vmem:[%s1896 + $0x8] sm:$0xff]
    %v1899 = vld [vmem:[%s1896 + $0x10] sm:$0xff]
    %v1900 = vld [vmem:[%s1896 + $0x18] sm:$0xff]
    %1901 = vmatpush.msra.mxu0 %v599
    %1902 = vmatpush.msra.mxu0 %v595
    %1903 = vmatpush.msra.mxu0 %v591
    %1904 = vmatpush.msra.mxu0 %v587
    %1905 = vmatpush.msra.mxu0 %v583
    %1906 = vmatpush.msra.mxu0 %v579
    %1907 = vmatpush.msra.mxu0 %v575
    %1908 = vmatpush.msra.mxu0 %v571
    %1909 = vmatpush.msra.mxu0 %v567
    %1910 = vmatpush.msra.mxu0 %v563
    %1911 = vmatpush.msra.mxu0 %v559
    %1912 = vmatpush.msra.mxu0 %v555
    %1913 = vmatpush.msra.mxu0 %v551
    %1914 = vmatpush.msra.mxu0 %v547
    %1915 = vmatpush.msra.mxu0 %v543
    %1916 = vmatpush.msra.mxu0 %v539
    %1917 = vmatmul.f32.gmra.mxu0 %v1828
    %v1918 = vpop.f32.mrf.mxu0
    %v1919 = vadd.f32 0.0, %v1918
    %1920 = vdwg.mxu0
    %1921 = vmatpush.msra.mxu0 %v600
    %1922 = vmatpush.msra.mxu0 %v596
    %1923 = vmatpush.msra.mxu0 %v592
    %1924 = vmatpush.msra.mxu0 %v588
    %1925 = vmatpush.msra.mxu0 %v584
    %1926 = vmatpush.msra.mxu0 %v580
    %1927 = vmatpush.msra.mxu0 %v576
    %1928 = vmatpush.msra.mxu0 %v572
    %1929 = vmatpush.msra.mxu0 %v568
    %1930 = vmatpush.msra.mxu0 %v564
    %1931 = vmatpush.msra.mxu0 %v560
    %1932 = vmatpush.msra.mxu0 %v556
    %1933 = vmatpush.msra.mxu0 %v552
    %1934 = vmatpush.msra.mxu0 %v548
    %1935 = vmatpush.msra.mxu0 %v544
    %1936 = vmatpush.msra.mxu0 %v540
    %1937 = vmatmul.f32.gmra.mxu0 %v1828
    %v1938 = vpop.f32.mrf.mxu0
    %v1939 = vadd.f32 0.0, %v1938
    %1940 = vdwg.mxu0
    %1941 = vmatpush.msra.mxu0 %v601
    %1942 = vmatpush.msra.mxu0 %v597
    %1943 = vmatpush.msra.mxu0 %v593
    %1944 = vmatpush.msra.mxu0 %v589
    %1945 = vmatpush.msra.mxu0 %v585
    %1946 = vmatpush.msra.mxu0 %v581
    %1947 = vmatpush.msra.mxu0 %v577
    %1948 = vmatpush.msra.mxu0 %v573
    %1949 = vmatpush.msra.mxu0 %v569
    %1950 = vmatpush.msra.mxu0 %v565
    %1951 = vmatpush.msra.mxu0 %v561
    %1952 = vmatpush.msra.mxu0 %v557
    %1953 = vmatpush.msra.mxu0 %v553
    %1954 = vmatpush.msra.mxu0 %v549
    %1955 = vmatpush.msra.mxu0 %v545
    %1956 = vmatpush.msra.mxu0 %v541
    %1957 = vmatmul.f32.gmra.mxu0 %v1828
    %v1958 = vpop.f32.mrf.mxu0
    %v1959 = vadd.f32 0.0, %v1958
    %1960 = vdwg.mxu0
    %1961 = vmatpush.msra.mxu0 %v602
    %1962 = vmatpush.msra.mxu0 %v598
    %1963 = vmatpush.msra.mxu0 %v594
    %1964 = vmatpush.msra.mxu0 %v590
    %1965 = vmatpush.msra.mxu0 %v586
    %1966 = vmatpush.msra.mxu0 %v582
    %1967 = vmatpush.msra.mxu0 %v578
    %1968 = vmatpush.msra.mxu0 %v574
    %1969 = vmatpush.msra.mxu0 %v570
    %1970 = vmatpush.msra.mxu0 %v566
    %1971 = vmatpush.msra.mxu0 %v562
    %1972 = vmatpush.msra.mxu0 %v558
    %1973 = vmatpush.msra.mxu0 %v554
    %1974 = vmatpush.msra.mxu0 %v550
    %1975 = vmatpush.msra.mxu0 %v546
    %1976 = vmatpush.msra.mxu0 %v542
    %1977 = vmatmul.f32.gmra.mxu0 %v1828
    %v1978 = vpop.f32.mrf.mxu0
    %v1979 = vadd.f32 0.0, %v1978
    %1980 = vdwg.mxu0
    %v1981 = vadd.f32 %v1897, %v1919
    %v1982 = vadd.f32 %v1898, %v1939
    %v1983 = vadd.f32 %v1899, %v1959
    %v1984 = vadd.f32 %v1900, %v1979
    %s1985 = scalar_lea.vmem [#allocation3], 96
    %v1986 = vld [vmem:[%s1985] sm:$0xff]
    %v1987 = vld [vmem:[%s1985 + $0x8] sm:$0xff]
    %v1988 = vld [vmem:[%s1985 + $0x10] sm:$0xff]
    %v1989 = vld [vmem:[%s1985 + $0x18] sm:$0xff]
    %1990 = vmatpush.msra.mxu0 %v663
    %1991 = vmatpush.msra.mxu0 %v659
    %1992 = vmatpush.msra.mxu0 %v655
    %1993 = vmatpush.msra.mxu0 %v651
    %1994 = vmatpush.msra.mxu0 %v647
    %1995 = vmatpush.msra.mxu0 %v643
    %1996 = vmatpush.msra.mxu0 %v639
    %1997 = vmatpush.msra.mxu0 %v635
    %1998 = vmatpush.msra.mxu0 %v631
    %1999 = vmatpush.msra.mxu0 %v627
    %2000 = vmatpush.msra.mxu0 %v623
    %2001 = vmatpush.msra.mxu0 %v619
    %2002 = vmatpush.msra.mxu0 %v615
    %2003 = vmatpush.msra.mxu0 %v611
    %2004 = vmatpush.msra.mxu0 %v607
    %2005 = vmatpush.msra.mxu0 %v603
    %2006 = vmatmul.f32.gmra.mxu0 %v1891
    %v2007 = vpop.f32.mrf.mxu0
    %v2008 = vadd.f32 0.0, %v2007
    %2009 = vdwg.mxu0
    %2010 = vmatpush.msra.mxu0 %v664
    %2011 = vmatpush.msra.mxu0 %v660
    %2012 = vmatpush.msra.mxu0 %v656
    %2013 = vmatpush.msra.mxu0 %v652
    %2014 = vmatpush.msra.mxu0 %v648
    %2015 = vmatpush.msra.mxu0 %v644
    %2016 = vmatpush.msra.mxu0 %v640
    %2017 = vmatpush.msra.mxu0 %v636
    %2018 = vmatpush.msra.mxu0 %v632
    %2019 = vmatpush.msra.mxu0 %v628
    %2020 = vmatpush.msra.mxu0 %v624
    %2021 = vmatpush.msra.mxu0 %v620
    %2022 = vmatpush.msra.mxu0 %v616
    %2023 = vmatpush.msra.mxu0 %v612
    %2024 = vmatpush.msra.mxu0 %v608
    %2025 = vmatpush.msra.mxu0 %v604
    %2026 = vmatmul.f32.gmra.mxu0 %v1891
    %v2027 = vpop.f32.mrf.mxu0
    %v2028 = vadd.f32 0.0, %v2027
    %2029 = vdwg.mxu0
    %2030 = vmatpush.msra.mxu0 %v665
    %2031 = vmatpush.msra.mxu0 %v661
    %2032 = vmatpush.msra.mxu0 %v657
    %2033 = vmatpush.msra.mxu0 %v653
    %2034 = vmatpush.msra.mxu0 %v649
    %2035 = vmatpush.msra.mxu0 %v645
    %2036 = vmatpush.msra.mxu0 %v641
    %2037 = vmatpush.msra.mxu0 %v637
    %2038 = vmatpush.msra.mxu0 %v633
    %2039 = vmatpush.msra.mxu0 %v629
    %2040 = vmatpush.msra.mxu0 %v625
    %2041 = vmatpush.msra.mxu0 %v621
    %2042 = vmatpush.msra.mxu0 %v617
    %2043 = vmatpush.msra.mxu0 %v613
    %2044 = vmatpush.msra.mxu0 %v609
    %2045 = vmatpush.msra.mxu0 %v605
    %2046 = vmatmul.f32.gmra.mxu0 %v1891
    %v2047 = vpop.f32.mrf.mxu0
    %v2048 = vadd.f32 0.0, %v2047
    %2049 = vdwg.mxu0
    %2050 = vmatpush.msra.mxu0 %v666
    %2051 = vmatpush.msra.mxu0 %v662
    %2052 = vmatpush.msra.mxu0 %v658
    %2053 = vmatpush.msra.mxu0 %v654
    %2054 = vmatpush.msra.mxu0 %v650
    %2055 = vmatpush.msra.mxu0 %v646
    %2056 = vmatpush.msra.mxu0 %v642
    %2057 = vmatpush.msra.mxu0 %v638
    %2058 = vmatpush.msra.mxu0 %v634
    %2059 = vmatpush.msra.mxu0 %v630
    %2060 = vmatpush.msra.mxu0 %v626
    %2061 = vmatpush.msra.mxu0 %v622
    %2062 = vmatpush.msra.mxu0 %v618
    %2063 = vmatpush.msra.mxu0 %v614
    %2064 = vmatpush.msra.mxu0 %v610
    %2065 = vmatpush.msra.mxu0 %v606
    %2066 = vmatmul.f32.gmra.mxu0 %v1891
    %v2067 = vpop.f32.mrf.mxu0
    %v2068 = vadd.f32 0.0, %v2067
    %2069 = vdwg.mxu0
    %v2070 = vadd.f32 %v1986, %v2008
    %v2071 = vadd.f32 %v1987, %v2028
    %v2072 = vadd.f32 %v1988, %v2048
    %v2073 = vadd.f32 %v1989, %v2068
    %v2074 = vxor.u32 %v1981, 2147483648
    %v2075 = vmul.f32 %v2074, 1.442695
    %v2076 = vpow.pop %v2075
    %v2077 = vadd.f32 %v2076, 1.0
    %v2078 = vrcp.pop %v2077
    %v2079 = vmul.f32 %v2077, %v2078
    %v2080 = vsub.f32 1.0, %v2079
    %v2081 = vmul.f32 %v2078, %v2080
    %v2082 = vadd.f32 %v2078, %v2081
    %vm2083 = vweird.f32 %v2077
    %vm2084 = vweird.f32 %v2078
    %vm2085 = vmor %vm2083, %vm2084
    %v2086 = vsel %vm2085, %v2078, %v2082
    %v2087 = vand.u32 2147483647, %v2077
    %vm2088 = vcmp.eq.f32.partialorder %v2087, 8.507059e+37
    %v2089 = vand.u32 %v2077, 2147483648
    %v2090 = vor.u32 1.1754944e-38, %v2089
    %v2091 = vsel %vm2088, %v2090, %v2086
    %v2092 = vmul.f32 1.0, %v2091
    %v2093 = vxor.u32 %v1982, 2147483648
    %v2094 = vmul.f32 %v2093, 1.442695
    %v2095 = vpow.pop %v2094
    %v2096 = vadd.f32 %v2095, 1.0
    %v2097 = vrcp.pop %v2096
    %v2098 = vmul.f32 %v2096, %v2097
    %v2099 = vsub.f32 1.0, %v2098
    %v2100 = vmul.f32 %v2097, %v2099
    %v2101 = vadd.f32 %v2097, %v2100
    %vm2102 = vweird.f32 %v2096
    %vm2103 = vweird.f32 %v2097
    %vm2104 = vmor %vm2102, %vm2103
    %v2105 = vsel %vm2104, %v2097, %v2101
    %v2106 = vand.u32 2147483647, %v2096
    %vm2107 = vcmp.eq.f32.partialorder %v2106, 8.507059e+37
    %v2108 = vand.u32 %v2096, 2147483648
    %v2109 = vor.u32 1.1754944e-38, %v2108
    %v2110 = vsel %vm2107, %v2109, %v2105
    %v2111 = vmul.f32 1.0, %v2110
    %v2112 = vtanh.pop %v1983
    %v2113 = vxor.u32 %v1984, 2147483648
    %v2114 = vmul.f32 %v2113, 1.442695
    %v2115 = vpow.pop %v2114
    %v2116 = vadd.f32 %v2115, 1.0
    %v2117 = vrcp.pop %v2116
    %v2118 = vmul.f32 %v2116, %v2117
    %v2119 = vsub.f32 1.0, %v2118
    %v2120 = vmul.f32 %v2117, %v2119
    %v2121 = vadd.f32 %v2117, %v2120
    %vm2122 = vweird.f32 %v2116
    %vm2123 = vweird.f32 %v2117
    %vm2124 = vmor %vm2122, %vm2123
    %v2125 = vsel %vm2124, %v2117, %v2121
    %v2126 = vand.u32 2147483647, %v2116
    %vm2127 = vcmp.eq.f32.partialorder %v2126, 8.507059e+37
    %v2128 = vand.u32 %v2116, 2147483648
    %v2129 = vor.u32 1.1754944e-38, %v2128
    %v2130 = vsel %vm2127, %v2129, %v2125
    %v2131 = vmul.f32 1.0, %v2130
    %v2132 = vmul.f32 %v2111, %v1826
    %v2133 = vmul.f32 %v2092, %v2112
    %v2134 = vadd.f32 %v2132, %v2133
    %v2135 = vtanh.pop %v2134
    %v2136 = vmul.f32 %v2131, %v2135
    %v2137 = vxor.u32 %v2070, 2147483648
    %v2138 = vmul.f32 %v2137, 1.442695
    %v2139 = vpow.pop %v2138
    %v2140 = vadd.f32 %v2139, 1.0
    %v2141 = vrcp.pop %v2140
    %v2142 = vmul.f32 %v2140, %v2141
    %v2143 = vsub.f32 1.0, %v2142
    %v2144 = vmul.f32 %v2141, %v2143
    %v2145 = vadd.f32 %v2141, %v2144
    %vm2146 = vweird.f32 %v2140
    %vm2147 = vweird.f32 %v2141
    %vm2148 = vmor %vm2146, %vm2147
    %v2149 = vsel %vm2148, %v2141, %v2145
    %v2150 = vand.u32 2147483647, %v2140
    %vm2151 = vcmp.eq.f32.partialorder %v2150, 8.507059e+37
    %v2152 = vand.u32 %v2140, 2147483648
    %v2153 = vor.u32 1.1754944e-38, %v2152
    %v2154 = vsel %vm2151, %v2153, %v2149
    %v2155 = vmul.f32 1.0, %v2154
    %v2156 = vxor.u32 %v2071, 2147483648
    %v2157 = vmul.f32 %v2156, 1.442695
    %v2158 = vpow.pop %v2157
    %v2159 = vadd.f32 %v2158, 1.0
    %v2160 = vrcp.pop %v2159
    %v2161 = vmul.f32 %v2159, %v2160
    %v2162 = vsub.f32 1.0, %v2161
    %v2163 = vmul.f32 %v2160, %v2162
    %v2164 = vadd.f32 %v2160, %v2163
    %vm2165 = vweird.f32 %v2159
    %vm2166 = vweird.f32 %v2160
    %vm2167 = vmor %vm2165, %vm2166
    %v2168 = vsel %vm2167, %v2160, %v2164
    %v2169 = vand.u32 2147483647, %v2159
    %vm2170 = vcmp.eq.f32.partialorder %v2169, 8.507059e+37
    %v2171 = vand.u32 %v2159, 2147483648
    %v2172 = vor.u32 1.1754944e-38, %v2171
    %v2173 = vsel %vm2170, %v2172, %v2168
    %v2174 = vmul.f32 1.0, %v2173
    %v2175 = vtanh.pop %v2072
    %v2176 = vxor.u32 %v2073, 2147483648
    %v2177 = vmul.f32 %v2176, 1.442695
    %v2178 = vpow.pop %v2177
    %v2179 = vadd.f32 %v2178, 1.0
    %v2180 = vrcp.pop %v2179
    %v2181 = vmul.f32 %v2179, %v2180
    %v2182 = vsub.f32 1.0, %v2181
    %v2183 = vmul.f32 %v2180, %v2182
    %v2184 = vadd.f32 %v2180, %v2183
    %vm2185 = vweird.f32 %v2179
    %vm2186 = vweird.f32 %v2180
    %vm2187 = vmor %vm2185, %vm2186
    %v2188 = vsel %vm2187, %v2180, %v2184
    %v2189 = vand.u32 2147483647, %v2179
    %vm2190 = vcmp.eq.f32.partialorder %v2189, 8.507059e+37
    %v2191 = vand.u32 %v2179, 2147483648
    %v2192 = vor.u32 1.1754944e-38, %v2191
    %v2193 = vsel %vm2190, %v2192, %v2188
    %v2194 = vmul.f32 1.0, %v2193
    %v2195 = vmul.f32 %v2174, %v1889
    %v2196 = vmul.f32 %v2155, %v2175
    %v2197 = vadd.f32 %v2195, %v2196
    %v2198 = vtanh.pop %v2197
    %v2199 = vmul.f32 %v2194, %v2198
    %v2200 = vadd.f32 %v1892, %v2136
    %v2201 = vmax.f32 %v1893, %v2136
    %v2202 = vadd.f32 %v1894, %v2199
    %v2203 = vmax.f32 %v1895, %v2199
    %s2204 = scalar_lea.vmem [#allocation2], 160
    %v2205 = vld [vmem:[%s2204] sm:$0xff]
    %v2206 = vld [vmem:[%s2204 + $0x8] sm:$0xff]
    %v2207 = vld [vmem:[%s2204 + $0x10] sm:$0xff]
    %v2208 = vld [vmem:[%s2204 + $0x18] sm:$0xff]
    %2209 = vmatpush.msra.mxu0 %v599
    %2210 = vmatpush.msra.mxu0 %v595
    %2211 = vmatpush.msra.mxu0 %v591
    %2212 = vmatpush.msra.mxu0 %v587
    %2213 = vmatpush.msra.mxu0 %v583
    %2214 = vmatpush.msra.mxu0 %v579
    %2215 = vmatpush.msra.mxu0 %v575
    %2216 = vmatpush.msra.mxu0 %v571
    %2217 = vmatpush.msra.mxu0 %v567
    %2218 = vmatpush.msra.mxu0 %v563
    %2219 = vmatpush.msra.mxu0 %v559
    %2220 = vmatpush.msra.mxu0 %v555
    %2221 = vmatpush.msra.mxu0 %v551
    %2222 = vmatpush.msra.mxu0 %v547
    %2223 = vmatpush.msra.mxu0 %v543
    %2224 = vmatpush.msra.mxu0 %v539
    %2225 = vmatmul.f32.gmra.mxu0 %v2136
    %v2226 = vpop.f32.mrf.mxu0
    %v2227 = vadd.f32 0.0, %v2226
    %2228 = vdwg.mxu0
    %2229 = vmatpush.msra.mxu0 %v600
    %2230 = vmatpush.msra.mxu0 %v596
    %2231 = vmatpush.msra.mxu0 %v592
    %2232 = vmatpush.msra.mxu0 %v588
    %2233 = vmatpush.msra.mxu0 %v584
    %2234 = vmatpush.msra.mxu0 %v580
    %2235 = vmatpush.msra.mxu0 %v576
    %2236 = vmatpush.msra.mxu0 %v572
    %2237 = vmatpush.msra.mxu0 %v568
    %2238 = vmatpush.msra.mxu0 %v564
    %2239 = vmatpush.msra.mxu0 %v560
    %2240 = vmatpush.msra.mxu0 %v556
    %2241 = vmatpush.msra.mxu0 %v552
    %2242 = vmatpush.msra.mxu0 %v548
    %2243 = vmatpush.msra.mxu0 %v544
    %2244 = vmatpush.msra.mxu0 %v540
    %2245 = vmatmul.f32.gmra.mxu0 %v2136
    %v2246 = vpop.f32.mrf.mxu0
    %v2247 = vadd.f32 0.0, %v2246
    %2248 = vdwg.mxu0
    %2249 = vmatpush.msra.mxu0 %v601
    %2250 = vmatpush.msra.mxu0 %v597
    %2251 = vmatpush.msra.mxu0 %v593
    %2252 = vmatpush.msra.mxu0 %v589
    %2253 = vmatpush.msra.mxu0 %v585
    %2254 = vmatpush.msra.mxu0 %v581
    %2255 = vmatpush.msra.mxu0 %v577
    %2256 = vmatpush.msra.mxu0 %v573
    %2257 = vmatpush.msra.mxu0 %v569
    %2258 = vmatpush.msra.mxu0 %v565
    %2259 = vmatpush.msra.mxu0 %v561
    %2260 = vmatpush.msra.mxu0 %v557
    %2261 = vmatpush.msra.mxu0 %v553
    %2262 = vmatpush.msra.mxu0 %v549
    %2263 = vmatpush.msra.mxu0 %v545
    %2264 = vmatpush.msra.mxu0 %v541
    %2265 = vmatmul.f32.gmra.mxu0 %v2136
    %v2266 = vpop.f32.mrf.mxu0
    %v2267 = vadd.f32 0.0, %v2266
    %2268 = vdwg.mxu0
    %2269 = vmatpush.msra.mxu0 %v602
    %2270 = vmatpush.msra.mxu0 %v598
    %2271 = vmatpush.msra.mxu0 %v594
    %2272 = vmatpush.msra.mxu0 %v590
    %2273 = vmatpush.msra.mxu0 %v586
    %2274 = vmatpush.msra.mxu0 %v582
    %2275 = vmatpush.msra.mxu0 %v578
    %2276 = vmatpush.msra.mxu0 %v574
    %2277 = vmatpush.msra.mxu0 %v570
    %2278 = vmatpush.msra.mxu0 %v566
    %2279 = vmatpush.msra.mxu0 %v562
    %2280 = vmatpush.msra.mxu0 %v558
    %2281 = vmatpush.msra.mxu0 %v554
    %2282 = vmatpush.msra.mxu0 %v550
    %2283 = vmatpush.msra.mxu0 %v546
    %2284 = vmatpush.msra.mxu0 %v542
    %2285 = vmatmul.f32.gmra.mxu0 %v2136
    %v2286 = vpop.f32.mrf.mxu0
    %v2287 = vadd.f32 0.0, %v2286
    %2288 = vdwg.mxu0
    %v2289 = vadd.f32 %v2205, %v2227
    %v2290 = vadd.f32 %v2206, %v2247
    %v2291 = vadd.f32 %v2207, %v2267
    %v2292 = vadd.f32 %v2208, %v2287
    %s2293 = scalar_lea.vmem [#allocation3], 64
    %v2294 = vld [vmem:[%s2293] sm:$0xff]
    %v2295 = vld [vmem:[%s2293 + $0x8] sm:$0xff]
    %v2296 = vld [vmem:[%s2293 + $0x10] sm:$0xff]
    %v2297 = vld [vmem:[%s2293 + $0x18] sm:$0xff]
    %2298 = vmatpush.msra.mxu0 %v663
    %2299 = vmatpush.msra.mxu0 %v659
    %2300 = vmatpush.msra.mxu0 %v655
    %2301 = vmatpush.msra.mxu0 %v651
    %2302 = vmatpush.msra.mxu0 %v647
    %2303 = vmatpush.msra.mxu0 %v643
    %2304 = vmatpush.msra.mxu0 %v639
    %2305 = vmatpush.msra.mxu0 %v635
    %2306 = vmatpush.msra.mxu0 %v631
    %2307 = vmatpush.msra.mxu0 %v627
    %2308 = vmatpush.msra.mxu0 %v623
    %2309 = vmatpush.msra.mxu0 %v619
    %2310 = vmatpush.msra.mxu0 %v615
    %2311 = vmatpush.msra.mxu0 %v611
    %2312 = vmatpush.msra.mxu0 %v607
    %2313 = vmatpush.msra.mxu0 %v603
    %2314 = vmatmul.f32.gmra.mxu0 %v2199
    %v2315 = vpop.f32.mrf.mxu0
    %v2316 = vadd.f32 0.0, %v2315
    %2317 = vdwg.mxu0
    %2318 = vmatpush.msra.mxu0 %v664
    %2319 = vmatpush.msra.mxu0 %v660
    %2320 = vmatpush.msra.mxu0 %v656
    %2321 = vmatpush.msra.mxu0 %v652
    %2322 = vmatpush.msra.mxu0 %v648
    %2323 = vmatpush.msra.mxu0 %v644
    %2324 = vmatpush.msra.mxu0 %v640
    %2325 = vmatpush.msra.mxu0 %v636
    %2326 = vmatpush.msra.mxu0 %v632
    %2327 = vmatpush.msra.mxu0 %v628
    %2328 = vmatpush.msra.mxu0 %v624
    %2329 = vmatpush.msra.mxu0 %v620
    %2330 = vmatpush.msra.mxu0 %v616
    %2331 = vmatpush.msra.mxu0 %v612
    %2332 = vmatpush.msra.mxu0 %v608
    %2333 = vmatpush.msra.mxu0 %v604
    %2334 = vmatmul.f32.gmra.mxu0 %v2199
    %v2335 = vpop.f32.mrf.mxu0
    %v2336 = vadd.f32 0.0, %v2335
    %2337 = vdwg.mxu0
    %2338 = vmatpush.msra.mxu0 %v665
    %2339 = vmatpush.msra.mxu0 %v661
    %2340 = vmatpush.msra.mxu0 %v657
    %2341 = vmatpush.msra.mxu0 %v653
    %2342 = vmatpush.msra.mxu0 %v649
    %2343 = vmatpush.msra.mxu0 %v645
    %2344 = vmatpush.msra.mxu0 %v641
    %2345 = vmatpush.msra.mxu0 %v637
    %2346 = vmatpush.msra.mxu0 %v633
    %2347 = vmatpush.msra.mxu0 %v629
    %2348 = vmatpush.msra.mxu0 %v625
    %2349 = vmatpush.msra.mxu0 %v621
    %2350 = vmatpush.msra.mxu0 %v617
    %2351 = vmatpush.msra.mxu0 %v613
    %2352 = vmatpush.msra.mxu0 %v609
    %2353 = vmatpush.msra.mxu0 %v605
    %2354 = vmatmul.f32.gmra.mxu0 %v2199
    %v2355 = vpop.f32.mrf.mxu0
    %v2356 = vadd.f32 0.0, %v2355
    %2357 = vdwg.mxu0
    %2358 = vmatpush.msra.mxu0 %v666
    %2359 = vmatpush.msra.mxu0 %v662
    %2360 = vmatpush.msra.mxu0 %v658
    %2361 = vmatpush.msra.mxu0 %v654
    %2362 = vmatpush.msra.mxu0 %v650
    %2363 = vmatpush.msra.mxu0 %v646
    %2364 = vmatpush.msra.mxu0 %v642
    %2365 = vmatpush.msra.mxu0 %v638
    %2366 = vmatpush.msra.mxu0 %v634
    %2367 = vmatpush.msra.mxu0 %v630
    %2368 = vmatpush.msra.mxu0 %v626
    %2369 = vmatpush.msra.mxu0 %v622
    %2370 = vmatpush.msra.mxu0 %v618
    %2371 = vmatpush.msra.mxu0 %v614
    %2372 = vmatpush.msra.mxu0 %v610
    %2373 = vmatpush.msra.mxu0 %v606
    %2374 = vmatmul.f32.gmra.mxu0 %v2199
    %v2375 = vpop.f32.mrf.mxu0
    %v2376 = vadd.f32 0.0, %v2375
    %2377 = vdwg.mxu0
    %v2378 = vadd.f32 %v2294, %v2316
    %v2379 = vadd.f32 %v2295, %v2336
    %v2380 = vadd.f32 %v2296, %v2356
    %v2381 = vadd.f32 %v2297, %v2376
    %v2382 = vxor.u32 %v2289, 2147483648
    %v2383 = vmul.f32 %v2382, 1.442695
    %v2384 = vpow.pop %v2383
    %v2385 = vadd.f32 %v2384, 1.0
    %v2386 = vrcp.pop %v2385
    %v2387 = vmul.f32 %v2385, %v2386
    %v2388 = vsub.f32 1.0, %v2387
    %v2389 = vmul.f32 %v2386, %v2388
    %v2390 = vadd.f32 %v2386, %v2389
    %vm2391 = vweird.f32 %v2385
    %vm2392 = vweird.f32 %v2386
    %vm2393 = vmor %vm2391, %vm2392
    %v2394 = vsel %vm2393, %v2386, %v2390
    %v2395 = vand.u32 2147483647, %v2385
    %vm2396 = vcmp.eq.f32.partialorder %v2395, 8.507059e+37
    %v2397 = vand.u32 %v2385, 2147483648
    %v2398 = vor.u32 1.1754944e-38, %v2397
    %v2399 = vsel %vm2396, %v2398, %v2394
    %v2400 = vmul.f32 1.0, %v2399
    %v2401 = vxor.u32 %v2290, 2147483648
    %v2402 = vmul.f32 %v2401, 1.442695
    %v2403 = vpow.pop %v2402
    %v2404 = vadd.f32 %v2403, 1.0
    %v2405 = vrcp.pop %v2404
    %v2406 = vmul.f32 %v2404, %v2405
    %v2407 = vsub.f32 1.0, %v2406
    %v2408 = vmul.f32 %v2405, %v2407
    %v2409 = vadd.f32 %v2405, %v2408
    %vm2410 = vweird.f32 %v2404
    %vm2411 = vweird.f32 %v2405
    %vm2412 = vmor %vm2410, %vm2411
    %v2413 = vsel %vm2412, %v2405, %v2409
    %v2414 = vand.u32 2147483647, %v2404
    %vm2415 = vcmp.eq.f32.partialorder %v2414, 8.507059e+37
    %v2416 = vand.u32 %v2404, 2147483648
    %v2417 = vor.u32 1.1754944e-38, %v2416
    %v2418 = vsel %vm2415, %v2417, %v2413
    %v2419 = vmul.f32 1.0, %v2418
    %v2420 = vtanh.pop %v2291
    %v2421 = vxor.u32 %v2292, 2147483648
    %v2422 = vmul.f32 %v2421, 1.442695
    %v2423 = vpow.pop %v2422
    %v2424 = vadd.f32 %v2423, 1.0
    %v2425 = vrcp.pop %v2424
    %v2426 = vmul.f32 %v2424, %v2425
    %v2427 = vsub.f32 1.0, %v2426
    %v2428 = vmul.f32 %v2425, %v2427
    %v2429 = vadd.f32 %v2425, %v2428
    %vm2430 = vweird.f32 %v2424
    %vm2431 = vweird.f32 %v2425
    %vm2432 = vmor %vm2430, %vm2431
    %v2433 = vsel %vm2432, %v2425, %v2429
    %v2434 = vand.u32 2147483647, %v2424
    %vm2435 = vcmp.eq.f32.partialorder %v2434, 8.507059e+37
    %v2436 = vand.u32 %v2424, 2147483648
    %v2437 = vor.u32 1.1754944e-38, %v2436
    %v2438 = vsel %vm2435, %v2437, %v2433
    %v2439 = vmul.f32 1.0, %v2438
    %v2440 = vmul.f32 %v2419, %v2134
    %v2441 = vmul.f32 %v2400, %v2420
    %v2442 = vadd.f32 %v2440, %v2441
    %v2443 = vtanh.pop %v2442
    %v2444 = vmul.f32 %v2439, %v2443
    %v2445 = vxor.u32 %v2378, 2147483648
    %v2446 = vmul.f32 %v2445, 1.442695
    %v2447 = vpow.pop %v2446
    %v2448 = vadd.f32 %v2447, 1.0
    %v2449 = vrcp.pop %v2448
    %v2450 = vmul.f32 %v2448, %v2449
    %v2451 = vsub.f32 1.0, %v2450
    %v2452 = vmul.f32 %v2449, %v2451
    %v2453 = vadd.f32 %v2449, %v2452
    %vm2454 = vweird.f32 %v2448
    %vm2455 = vweird.f32 %v2449
    %vm2456 = vmor %vm2454, %vm2455
    %v2457 = vsel %vm2456, %v2449, %v2453
    %v2458 = vand.u32 2147483647, %v2448
    %vm2459 = vcmp.eq.f32.partialorder %v2458, 8.507059e+37
    %v2460 = vand.u32 %v2448, 2147483648
    %v2461 = vor.u32 1.1754944e-38, %v2460
    %v2462 = vsel %vm2459, %v2461, %v2457
    %v2463 = vmul.f32 1.0, %v2462
    %v2464 = vxor.u32 %v2379, 2147483648
    %v2465 = vmul.f32 %v2464, 1.442695
    %v2466 = vpow.pop %v2465
    %v2467 = vadd.f32 %v2466, 1.0
    %v2468 = vrcp.pop %v2467
    %v2469 = vmul.f32 %v2467, %v2468
    %v2470 = vsub.f32 1.0, %v2469
    %v2471 = vmul.f32 %v2468, %v2470
    %v2472 = vadd.f32 %v2468, %v2471
    %vm2473 = vweird.f32 %v2467
    %vm2474 = vweird.f32 %v2468
    %vm2475 = vmor %vm2473, %vm2474
    %v2476 = vsel %vm2475, %v2468, %v2472
    %v2477 = vand.u32 2147483647, %v2467
    %vm2478 = vcmp.eq.f32.partialorder %v2477, 8.507059e+37
    %v2479 = vand.u32 %v2467, 2147483648
    %v2480 = vor.u32 1.1754944e-38, %v2479
    %v2481 = vsel %vm2478, %v2480, %v2476
    %v2482 = vmul.f32 1.0, %v2481
    %v2483 = vtanh.pop %v2380
    %v2484 = vxor.u32 %v2381, 2147483648
    %v2485 = vmul.f32 %v2484, 1.442695
    %v2486 = vpow.pop %v2485
    %v2487 = vadd.f32 %v2486, 1.0
    %v2488 = vrcp.pop %v2487
    %v2489 = vmul.f32 %v2487, %v2488
    %v2490 = vsub.f32 1.0, %v2489
    %v2491 = vmul.f32 %v2488, %v2490
    %v2492 = vadd.f32 %v2488, %v2491
    %vm2493 = vweird.f32 %v2487
    %vm2494 = vweird.f32 %v2488
    %vm2495 = vmor %vm2493, %vm2494
    %v2496 = vsel %vm2495, %v2488, %v2492
    %v2497 = vand.u32 2147483647, %v2487
    %vm2498 = vcmp.eq.f32.partialorder %v2497, 8.507059e+37
    %v2499 = vand.u32 %v2487, 2147483648
    %v2500 = vor.u32 1.1754944e-38, %v2499
    %v2501 = vsel %vm2498, %v2500, %v2496
    %v2502 = vmul.f32 1.0, %v2501
    %v2503 = vmul.f32 %v2482, %v2197
    %v2504 = vmul.f32 %v2463, %v2483
    %v2505 = vadd.f32 %v2503, %v2504
    %v2506 = vtanh.pop %v2505
    %v2507 = vmul.f32 %v2502, %v2506
    %v2508 = vadd.f32 %v2200, %v2444
    %v2509 = vmax.f32 %v2201, %v2444
    %v2510 = vadd.f32 %v2202, %v2507
    %v2511 = vmax.f32 %v2203, %v2507
    %s2512 = scalar_lea.vmem [#allocation2], 192
    %v2513 = vld [vmem:[%s2512] sm:$0xff]
    %v2514 = vld [vmem:[%s2512 + $0x8] sm:$0xff]
    %v2515 = vld [vmem:[%s2512 + $0x10] sm:$0xff]
    %v2516 = vld [vmem:[%s2512 + $0x18] sm:$0xff]
    %2517 = vmatpush.msra.mxu0 %v599
    %2518 = vmatpush.msra.mxu0 %v595
    %2519 = vmatpush.msra.mxu0 %v591
    %2520 = vmatpush.msra.mxu0 %v587
    %2521 = vmatpush.msra.mxu0 %v583
    %2522 = vmatpush.msra.mxu0 %v579
    %2523 = vmatpush.msra.mxu0 %v575
    %2524 = vmatpush.msra.mxu0 %v571
    %2525 = vmatpush.msra.mxu0 %v567
    %2526 = vmatpush.msra.mxu0 %v563
    %2527 = vmatpush.msra.mxu0 %v559
    %2528 = vmatpush.msra.mxu0 %v555
    %2529 = vmatpush.msra.mxu0 %v551
    %2530 = vmatpush.msra.mxu0 %v547
    %2531 = vmatpush.msra.mxu0 %v543
    %2532 = vmatpush.msra.mxu0 %v539
    %2533 = vmatmul.f32.gmra.mxu0 %v2444
    %v2534 = vpop.f32.mrf.mxu0
    %v2535 = vadd.f32 0.0, %v2534
    %2536 = vdwg.mxu0
    %2537 = vmatpush.msra.mxu0 %v600
    %2538 = vmatpush.msra.mxu0 %v596
    %2539 = vmatpush.msra.mxu0 %v592
    %2540 = vmatpush.msra.mxu0 %v588
    %2541 = vmatpush.msra.mxu0 %v584
    %2542 = vmatpush.msra.mxu0 %v580
    %2543 = vmatpush.msra.mxu0 %v576
    %2544 = vmatpush.msra.mxu0 %v572
    %2545 = vmatpush.msra.mxu0 %v568
    %2546 = vmatpush.msra.mxu0 %v564
    %2547 = vmatpush.msra.mxu0 %v560
    %2548 = vmatpush.msra.mxu0 %v556
    %2549 = vmatpush.msra.mxu0 %v552
    %2550 = vmatpush.msra.mxu0 %v548
    %2551 = vmatpush.msra.mxu0 %v544
    %2552 = vmatpush.msra.mxu0 %v540
    %2553 = vmatmul.f32.gmra.mxu0 %v2444
    %v2554 = vpop.f32.mrf.mxu0
    %v2555 = vadd.f32 0.0, %v2554
    %2556 = vdwg.mxu0
    %2557 = vmatpush.msra.mxu0 %v601
    %2558 = vmatpush.msra.mxu0 %v597
    %2559 = vmatpush.msra.mxu0 %v593
    %2560 = vmatpush.msra.mxu0 %v589
    %2561 = vmatpush.msra.mxu0 %v585
    %2562 = vmatpush.msra.mxu0 %v581
    %2563 = vmatpush.msra.mxu0 %v577
    %2564 = vmatpush.msra.mxu0 %v573
    %2565 = vmatpush.msra.mxu0 %v569
    %2566 = vmatpush.msra.mxu0 %v565
    %2567 = vmatpush.msra.mxu0 %v561
    %2568 = vmatpush.msra.mxu0 %v557
    %2569 = vmatpush.msra.mxu0 %v553
    %2570 = vmatpush.msra.mxu0 %v549
    %2571 = vmatpush.msra.mxu0 %v545
    %2572 = vmatpush.msra.mxu0 %v541
    %2573 = vmatmul.f32.gmra.mxu0 %v2444
    %v2574 = vpop.f32.mrf.mxu0
    %v2575 = vadd.f32 0.0, %v2574
    %2576 = vdwg.mxu0
    %2577 = vmatpush.msra.mxu0 %v602
    %2578 = vmatpush.msra.mxu0 %v598
    %2579 = vmatpush.msra.mxu0 %v594
    %2580 = vmatpush.msra.mxu0 %v590
    %2581 = vmatpush.msra.mxu0 %v586
    %2582 = vmatpush.msra.mxu0 %v582
    %2583 = vmatpush.msra.mxu0 %v578
    %2584 = vmatpush.msra.mxu0 %v574
    %2585 = vmatpush.msra.mxu0 %v570
    %2586 = vmatpush.msra.mxu0 %v566
    %2587 = vmatpush.msra.mxu0 %v562
    %2588 = vmatpush.msra.mxu0 %v558
    %2589 = vmatpush.msra.mxu0 %v554
    %2590 = vmatpush.msra.mxu0 %v550
    %2591 = vmatpush.msra.mxu0 %v546
    %2592 = vmatpush.msra.mxu0 %v542
    %2593 = vmatmul.f32.gmra.mxu0 %v2444
    %v2594 = vpop.f32.mrf.mxu0
    %v2595 = vadd.f32 0.0, %v2594
    %2596 = vdwg.mxu0
    %v2597 = vadd.f32 %v2513, %v2535
    %v2598 = vadd.f32 %v2514, %v2555
    %v2599 = vadd.f32 %v2515, %v2575
    %v2600 = vadd.f32 %v2516, %v2595
    %s2601 = scalar_lea.vmem [#allocation3], 32
    %v2602 = vld [vmem:[%s2601] sm:$0xff]
    %v2603 = vld [vmem:[%s2601 + $0x8] sm:$0xff]
    %v2604 = vld [vmem:[%s2601 + $0x10] sm:$0xff]
    %v2605 = vld [vmem:[%s2601 + $0x18] sm:$0xff]
    %2606 = vmatpush.msra.mxu0 %v663
    %2607 = vmatpush.msra.mxu0 %v659
    %2608 = vmatpush.msra.mxu0 %v655
    %2609 = vmatpush.msra.mxu0 %v651
    %2610 = vmatpush.msra.mxu0 %v647
    %2611 = vmatpush.msra.mxu0 %v643
    %2612 = vmatpush.msra.mxu0 %v639
    %2613 = vmatpush.msra.mxu0 %v635
    %2614 = vmatpush.msra.mxu0 %v631
    %2615 = vmatpush.msra.mxu0 %v627
    %2616 = vmatpush.msra.mxu0 %v623
    %2617 = vmatpush.msra.mxu0 %v619
    %2618 = vmatpush.msra.mxu0 %v615
    %2619 = vmatpush.msra.mxu0 %v611
    %2620 = vmatpush.msra.mxu0 %v607
    %2621 = vmatpush.msra.mxu0 %v603
    %2622 = vmatmul.f32.gmra.mxu0 %v2507
    %v2623 = vpop.f32.mrf.mxu0
    %v2624 = vadd.f32 0.0, %v2623
    %2625 = vdwg.mxu0
    %2626 = vmatpush.msra.mxu0 %v664
    %2627 = vmatpush.msra.mxu0 %v660
    %2628 = vmatpush.msra.mxu0 %v656
    %2629 = vmatpush.msra.mxu0 %v652
    %2630 = vmatpush.msra.mxu0 %v648
    %2631 = vmatpush.msra.mxu0 %v644
    %2632 = vmatpush.msra.mxu0 %v640
    %2633 = vmatpush.msra.mxu0 %v636
    %2634 = vmatpush.msra.mxu0 %v632
    %2635 = vmatpush.msra.mxu0 %v628
    %2636 = vmatpush.msra.mxu0 %v624
    %2637 = vmatpush.msra.mxu0 %v620
    %2638 = vmatpush.msra.mxu0 %v616
    %2639 = vmatpush.msra.mxu0 %v612
    %2640 = vmatpush.msra.mxu0 %v608
    %2641 = vmatpush.msra.mxu0 %v604
    %2642 = vmatmul.f32.gmra.mxu0 %v2507
    %v2643 = vpop.f32.mrf.mxu0
    %v2644 = vadd.f32 0.0, %v2643
    %2645 = vdwg.mxu0
    %2646 = vmatpush.msra.mxu0 %v665
    %2647 = vmatpush.msra.mxu0 %v661
    %2648 = vmatpush.msra.mxu0 %v657
    %2649 = vmatpush.msra.mxu0 %v653
    %2650 = vmatpush.msra.mxu0 %v649
    %2651 = vmatpush.msra.mxu0 %v645
    %2652 = vmatpush.msra.mxu0 %v641
    %2653 = vmatpush.msra.mxu0 %v637
    %2654 = vmatpush.msra.mxu0 %v633
    %2655 = vmatpush.msra.mxu0 %v629
    %2656 = vmatpush.msra.mxu0 %v625
    %2657 = vmatpush.msra.mxu0 %v621
    %2658 = vmatpush.msra.mxu0 %v617
    %2659 = vmatpush.msra.mxu0 %v613
    %2660 = vmatpush.msra.mxu0 %v609
    %2661 = vmatpush.msra.mxu0 %v605
    %2662 = vmatmul.f32.gmra.mxu0 %v2507
    %v2663 = vpop.f32.mrf.mxu0
    %v2664 = vadd.f32 0.0, %v2663
    %2665 = vdwg.mxu0
    %2666 = vmatpush.msra.mxu0 %v666
    %2667 = vmatpush.msra.mxu0 %v662
    %2668 = vmatpush.msra.mxu0 %v658
    %2669 = vmatpush.msra.mxu0 %v654
    %2670 = vmatpush.msra.mxu0 %v650
    %2671 = vmatpush.msra.mxu0 %v646
    %2672 = vmatpush.msra.mxu0 %v642
    %2673 = vmatpush.msra.mxu0 %v638
    %2674 = vmatpush.msra.mxu0 %v634
    %2675 = vmatpush.msra.mxu0 %v630
    %2676 = vmatpush.msra.mxu0 %v626
    %2677 = vmatpush.msra.mxu0 %v622
    %2678 = vmatpush.msra.mxu0 %v618
    %2679 = vmatpush.msra.mxu0 %v614
    %2680 = vmatpush.msra.mxu0 %v610
    %2681 = vmatpush.msra.mxu0 %v606
    %2682 = vmatmul.f32.gmra.mxu0 %v2507
    %v2683 = vpop.f32.mrf.mxu0
    %v2684 = vadd.f32 0.0, %v2683
    %2685 = vdwg.mxu0
    %v2686 = vadd.f32 %v2602, %v2624
    %v2687 = vadd.f32 %v2603, %v2644
    %v2688 = vadd.f32 %v2604, %v2664
    %v2689 = vadd.f32 %v2605, %v2684
    %v2690 = vxor.u32 %v2597, 2147483648
    %v2691 = vmul.f32 %v2690, 1.442695
    %v2692 = vpow.pop %v2691
    %v2693 = vadd.f32 %v2692, 1.0
    %v2694 = vrcp.pop %v2693
    %v2695 = vmul.f32 %v2693, %v2694
    %v2696 = vsub.f32 1.0, %v2695
    %v2697 = vmul.f32 %v2694, %v2696
    %v2698 = vadd.f32 %v2694, %v2697
    %vm2699 = vweird.f32 %v2693
    %vm2700 = vweird.f32 %v2694
    %vm2701 = vmor %vm2699, %vm2700
    %v2702 = vsel %vm2701, %v2694, %v2698
    %v2703 = vand.u32 2147483647, %v2693
    %vm2704 = vcmp.eq.f32.partialorder %v2703, 8.507059e+37
    %v2705 = vand.u32 %v2693, 2147483648
    %v2706 = vor.u32 1.1754944e-38, %v2705
    %v2707 = vsel %vm2704, %v2706, %v2702
    %v2708 = vmul.f32 1.0, %v2707
    %v2709 = vxor.u32 %v2598, 2147483648
    %v2710 = vmul.f32 %v2709, 1.442695
    %v2711 = vpow.pop %v2710
    %v2712 = vadd.f32 %v2711, 1.0
    %v2713 = vrcp.pop %v2712
    %v2714 = vmul.f32 %v2712, %v2713
    %v2715 = vsub.f32 1.0, %v2714
    %v2716 = vmul.f32 %v2713, %v2715
    %v2717 = vadd.f32 %v2713, %v2716
    %vm2718 = vweird.f32 %v2712
    %vm2719 = vweird.f32 %v2713
    %vm2720 = vmor %vm2718, %vm2719
    %v2721 = vsel %vm2720, %v2713, %v2717
    %v2722 = vand.u32 2147483647, %v2712
    %vm2723 = vcmp.eq.f32.partialorder %v2722, 8.507059e+37
    %v2724 = vand.u32 %v2712, 2147483648
    %v2725 = vor.u32 1.1754944e-38, %v2724
    %v2726 = vsel %vm2723, %v2725, %v2721
    %v2727 = vmul.f32 1.0, %v2726
    %v2728 = vtanh.pop %v2599
    %v2729 = vxor.u32 %v2600, 2147483648
    %v2730 = vmul.f32 %v2729, 1.442695
    %v2731 = vpow.pop %v2730
    %v2732 = vadd.f32 %v2731, 1.0
    %v2733 = vrcp.pop %v2732
    %v2734 = vmul.f32 %v2732, %v2733
    %v2735 = vsub.f32 1.0, %v2734
    %v2736 = vmul.f32 %v2733, %v2735
    %v2737 = vadd.f32 %v2733, %v2736
    %vm2738 = vweird.f32 %v2732
    %vm2739 = vweird.f32 %v2733
    %vm2740 = vmor %vm2738, %vm2739
    %v2741 = vsel %vm2740, %v2733, %v2737
    %v2742 = vand.u32 2147483647, %v2732
    %vm2743 = vcmp.eq.f32.partialorder %v2742, 8.507059e+37
    %v2744 = vand.u32 %v2732, 2147483648
    %v2745 = vor.u32 1.1754944e-38, %v2744
    %v2746 = vsel %vm2743, %v2745, %v2741
    %v2747 = vmul.f32 1.0, %v2746
    %v2748 = vmul.f32 %v2727, %v2442
    %v2749 = vmul.f32 %v2708, %v2728
    %v2750 = vadd.f32 %v2748, %v2749
    %v2751 = vtanh.pop %v2750
    %v2752 = vmul.f32 %v2747, %v2751
    %v2753 = vxor.u32 %v2686, 2147483648
    %v2754 = vmul.f32 %v2753, 1.442695
    %v2755 = vpow.pop %v2754
    %v2756 = vadd.f32 %v2755, 1.0
    %v2757 = vrcp.pop %v2756
    %v2758 = vmul.f32 %v2756, %v2757
    %v2759 = vsub.f32 1.0, %v2758
    %v2760 = vmul.f32 %v2757, %v2759
    %v2761 = vadd.f32 %v2757, %v2760
    %vm2762 = vweird.f32 %v2756
    %vm2763 = vweird.f32 %v2757
    %vm2764 = vmor %vm2762, %vm2763
    %v2765 = vsel %vm2764, %v2757, %v2761
    %v2766 = vand.u32 2147483647, %v2756
    %vm2767 = vcmp.eq.f32.partialorder %v2766, 8.507059e+37
    %v2768 = vand.u32 %v2756, 2147483648
    %v2769 = vor.u32 1.1754944e-38, %v2768
    %v2770 = vsel %vm2767, %v2769, %v2765
    %v2771 = vmul.f32 1.0, %v2770
    %v2772 = vxor.u32 %v2687, 2147483648
    %v2773 = vmul.f32 %v2772, 1.442695
    %v2774 = vpow.pop %v2773
    %v2775 = vadd.f32 %v2774, 1.0
    %v2776 = vrcp.pop %v2775
    %v2777 = vmul.f32 %v2775, %v2776
    %v2778 = vsub.f32 1.0, %v2777
    %v2779 = vmul.f32 %v2776, %v2778
    %v2780 = vadd.f32 %v2776, %v2779
    %vm2781 = vweird.f32 %v2775
    %vm2782 = vweird.f32 %v2776
    %vm2783 = vmor %vm2781, %vm2782
    %v2784 = vsel %vm2783, %v2776, %v2780
    %v2785 = vand.u32 2147483647, %v2775
    %vm2786 = vcmp.eq.f32.partialorder %v2785, 8.507059e+37
    %v2787 = vand.u32 %v2775, 2147483648
    %v2788 = vor.u32 1.1754944e-38, %v2787
    %v2789 = vsel %vm2786, %v2788, %v2784
    %v2790 = vmul.f32 1.0, %v2789
    %v2791 = vtanh.pop %v2688
    %v2792 = vxor.u32 %v2689, 2147483648
    %v2793 = vmul.f32 %v2792, 1.442695
    %v2794 = vpow.pop %v2793
    %v2795 = vadd.f32 %v2794, 1.0
    %v2796 = vrcp.pop %v2795
    %v2797 = vmul.f32 %v2795, %v2796
    %v2798 = vsub.f32 1.0, %v2797
    %v2799 = vmul.f32 %v2796, %v2798
    %v2800 = vadd.f32 %v2796, %v2799
    %vm2801 = vweird.f32 %v2795
    %vm2802 = vweird.f32 %v2796
    %vm2803 = vmor %vm2801, %vm2802
    %v2804 = vsel %vm2803, %v2796, %v2800
    %v2805 = vand.u32 2147483647, %v2795
    %vm2806 = vcmp.eq.f32.partialorder %v2805, 8.507059e+37
    %v2807 = vand.u32 %v2795, 2147483648
    %v2808 = vor.u32 1.1754944e-38, %v2807
    %v2809 = vsel %vm2806, %v2808, %v2804
    %v2810 = vmul.f32 1.0, %v2809
    %v2811 = vmul.f32 %v2790, %v2505
    %v2812 = vmul.f32 %v2771, %v2791
    %v2813 = vadd.f32 %v2811, %v2812
    %v2814 = vtanh.pop %v2813
    %v2815 = vmul.f32 %v2810, %v2814
    %v2816 = vadd.f32 %v2508, %v2752
    %v2817 = vmax.f32 %v2509, %v2752
    %v2818 = vadd.f32 %v2510, %v2815
    %v2819 = vmax.f32 %v2511, %v2815
    %s2820 = scalar_lea.vmem [#allocation2], 224
    %v2821 = vld [vmem:[%s2820] sm:$0xff]
    %v2822 = vld [vmem:[%s2820 + $0x8] sm:$0xff]
    %v2823 = vld [vmem:[%s2820 + $0x10] sm:$0xff]
    %v2824 = vld [vmem:[%s2820 + $0x18] sm:$0xff]
    %2825 = vmatpush.msra.mxu0 %v599
    %2826 = vmatpush.msra.mxu0 %v595
    %2827 = vmatpush.msra.mxu0 %v591
    %2828 = vmatpush.msra.mxu0 %v587
    %2829 = vmatpush.msra.mxu0 %v583
    %2830 = vmatpush.msra.mxu0 %v579
    %2831 = vmatpush.msra.mxu0 %v575
    %2832 = vmatpush.msra.mxu0 %v571
    %2833 = vmatpush.msra.mxu0 %v567
    %2834 = vmatpush.msra.mxu0 %v563
    %2835 = vmatpush.msra.mxu0 %v559
    %2836 = vmatpush.msra.mxu0 %v555
    %2837 = vmatpush.msra.mxu0 %v551
    %2838 = vmatpush.msra.mxu0 %v547
    %2839 = vmatpush.msra.mxu0 %v543
    %2840 = vmatpush.msra.mxu0 %v539
    %2841 = vmatmul.f32.gmra.mxu0 %v2752
    %v2842 = vpop.f32.mrf.mxu0
    %v2843 = vadd.f32 0.0, %v2842
    %2844 = vdwg.mxu0
    %2845 = vmatpush.msra.mxu0 %v600
    %2846 = vmatpush.msra.mxu0 %v596
    %2847 = vmatpush.msra.mxu0 %v592
    %2848 = vmatpush.msra.mxu0 %v588
    %2849 = vmatpush.msra.mxu0 %v584
    %2850 = vmatpush.msra.mxu0 %v580
    %2851 = vmatpush.msra.mxu0 %v576
    %2852 = vmatpush.msra.mxu0 %v572
    %2853 = vmatpush.msra.mxu0 %v568
    %2854 = vmatpush.msra.mxu0 %v564
    %2855 = vmatpush.msra.mxu0 %v560
    %2856 = vmatpush.msra.mxu0 %v556
    %2857 = vmatpush.msra.mxu0 %v552
    %2858 = vmatpush.msra.mxu0 %v548
    %2859 = vmatpush.msra.mxu0 %v544
    %2860 = vmatpush.msra.mxu0 %v540
    %2861 = vmatmul.f32.gmra.mxu0 %v2752
    %v2862 = vpop.f32.mrf.mxu0
    %v2863 = vadd.f32 0.0, %v2862
    %2864 = vdwg.mxu0
    %2865 = vmatpush.msra.mxu0 %v601
    %2866 = vmatpush.msra.mxu0 %v597
    %2867 = vmatpush.msra.mxu0 %v593
    %2868 = vmatpush.msra.mxu0 %v589
    %2869 = vmatpush.msra.mxu0 %v585
    %2870 = vmatpush.msra.mxu0 %v581
    %2871 = vmatpush.msra.mxu0 %v577
    %2872 = vmatpush.msra.mxu0 %v573
    %2873 = vmatpush.msra.mxu0 %v569
    %2874 = vmatpush.msra.mxu0 %v565
    %2875 = vmatpush.msra.mxu0 %v561
    %2876 = vmatpush.msra.mxu0 %v557
    %2877 = vmatpush.msra.mxu0 %v553
    %2878 = vmatpush.msra.mxu0 %v549
    %2879 = vmatpush.msra.mxu0 %v545
    %2880 = vmatpush.msra.mxu0 %v541
    %2881 = vmatmul.f32.gmra.mxu0 %v2752
    %v2882 = vpop.f32.mrf.mxu0
    %v2883 = vadd.f32 0.0, %v2882
    %2884 = vdwg.mxu0
    %2885 = vmatpush.msra.mxu0 %v602
    %2886 = vmatpush.msra.mxu0 %v598
    %2887 = vmatpush.msra.mxu0 %v594
    %2888 = vmatpush.msra.mxu0 %v590
    %2889 = vmatpush.msra.mxu0 %v586
    %2890 = vmatpush.msra.mxu0 %v582
    %2891 = vmatpush.msra.mxu0 %v578
    %2892 = vmatpush.msra.mxu0 %v574
    %2893 = vmatpush.msra.mxu0 %v570
    %2894 = vmatpush.msra.mxu0 %v566
    %2895 = vmatpush.msra.mxu0 %v562
    %2896 = vmatpush.msra.mxu0 %v558
    %2897 = vmatpush.msra.mxu0 %v554
    %2898 = vmatpush.msra.mxu0 %v550
    %2899 = vmatpush.msra.mxu0 %v546
    %2900 = vmatpush.msra.mxu0 %v542
    %2901 = vmatmul.f32.gmra.mxu0 %v2752
    %v2902 = vpop.f32.mrf.mxu0
    %v2903 = vadd.f32 0.0, %v2902
    %2904 = vdwg.mxu0
    %v2905 = vadd.f32 %v2821, %v2843
    %v2906 = vadd.f32 %v2822, %v2863
    %v2907 = vadd.f32 %v2823, %v2883
    %v2908 = vadd.f32 %v2824, %v2903
    %v2909 = vld [vmem:[#allocation3] sm:$0xff]
    %v2910 = vld [vmem:[#allocation3 + $0x8] sm:$0xff]
    %v2911 = vld [vmem:[#allocation3 + $0x10] sm:$0xff]
    %v2912 = vld [vmem:[#allocation3 + $0x18] sm:$0xff]
    %2913 = vmatpush.msra.mxu0 %v663
    %2914 = vmatpush.msra.mxu0 %v659
    %2915 = vmatpush.msra.mxu0 %v655
    %2916 = vmatpush.msra.mxu0 %v651
    %2917 = vmatpush.msra.mxu0 %v647
    %2918 = vmatpush.msra.mxu0 %v643
    %2919 = vmatpush.msra.mxu0 %v639
    %2920 = vmatpush.msra.mxu0 %v635
    %2921 = vmatpush.msra.mxu0 %v631
    %2922 = vmatpush.msra.mxu0 %v627
    %2923 = vmatpush.msra.mxu0 %v623
    %2924 = vmatpush.msra.mxu0 %v619
    %2925 = vmatpush.msra.mxu0 %v615
    %2926 = vmatpush.msra.mxu0 %v611
    %2927 = vmatpush.msra.mxu0 %v607
    %2928 = vmatpush.msra.mxu0 %v603
    %2929 = vmatmul.f32.gmra.mxu0 %v2815
    %v2930 = vpop.f32.mrf.mxu0
    %v2931 = vadd.f32 0.0, %v2930
    %2932 = vdwg.mxu0
    %2933 = vmatpush.msra.mxu0 %v664
    %2934 = vmatpush.msra.mxu0 %v660
    %2935 = vmatpush.msra.mxu0 %v656
    %2936 = vmatpush.msra.mxu0 %v652
    %2937 = vmatpush.msra.mxu0 %v648
    %2938 = vmatpush.msra.mxu0 %v644
    %2939 = vmatpush.msra.mxu0 %v640
    %2940 = vmatpush.msra.mxu0 %v636
    %2941 = vmatpush.msra.mxu0 %v632
    %2942 = vmatpush.msra.mxu0 %v628
    %2943 = vmatpush.msra.mxu0 %v624
    %2944 = vmatpush.msra.mxu0 %v620
    %2945 = vmatpush.msra.mxu0 %v616
    %2946 = vmatpush.msra.mxu0 %v612
    %2947 = vmatpush.msra.mxu0 %v608
    %2948 = vmatpush.msra.mxu0 %v604
    %2949 = vmatmul.f32.gmra.mxu0 %v2815
    %v2950 = vpop.f32.mrf.mxu0
    %v2951 = vadd.f32 0.0, %v2950
    %2952 = vdwg.mxu0
    %2953 = vmatpush.msra.mxu0 %v665
    %2954 = vmatpush.msra.mxu0 %v661
    %2955 = vmatpush.msra.mxu0 %v657
    %2956 = vmatpush.msra.mxu0 %v653
    %2957 = vmatpush.msra.mxu0 %v649
    %2958 = vmatpush.msra.mxu0 %v645
    %2959 = vmatpush.msra.mxu0 %v641
    %2960 = vmatpush.msra.mxu0 %v637
    %2961 = vmatpush.msra.mxu0 %v633
    %2962 = vmatpush.msra.mxu0 %v629
    %2963 = vmatpush.msra.mxu0 %v625
    %2964 = vmatpush.msra.mxu0 %v621
    %2965 = vmatpush.msra.mxu0 %v617
    %2966 = vmatpush.msra.mxu0 %v613
    %2967 = vmatpush.msra.mxu0 %v609
    %2968 = vmatpush.msra.mxu0 %v605
    %2969 = vmatmul.f32.gmra.mxu0 %v2815
    %v2970 = vpop.f32.mrf.mxu0
    %v2971 = vadd.f32 0.0, %v2970
    %2972 = vdwg.mxu0
    %2973 = vmatpush.msra.mxu0 %v666
    %2974 = vmatpush.msra.mxu0 %v662
    %2975 = vmatpush.msra.mxu0 %v658
    %2976 = vmatpush.msra.mxu0 %v654
    %2977 = vmatpush.msra.mxu0 %v650
    %2978 = vmatpush.msra.mxu0 %v646
    %2979 = vmatpush.msra.mxu0 %v642
    %2980 = vmatpush.msra.mxu0 %v638
    %2981 = vmatpush.msra.mxu0 %v634
    %2982 = vmatpush.msra.mxu0 %v630
    %2983 = vmatpush.msra.mxu0 %v626
    %2984 = vmatpush.msra.mxu0 %v622
    %2985 = vmatpush.msra.mxu0 %v618
    %2986 = vmatpush.msra.mxu0 %v614
    %2987 = vmatpush.msra.mxu0 %v610
    %2988 = vmatpush.msra.mxu0 %v606
    %2989 = vmatmul.f32.gmra.mxu0 %v2815
    %v2990 = vpop.f32.mrf.mxu0
    %v2991 = vadd.f32 0.0, %v2990
    %2992 = vdwg.mxu0
    %v2993 = vadd.f32 %v2909, %v2931
    %v2994 = vadd.f32 %v2910, %v2951
    %v2995 = vadd.f32 %v2911, %v2971
    %v2996 = vadd.f32 %v2912, %v2991
    %v2997 = vxor.u32 %v2905, 2147483648
    %v2998 = vmul.f32 %v2997, 1.442695
    %v2999 = vpow.pop %v2998
    %v3000 = vadd.f32 %v2999, 1.0
    %v3001 = vrcp.pop %v3000
    %v3002 = vmul.f32 %v3000, %v3001
    %v3003 = vsub.f32 1.0, %v3002
    %v3004 = vmul.f32 %v3001, %v3003
    %v3005 = vadd.f32 %v3001, %v3004
    %vm3006 = vweird.f32 %v3000
    %vm3007 = vweird.f32 %v3001
    %vm3008 = vmor %vm3006, %vm3007
    %v3009 = vsel %vm3008, %v3001, %v3005
    %v3010 = vand.u32 2147483647, %v3000
    %vm3011 = vcmp.eq.f32.partialorder %v3010, 8.507059e+37
    %v3012 = vand.u32 %v3000, 2147483648
    %v3013 = vor.u32 1.1754944e-38, %v3012
    %v3014 = vsel %vm3011, %v3013, %v3009
    %v3015 = vmul.f32 1.0, %v3014
    %v3016 = vxor.u32 %v2906, 2147483648
    %v3017 = vmul.f32 %v3016, 1.442695
    %v3018 = vpow.pop %v3017
    %v3019 = vadd.f32 %v3018, 1.0
    %v3020 = vrcp.pop %v3019
    %v3021 = vmul.f32 %v3019, %v3020
    %v3022 = vsub.f32 1.0, %v3021
    %v3023 = vmul.f32 %v3020, %v3022
    %v3024 = vadd.f32 %v3020, %v3023
    %vm3025 = vweird.f32 %v3019
    %vm3026 = vweird.f32 %v3020
    %vm3027 = vmor %vm3025, %vm3026
    %v3028 = vsel %vm3027, %v3020, %v3024
    %v3029 = vand.u32 2147483647, %v3019
    %vm3030 = vcmp.eq.f32.partialorder %v3029, 8.507059e+37
    %v3031 = vand.u32 %v3019, 2147483648
    %v3032 = vor.u32 1.1754944e-38, %v3031
    %v3033 = vsel %vm3030, %v3032, %v3028
    %v3034 = vmul.f32 1.0, %v3033
    %v3035 = vtanh.pop %v2907
    %v3036 = vxor.u32 %v2908, 2147483648
    %v3037 = vmul.f32 %v3036, 1.442695
    %v3038 = vpow.pop %v3037
    %v3039 = vadd.f32 %v3038, 1.0
    %v3040 = vrcp.pop %v3039
    %v3041 = vmul.f32 %v3039, %v3040
    %v3042 = vsub.f32 1.0, %v3041
    %v3043 = vmul.f32 %v3040, %v3042
    %v3044 = vadd.f32 %v3040, %v3043
    %vm3045 = vweird.f32 %v3039
    %vm3046 = vweird.f32 %v3040
    %vm3047 = vmor %vm3045, %vm3046
    %v3048 = vsel %vm3047, %v3040, %v3044
    %v3049 = vand.u32 2147483647, %v3039
    %vm3050 = vcmp.eq.f32.partialorder %v3049, 8.507059e+37
    %v3051 = vand.u32 %v3039, 2147483648
    %v3052 = vor.u32 1.1754944e-38, %v3051
    %v3053 = vsel %vm3050, %v3052, %v3048
    %v3054 = vmul.f32 1.0, %v3053
    %v3055 = vmul.f32 %v3034, %v2750
    %v3056 = vmul.f32 %v3015, %v3035
    %v3057 = vadd.f32 %v3055, %v3056
    %v3058 = vtanh.pop %v3057
    %v3059 = vmul.f32 %v3054, %v3058
    %v3060 = vxor.u32 %v2993, 2147483648
    %v3061 = vmul.f32 %v3060, 1.442695
    %v3062 = vpow.pop %v3061
    %v3063 = vadd.f32 %v3062, 1.0
    %v3064 = vrcp.pop %v3063
    %v3065 = vmul.f32 %v3063, %v3064
    %v3066 = vsub.f32 1.0, %v3065
    %v3067 = vmul.f32 %v3064, %v3066
    %v3068 = vadd.f32 %v3064, %v3067
    %vm3069 = vweird.f32 %v3063
    %vm3070 = vweird.f32 %v3064
    %vm3071 = vmor %vm3069, %vm3070
    %v3072 = vsel %vm3071, %v3064, %v3068
    %v3073 = vand.u32 2147483647, %v3063
    %vm3074 = vcmp.eq.f32.partialorder %v3073, 8.507059e+37
    %v3075 = vand.u32 %v3063, 2147483648
    %v3076 = vor.u32 1.1754944e-38, %v3075
    %v3077 = vsel %vm3074, %v3076, %v3072
    %v3078 = vmul.f32 1.0, %v3077
    %v3079 = vxor.u32 %v2994, 2147483648
    %v3080 = vmul.f32 %v3079, 1.442695
    %v3081 = vpow.pop %v3080
    %v3082 = vadd.f32 %v3081, 1.0
    %v3083 = vrcp.pop %v3082
    %v3084 = vmul.f32 %v3082, %v3083
    %v3085 = vsub.f32 1.0, %v3084
    %v3086 = vmul.f32 %v3083, %v3085
    %v3087 = vadd.f32 %v3083, %v3086
    %vm3088 = vweird.f32 %v3082
    %vm3089 = vweird.f32 %v3083
    %vm3090 = vmor %vm3088, %vm3089
    %v3091 = vsel %vm3090, %v3083, %v3087
    %v3092 = vand.u32 2147483647, %v3082
    %vm3093 = vcmp.eq.f32.partialorder %v3092, 8.507059e+37
    %v3094 = vand.u32 %v3082, 2147483648
    %v3095 = vor.u32 1.1754944e-38, %v3094
    %v3096 = vsel %vm3093, %v3095, %v3091
    %v3097 = vmul.f32 1.0, %v3096
    %v3098 = vtanh.pop %v2995
    %v3099 = vxor.u32 %v2996, 2147483648
    %v3100 = vmul.f32 %v3099, 1.442695
    %v3101 = vpow.pop %v3100
    %v3102 = vadd.f32 %v3101, 1.0
    %v3103 = vrcp.pop %v3102
    %v3104 = vmul.f32 %v3102, %v3103
    %v3105 = vsub.f32 1.0, %v3104
    %v3106 = vmul.f32 %v3103, %v3105
    %v3107 = vadd.f32 %v3103, %v3106
    %vm3108 = vweird.f32 %v3102
    %vm3109 = vweird.f32 %v3103
    %vm3110 = vmor %vm3108, %vm3109
    %v3111 = vsel %vm3110, %v3103, %v3107
    %v3112 = vand.u32 2147483647, %v3102
    %vm3113 = vcmp.eq.f32.partialorder %v3112, 8.507059e+37
    %v3114 = vand.u32 %v3102, 2147483648
    %v3115 = vor.u32 1.1754944e-38, %v3114
    %v3116 = vsel %vm3113, %v3115, %v3111
    %v3117 = vmul.f32 1.0, %v3116
    %v3118 = vmul.f32 %v3097, %v2813
    %v3119 = vmul.f32 %v3078, %v3098
    %v3120 = vadd.f32 %v3118, %v3119
    %v3121 = vtanh.pop %v3120
    %v3122 = vmul.f32 %v3117, %v3121
    %v3123 = vadd.f32 %v2816, %v3059
    %v3124 = vmax.f32 %v2817, %v3059
    %v3125 = vadd.f32 %v2818, %v3122
    %v3126 = vmax.f32 %v2819, %v3122
    %v3127 = vmul.f32 %v3123, 0.125
    %v3128 = vmul.f32 %v3125, 0.125
    %v3129 = vld [vmem:[%s5] sm:$0xff]
    %v3130 = vld [vmem:[%s5 + $0x8] sm:$0xff]
    %v3131 = vld [vmem:[%s5 + $0x10] sm:$0xff]
    %v3132 = vld [vmem:[%s5 + $0x18] sm:$0xff]
    %v3133 = vld [vmem:[%s5 + $0x20] sm:$0xff]
    %v3134 = vld [vmem:[%s5 + $0x28] sm:$0xff]
    %v3135 = vld [vmem:[%s5 + $0x30] sm:$0xff]
    %v3136 = vld [vmem:[%s5 + $0x38] sm:$0xff]
    %v3137 = vld [vmem:[%s5 + $0x40] sm:$0xff]
    %v3138 = vld [vmem:[%s5 + $0x48] sm:$0xff]
    %v3139 = vld [vmem:[%s5 + $0x50] sm:$0xff]
    %v3140 = vld [vmem:[%s5 + $0x58] sm:$0xff]
    %v3141 = vld [vmem:[%s5 + $0x60] sm:$0xff]
    %v3142 = vld [vmem:[%s5 + $0x68] sm:$0xff]
    %v3143 = vld [vmem:[%s5 + $0x70] sm:$0xff]
    %v3144 = vld [vmem:[%s5 + $0x78] sm:$0xff]
    %v3145 = vld [vmem:[%s5 + $0x80] sm:$0xff]
    %v3146 = vld [vmem:[%s5 + $0x88] sm:$0xff]
    %v3147 = vld [vmem:[%s5 + $0x90] sm:$0xff]
    %v3148 = vld [vmem:[%s5 + $0x98] sm:$0xff]
    %v3149 = vld [vmem:[%s5 + $0xa0] sm:$0xff]
    %v3150 = vld [vmem:[%s5 + $0xa8] sm:$0xff]
    %v3151 = vld [vmem:[%s5 + $0xb0] sm:$0xff]
    %v3152 = vld [vmem:[%s5 + $0xb8] sm:$0xff]
    %v3153 = vld [vmem:[%s5 + $0xc0] sm:$0xff]
    %v3154 = vld [vmem:[%s5 + $0xc8] sm:$0xff]
    %v3155 = vld [vmem:[%s5 + $0xd0] sm:$0xff]
    %v3156 = vld [vmem:[%s5 + $0xd8] sm:$0xff]
    %v3157 = vld [vmem:[%s5 + $0xe0] sm:$0xff]
    %v3158 = vld [vmem:[%s5 + $0xe8] sm:$0xff]
    %v3159 = vld [vmem:[%s5 + $0xf0] sm:$0xff]
    %v3160 = vld [vmem:[%s5 + $0xf8] sm:$0xff]
    %v3161 = vld [vmem:[%s5 + $0x100] sm:$0xff]
    %v3162 = vld [vmem:[%s5 + $0x108] sm:$0xff]
    %v3163 = vld [vmem:[%s5 + $0x110] sm:$0xff]
    %v3164 = vld [vmem:[%s5 + $0x118] sm:$0xff]
    %v3165 = vld [vmem:[%s5 + $0x120] sm:$0xff]
    %v3166 = vld [vmem:[%s5 + $0x128] sm:$0xff]
    %v3167 = vld [vmem:[%s5 + $0x130] sm:$0xff]
    %v3168 = vld [vmem:[%s5 + $0x138] sm:$0xff]
    %v3169 = vld [vmem:[%s5 + $0x140] sm:$0xff]
    %v3170 = vld [vmem:[%s5 + $0x148] sm:$0xff]
    %v3171 = vld [vmem:[%s5 + $0x150] sm:$0xff]
    %v3172 = vld [vmem:[%s5 + $0x158] sm:$0xff]
    %v3173 = vld [vmem:[%s5 + $0x160] sm:$0xff]
    %v3174 = vld [vmem:[%s5 + $0x168] sm:$0xff]
    %v3175 = vld [vmem:[%s5 + $0x170] sm:$0xff]
    %v3176 = vld [vmem:[%s5 + $0x178] sm:$0xff]
    %v3177 = vld [vmem:[%s5 + $0x180] sm:$0xff]
    %v3178 = vld [vmem:[%s5 + $0x188] sm:$0xff]
    %v3179 = vld [vmem:[%s5 + $0x190] sm:$0xff]
    %v3180 = vld [vmem:[%s5 + $0x198] sm:$0xff]
    %v3181 = vld [vmem:[%s5 + $0x1a0] sm:$0xff]
    %v3182 = vld [vmem:[%s5 + $0x1a8] sm:$0xff]
    %v3183 = vld [vmem:[%s5 + $0x1b0] sm:$0xff]
    %v3184 = vld [vmem:[%s5 + $0x1b8] sm:$0xff]
    %v3185 = vld [vmem:[%s5 + $0x1c0] sm:$0xff]
    %v3186 = vld [vmem:[%s5 + $0x1c8] sm:$0xff]
    %v3187 = vld [vmem:[%s5 + $0x1d0] sm:$0xff]
    %v3188 = vld [vmem:[%s5 + $0x1d8] sm:$0xff]
    %v3189 = vld [vmem:[%s5 + $0x1e0] sm:$0xff]
    %v3190 = vld [vmem:[%s5 + $0x1e8] sm:$0xff]
    %v3191 = vld [vmem:[%s5 + $0x1f0] sm:$0xff]
    %v3192 = vld [vmem:[%s5 + $0x1f8] sm:$0xff]
    %3193 = vmatpush.msra.mxu0 %v3160
    %3194 = vmatpush.msra.mxu0 %v3159
    %3195 = vmatpush.msra.mxu0 %v3158
    %3196 = vmatpush.msra.mxu0 %v3157
    %3197 = vmatpush.msra.mxu0 %v3156
    %3198 = vmatpush.msra.mxu0 %v3155
    %3199 = vmatpush.msra.mxu0 %v3154
    %3200 = vmatpush.msra.mxu0 %v3153
    %3201 = vmatpush.msra.mxu0 %v3152
    %3202 = vmatpush.msra.mxu0 %v3151
    %3203 = vmatpush.msra.mxu0 %v3150
    %3204 = vmatpush.msra.mxu0 %v3149
    %3205 = vmatpush.msra.mxu0 %v3148
    %3206 = vmatpush.msra.mxu0 %v3147
    %3207 = vmatpush.msra.mxu0 %v3146
    %3208 = vmatpush.msra.mxu0 %v3145
    %3209 = vmatmul.f32.gmra.mxu0 %v3128
    %v3210 = vpop.f32.mrf.mxu0
    %v3211 = vadd.f32 0.0, %v3210
    %3212 = vdwg.mxu0
    %3213 = vmatpush.msra.mxu0 %v3144
    %3214 = vmatpush.msra.mxu0 %v3143
    %3215 = vmatpush.msra.mxu0 %v3142
    %3216 = vmatpush.msra.mxu0 %v3141
    %3217 = vmatpush.msra.mxu0 %v3140
    %3218 = vmatpush.msra.mxu0 %v3139
    %3219 = vmatpush.msra.mxu0 %v3138
    %3220 = vmatpush.msra.mxu0 %v3137
    %3221 = vmatpush.msra.mxu0 %v3136
    %3222 = vmatpush.msra.mxu0 %v3135
    %3223 = vmatpush.msra.mxu0 %v3134
    %3224 = vmatpush.msra.mxu0 %v3133
    %3225 = vmatpush.msra.mxu0 %v3132
    %3226 = vmatpush.msra.mxu0 %v3131
    %3227 = vmatpush.msra.mxu0 %v3130
    %3228 = vmatpush.msra.mxu0 %v3129
    %3229 = vmatmul.f32.gmra.mxu0 %v3127
    %v3230 = vpop.f32.mrf.mxu0
    %v3231 = vadd.f32 %v3211, %v3230
    %3232 = vdwg.mxu0
    %3233 = vmatpush.msra.mxu0 %v3176
    %3234 = vmatpush.msra.mxu0 %v3175
    %3235 = vmatpush.msra.mxu0 %v3174
    %3236 = vmatpush.msra.mxu0 %v3173
    %3237 = vmatpush.msra.mxu0 %v3172
    %3238 = vmatpush.msra.mxu0 %v3171
    %3239 = vmatpush.msra.mxu0 %v3170
    %3240 = vmatpush.msra.mxu0 %v3169
    %3241 = vmatpush.msra.mxu0 %v3168
    %3242 = vmatpush.msra.mxu0 %v3167
    %3243 = vmatpush.msra.mxu0 %v3166
    %3244 = vmatpush.msra.mxu0 %v3165
    %3245 = vmatpush.msra.mxu0 %v3164
    %3246 = vmatpush.msra.mxu0 %v3163
    %3247 = vmatpush.msra.mxu0 %v3162
    %3248 = vmatpush.msra.mxu0 %v3161
    %3249 = vmatmul.f32.gmra.mxu0 %v3124
    %v3250 = vpop.f32.mrf.mxu0
    %v3251 = vadd.f32 0.0, %v3250
    %3252 = vdwg.mxu0
    %v3253 = vadd.f32 %v3231, %v3251
    %3254 = vmatpush.msra.mxu0 %v3192
    %3255 = vmatpush.msra.mxu0 %v3191
    %3256 = vmatpush.msra.mxu0 %v3190
    %3257 = vmatpush.msra.mxu0 %v3189
    %3258 = vmatpush.msra.mxu0 %v3188
    %3259 = vmatpush.msra.mxu0 %v3187
    %3260 = vmatpush.msra.mxu0 %v3186
    %3261 = vmatpush.msra.mxu0 %v3185
    %3262 = vmatpush.msra.mxu0 %v3184
    %3263 = vmatpush.msra.mxu0 %v3183
    %3264 = vmatpush.msra.mxu0 %v3182
    %3265 = vmatpush.msra.mxu0 %v3181
    %3266 = vmatpush.msra.mxu0 %v3180
    %3267 = vmatpush.msra.mxu0 %v3179
    %3268 = vmatpush.msra.mxu0 %v3178
    %3269 = vmatpush.msra.mxu0 %v3177
    %3270 = vmatmul.f32.gmra.mxu0 %v3126
    %v3271 = vpop.f32.mrf.mxu0
    %v3272 = vadd.f32 0.0, %v3271
    %3273 = vdwg.mxu0
    %v3274 = vadd.f32 %v3253, %v3272
    %v3275 = vld [vmem:[%s6] sm:$0x1]
    %v3277 = vperm.slane %v3275, 0
    %v3279 = vadd.f32 %v3274, %v3277
    %v3280 = vmax.f32 %v3279, 0.0
    %v3281 = vld [vmem:[%s7] sm:$0xff]
    %v3282 = vld [vmem:[%s7 + $0x8] sm:$0xff]
    %v3283 = vld [vmem:[%s7 + $0x10] sm:$0xff]
    %v3284 = vld [vmem:[%s7 + $0x18] sm:$0xff]
    %v3285 = vld [vmem:[%s8] sm:$0x1]
    %v3287 = vperm.slane %v3285, 0
    %v3290 = vsel %vm122, %v3280, 0
    %3292 = vmatpush.msra.mxu0 0.0
    %3293 = vmatpush.msra.mxu0 0.0
    %3294 = vmatpush.msra.mxu0 0.0
    %3295 = vmatpush.msra.mxu0 0.0
    %3296 = vmatpush.msra.mxu0 0.0
    %3297 = vmatpush.msra.mxu0 0.0
    %3298 = vmatpush.msra.mxu0 0.0
    %3299 = vmatpush.msra.mxu0 0.0
    %3300 = vmatpush.msra.mxu0 0.0
    %3301 = vmatpush.msra.mxu0 0.0
    %3302 = vmatpush.msra.mxu0 0.0
    %3303 = vmatpush.msra.mxu0 0.0
    %3304 = vmatpush.msra.mxu0 %v3284
    %3305 = vmatpush.msra.mxu0 %v3283
    %3306 = vmatpush.msra.mxu0 %v3282
    %3307 = vmatpush.msra.mxu0 %v3281
    %3308 = vmatmul.f32.gmra.mxu0 %v3290
    %v3309 = vpop.f32.mrf.mxu0
    %v3310 = vadd.f32 %v3287, %v3309
    %3311 = vdwg.mxu0
    %vm3312 = vcmask 31744
    %3313 = vst.msk [vmem:[%s9] sm:$0xff] %vm3312, %v3310
    // Predicated region
    $region46: #{tpu_custom_call.1} parent=1 // pred_check
      _
    $region47: #{tpu_custom_call.1} parent=1 // pred_check_branch
      %3315 = sbr.rel (0) target = $region49
    $region48: #{tpu_custom_call.1} parent=1 // pred_region
      _
    $region49: #{tpu_custom_call.1} parent=1 // pred_fallthru
      _
    // Predicated region
    $region50: #{tpu_custom_call.1} parent=1 // pred_check
      _
    $region51: #{tpu_custom_call.1} parent=1 // pred_check_branch
      %3317 = sbr.rel (0) target = $region53
    $region52: #{tpu_custom_call.1} parent=1 // pred_region
      _
    $region53: #{tpu_custom_call.1} parent=1 // pred_fallthru
      _
    %3318 = vsyncpa [#allocation5], 1
    %3319 = vsyncpa [#allocation7], 1

</llo_original>
